<compile_context>
chip_gen: v5e
topology: v5e:2x2
jax: 0.10.0
libtpu: 0.0.40
codegen_flags: <defaults>
</compile_context>

<pallas_src>
import functools

import jax
import jax.numpy as jnp
from jax import lax
from jax.experimental import pallas as pl
from jax.experimental.pallas import tpu as pltpu


# ----------------------------- small helpers ------------------------------- #

def _round_up(v, m):
    return ((v + m - 1) // m) * m


def _tpu_vmem_and_cores():
    """Best-effort chip query: (VMEM bytes per core, #TensorCores sharing grid)."""
    vmem_bytes = 64 * 1024 * 1024      # conservative default (v7x per-core VMEM)
    num_cores = 2                      # conservative default (v7x megacore)
    try:
        info = pltpu.get_tpu_info()
        vmem_bytes = int(getattr(info, "vmem_capacity_bytes", vmem_bytes))
        num_cores = 2 if vmem_bytes <= 64 * 1024 * 1024 else 1
    except Exception:
        pass
    return vmem_bytes, num_cores


def _vmem_bytes_per_step(wbh, ws, ch, num_heads):
    """Honest per-grid-step VMEM footprint: lane padding, double buffering,
    resident weight buffers and in-kernel temporaries all included."""
    n = ws * ws
    toks = wbh * n
    rows = wbh * ws
    c_l = _round_up(ch, 128)
    c3_l = _round_up(3 * ch, 128)
    n_l = _round_up(n, 128)
    hd_l = _round_up(max(ch // num_heads, 1), 128)
    b = 0
    b += 2 * rows * ws * c_l * 4                  # x block (f32, double buffered)
    b += 2 * rows * ws * c_l * 4                  # out block (f32, double buffered)
    b += 2 * ch * c3_l * 2 + 2 * ch * c_l * 2     # qkv/proj weights (bf16, 2 buffers)
    b += 2 * 8 * (c3_l + 3 * c_l) * 4             # biases + gamma/beta (f32, padded)
    b += toks * c3_l * 2                          # qkv slab (bf16)
    b += toks * c_l * (4 + 4 + 2)                 # normed x f32, proj-out f32, attn scratch bf16
    b += 4 * wbh * n * n_l * 4                    # score / exp / prob tiles (f32)
    b += 3 * toks * hd_l * 2                      # live q/k/v head slices (bf16)
    return b


def _choose_windows_per_step(n_hwin, other_steps, ws, ch, num_heads,
                             budget_bytes, num_cores):
    """Largest divisor of the vertical window count that fits the VMEM budget
    and keeps >= 2 grid steps per TensorCore (so prefetch/writeback overlap)."""
    best = 1
    for d in range(1, n_hwin + 1):
        if n_hwin % d:
            continue
        if d > 1 and _vmem_bytes_per_step(d, ws, ch, num_heads) > budget_bytes:
            continue
        if d > 1 and other_steps * (n_hwin // d) < 2 * num_cores:
            continue
        best = d
    return best


# ----------------------------- Pallas kernel ------------------------------- #

def _prenorm_window_attn_kernel(x_ref, g_ref, b_ref, wqkv_ref, bqkv_ref,
                                wproj_ref, bproj_ref, o_ref, attn_ref, *,
                                num_heads, head_dim, window_size, wbh,
                                valid_h, valid_w, padded, eps):
    ws = window_size
    n_tok = ws * ws
    ch = num_heads * head_dim
    rows = wbh * ws
    toks = wbh * n_tok

    # ---- LayerNorm (f32) over the channel / lane dimension ----------------
    xr = x_ref[0]                                          # (rows, ws, C) f32
    mu = jnp.mean(xr, axis=-1, keepdims=True)
    xc = xr - mu
    var = jnp.mean(xc * xc, axis=-1, keepdims=True)
    xn = xc * lax.rsqrt(var + jnp.float32(eps))
    xn = xn * g_ref[...] + b_ref[...]                      # affine, (1, C) broadcast

    # Padded tokens must be exactly zero *after* the norm (PyTorch pads the
    # normed activation with zeros), so re-zero them with an iota mask.
    if padded:
        row0 = pl.program_id(1) * rows
        col0 = pl.program_id(2) * ws
        ri = lax.broadcasted_iota(jnp.int32, (rows, ws, 1), 0) + row0
        ci = lax.broadcasted_iota(jnp.int32, (rows, ws, 1), 1) + col0
        keep = ((ri < valid_h) & (ci < valid_w)).astype(xn.dtype)
        xn = xn * keep

    # (rows, ws, C) -> (wbh windows * N tokens, C); window w = rows [w*ws, (w+1)*ws).
    xb = xn.reshape(toks, ch).astype(jnp.bfloat16)

    # ---- qkv projection: bf16 MXU operands, f32 accumulation --------------
    # The softmax scale is already folded into the Q columns of wqkv / bqkv,
    # and the slab is cast to bf16 once, right after the bias add.
    qkv = (jnp.dot(xb, wqkv_ref[...], preferred_element_type=jnp.float32)
           + bqkv_ref[...]).astype(jnp.bfloat16)           # (toks, 3C) bf16

    # ---- per-head attention; head outputs go straight to bf16 scratch -----
    for h in range(num_heads):
        lo = h * head_dim
        q = qkv[:, lo:lo + head_dim].reshape(wbh, n_tok, head_dim)
        k = qkv[:, ch + lo:ch + lo + head_dim].reshape(wbh, n_tok, head_dim)
        v = qkv[:, 2 * ch + lo:2 * ch + lo + head_dim].reshape(wbh, n_tok, head_dim)

        s = jnp.einsum('bqd,bkd->bqk', q, k,
                       preferred_element_type=jnp.float32)         # (wbh, N, N) f32
        m = jnp.max(s, axis=-1, keepdims=True)
        e = jnp.exp(s - m)
        p = e * pl.reciprocal(jnp.sum(e, axis=-1, keepdims=True), approx=True)
        o_h = jnp.einsum('bqk,bkd->bqd', p.astype(jnp.bfloat16), v,
                         preferred_element_type=jnp.float32)       # (wbh, N, d) f32
        attn_ref[:, lo:lo + head_dim] = (
            o_h.reshape(toks, head_dim).astype(jnp.bfloat16))

    # ---- output projection + fused residual (shortcut is the raw x block) --
    y = (jnp.dot(attn_ref[...], wproj_ref[...],
                 preferred_element_type=jnp.float32)
         + bproj_ref[...])                                  # (toks, C) f32
    o_ref[0] = (x_ref[0] + y.reshape(rows, ws, ch)).astype(o_ref.dtype)


# ------------------------------ host wrapper -------------------------------- #

def _prenorm_window_attention_fused(x4, gamma, beta, wqkv, bqkv, wproj, bproj, *,
                                    num_heads, head_dim, window_size,
                                    valid_h, valid_w, eps):
    """x4: padded (B, Hp, Wp, C) f32 activation.  Returns (B, Hp, Wp, C)
    containing layer_norm -> window attention -> + residual(x4)."""
    B, Hp, Wp, C = x4.shape
    ws = window_size
    n_hwin, n_wwin = Hp // ws, Wp // ws
    n_tok = ws * ws
    padded = (valid_h != Hp) or (valid_w != Wp)

    vmem_cap, num_cores = _tpu_vmem_and_cores()
    # <= 48 MiB on a 64 MiB (v7x) core, <= 64 MiB on 128 MiB (v5e/v6e) cores.
    vmem_limit = int(min(48 * 1024 * 1024 if num_cores > 1 else 64 * 1024 * 1024,
                         (vmem_cap * 3) // 4))
    wbh = _choose_windows_per_step(n_hwin, B * n_wwin, ws, C, num_heads,
                                   vmem_limit, num_cores)
    grid = (B, n_hwin // wbh, n_wwin)
    rows = wbh * ws

    kernel = functools.partial(
        _prenorm_window_attn_kernel, num_heads=num_heads, head_dim=head_dim,
        window_size=ws, wbh=wbh, valid_h=valid_h, valid_w=valid_w,
        padded=padded, eps=eps)

    n_win = B * n_hwin * n_wwin
    flops_per_win = (2 * n_tok * C * 3 * C        # qkv projection
                     + 4 * n_tok * n_tok * C      # scores + probs @ v (all heads)
                     + 2 * n_tok * C * C          # output projection
                     + 10 * n_tok * C)            # LayerNorm + residual
    cost = pl.CostEstimate(
        flops=int(n_win * flops_per_win),
        transcendentals=int(n_win * (num_heads * n_tok * n_tok + n_tok)),
        bytes_accessed=int(4 * 2 * B * Hp * Wp * C            # activation in + out
                           + 2 * (3 * C * C + C * C)          # bf16 weights
                           + 4 * (3 * C + C + 2 * C)))        # biases + gamma/beta

    out = pl.pallas_call(
        kernel,
        out_shape=jax.ShapeDtypeStruct((B, Hp, Wp, C), x4.dtype),
        grid_spec=pltpu.PrefetchScalarGridSpec(
            num_scalar_prefetch=0,
            grid=grid,
            in_specs=[
                pl.BlockSpec((1, rows, ws, C), lambda b, i, j: (b, i, j, 0)),
                pl.BlockSpec((1, C), lambda b, i, j: (0, 0)),
                pl.BlockSpec((1, C), lambda b, i, j: (0, 0)),
                pl.BlockSpec((C, 3 * C), lambda b, i, j: (0, 0)),
                pl.BlockSpec((1, 3 * C), lambda b, i, j: (0, 0)),
                pl.BlockSpec((C, C), lambda b, i, j: (0, 0)),
                pl.BlockSpec((1, C), lambda b, i, j: (0, 0)),
            ],
            out_specs=pl.BlockSpec((1, rows, ws, C), lambda b, i, j: (b, i, j, 0)),
            scratch_shapes=[pltpu.VMEM((wbh * n_tok, C), jnp.bfloat16)],
        ),
        compiler_params=pltpu.CompilerParams(
            dimension_semantics=("parallel", "parallel", "parallel"),
            vmem_limit_bytes=vmem_limit),
        cost_estimate=cost,
    )(x4, gamma, beta, wqkv, bqkv, wproj, bproj)
    return out


# ------------------- reference-only window partition helpers ---------------- #

def _window_partition(x, window_size):
    B, H, W, C = x.shape
    x = x.reshape(B, H // window_size, window_size, W // window_size, window_size, C)
    return x.transpose(0, 1, 3, 2, 4, 5).reshape(-1, window_size, window_size, C)


def _window_reverse(windows, window_size, H, W):
    B = windows.shape[0] // (H * W // window_size // window_size)
    x = windows.reshape(B, H // window_size, W // window_size, window_size, window_size, -1)
    return x.transpose(0, 1, 3, 2, 4, 5).reshape(B, H, W, -1)


# --------------------------------- module ----------------------------------- #

class PreNormWindowAttentionPallas:
    """Mirrors davit.py::PreNorm(nn.LayerNorm(dim), WindowAttention(dim, heads, ws))."""

    def __init__(self, dim, num_heads, window_size, qkv_bias=True, eps=1e-5, key=None):
        assert dim % num_heads == 0
        self.dim = dim
        self.num_heads = num_heads
        self.window_size = window_size
        self.head_dim = dim // num_heads
        self.scale = self.head_dim ** (-0.5)
        self.eps = eps

        key = jax.random.PRNGKey(42) if key is None else key
        k1, k2, k3, k4, k5, k6 = jax.random.split(key, 6)
        # LayerNorm affine parameters (randomized so the affine path is tested).
        self.gamma = 1.0 + 0.1 * jax.random.normal(k5, (dim,), jnp.float32)
        self.beta = 0.1 * jax.random.normal(k6, (dim,), jnp.float32)
        # Attention parameters.  PyTorch shapes: qkv.weight (3C, C), proj.weight
        # (C, C); stored pre-transposed (in, out) so kernels compute x @ W + b.
        self.wqkv_t = 0.05 * jax.random.normal(k1, (dim, 3 * dim), jnp.float32)
        self.bqkv = (0.05 * jax.random.normal(k2, (1, 3 * dim), jnp.float32)
                     if qkv_bias else jnp.zeros((1, 3 * dim), jnp.float32))
        self.wproj_t = 0.05 * jax.random.normal(k3, (dim, dim), jnp.float32)
        self.bproj = 0.05 * jax.random.normal(k4, (1, dim), jnp.float32)

        # Kernel-side copies: softmax scale folded into the Q columns (review
        # item 2), MXU weights pre-cast to bf16, LN affine reshaped to (1, C).
        qscale = jnp.concatenate([jnp.full((dim,), self.scale, jnp.float32),
                                  jnp.ones((2 * dim,), jnp.float32)])
        self.wqkv_k = (self.wqkv_t * qscale[None, :]).astype(jnp.bfloat16)
        self.bqkv_k = self.bqkv * qscale[None, :]
        self.wproj_k = self.wproj_t.astype(jnp.bfloat16)
        self.bproj_k = self.bproj
        self.gamma_k = self.gamma.reshape(1, dim)
        self.beta_k = self.beta.reshape(1, dim)

    # ------------------------------ forward -------------------------------- #

    def __call__(self, x, size):
        H, W = size
        B, L, C = x.shape
        assert L == H * W, 'input feature has wrong size'
        ws = self.window_size
        pad_r = (ws - W % ws) % ws
        pad_b = (ws - H % ws) % ws
        x4 = x.reshape(B, H, W, C)
        if pad_r > 0 or pad_b > 0:
            x4 = jnp.pad(x4, ((0, 0), (0, pad_b), (0, pad_r), (0, 0)))
        out4 = _prenorm_window_attention_fused(
            x4, self.gamma_k, self.beta_k, self.wqkv_k, self.bqkv_k,
            self.wproj_k, self.bproj_k,
            num_heads=self.num_heads, head_dim=self.head_dim,
            window_size=ws, valid_h=H, valid_w=W, eps=self.eps)
        if pad_r > 0 or pad_b > 0:
            out4 = out4[:, :H, :W, :]
        # TODO(synk): drop_path (stochastic depth) is None in this config; it is
        # the identity at inference and therefore intentionally omitted.
        return out4.reshape(B, H * W, C), size

    # Pure-JAX, all-f32 reference of the full PreNorm forward (no Pallas).
    def reference(self, x, size):
        H, W = size
        B, L, C = x.shape
        ws, nh, hd = self.window_size, self.num_heads, self.head_dim
        shortcut = x
        mu = jnp.mean(x, axis=-1, keepdims=True)
        var = jnp.mean(jnp.square(x - mu), axis=-1, keepdims=True)
        xn = (x - mu) * lax.rsqrt(var + self.eps) * self.gamma + self.beta
        xr = xn.reshape(B, H, W, C)
        pad_r = (ws - W % ws) % ws
        pad_b = (ws - H % ws) % ws
        xr = jnp.pad(xr, ((0, 0), (0, pad_b), (0, pad_r), (0, 0)))
        Hp, Wp = H + pad_b, W + pad_r
        xw = _window_partition(xr, ws).reshape(-1, ws * ws, C)
        B_, N, _ = xw.shape
        qkv = xw @ self.wqkv_t + self.bqkv[0]
        qkv = qkv.reshape(B_, N, 3, nh, hd).transpose(2, 0, 3, 1, 4)
        q, k, v = qkv[0] * self.scale, qkv[1], qkv[2]
        attn = jax.nn.softmax(q @ jnp.swapaxes(k, -2, -1), axis=-1)
        out = (attn @ v).transpose(0, 2, 1, 3).reshape(B_, N, C)
        out = out @ self.wproj_t + self.bproj[0]
        out = _window_reverse(out.reshape(-1, ws, ws, C), ws, Hp, Wp)
        if pad_r > 0 or pad_b > 0:
            out = out[:, :H, :W, :]
        return shortcut + out.reshape(B, H * W, C), size


# ------------------------------------ main ---------------------------------- #

if __name__ == "__main__":
    B, H, W = 2, 16, 16
    dim, num_heads, window_size = 32, 4, 8

    key = jax.random.PRNGKey(0)
    kx, kp, kx2 = jax.random.split(key, 3)
    x = jax.random.normal(kx, (B, H * W, dim), jnp.float32)
    mod = PreNormWindowAttentionPallas(dim, num_heads, window_size,
                                       qkv_bias=True, key=kp)

    # Case 1: H, W multiples of the window size (no padding path).
    out = jax.block_until_ready(jax.jit(lambda v: mod(v, (H, W))[0])(x))
    ref, _ = mod.reference(x, (H, W))
    assert out.shape == (B, H * W, dim)
    assert jnp.allclose(out, ref, atol=3e-2, rtol=3e-2), "mismatch vs reference"

    # Case 2: padded windows (H, W not multiples of ws) exercises the in-kernel
    # LayerNorm + zero-mask path.
    H2, W2 = 12, 12
    x2 = jax.random.normal(kx2, (B, H2 * W2, dim), jnp.float32)
    out2 = jax.block_until_ready(jax.jit(lambda v: mod(v, (H2, W2))[0])(x2))
    ref2, _ = mod.reference(x2, (H2, W2))
    assert out2.shape == (B, H2 * W2, dim)
    assert jnp.allclose(out2, ref2, atol=3e-2, rtol=3e-2), "mismatch vs reference (padded)"

    print("KERNEL_OK")
</pallas_src>

<mosaic_0001>
module attributes {stable_mosaic.version = 11 : i64} {
  func.func @_prenorm_window_attn_kernel(%arg0: i32, %arg1: i32, %arg2: i32, %arg3: memref<1x16x8x32xf32, #tpu.memory_space<vmem>>, %arg4: memref<1x32xf32, #tpu.memory_space<vmem>>, %arg5: memref<1x32xf32, #tpu.memory_space<vmem>>, %arg6: memref<32x96xbf16, #tpu.memory_space<vmem>>, %arg7: memref<1x96xf32, #tpu.memory_space<vmem>>, %arg8: memref<32x32xbf16, #tpu.memory_space<vmem>>, %arg9: memref<1x32xf32, #tpu.memory_space<vmem>>, %arg10: memref<1x16x8x32xf32, #tpu.memory_space<vmem>>, %arg11: memref<128x32xbf16, #tpu.memory_space<vmem>>) attributes {dimension_semantics = [#tpu.dimension_semantics<parallel>, #tpu.dimension_semantics<parallel>, #tpu.dimension_semantics<parallel>], iteration_bounds = array<i64: 2, 1, 2>, scalar_prefetch = 0 : i64, scratch_operands = 1 : i64, tpu.core_type = #tpu.core_type<tc>, window_params = [{transform_indices = @transform_0, window_bounds = array<i64: 1, 16, 8, 32>}, {pipeline_mode = #tpu.pipeline_mode<synchronous>, transform_indices = @transform_1, window_bounds = array<i64: 1, 32>}, {pipeline_mode = #tpu.pipeline_mode<synchronous>, transform_indices = @transform_2, window_bounds = array<i64: 1, 32>}, {pipeline_mode = #tpu.pipeline_mode<synchronous>, transform_indices = @transform_3, window_bounds = array<i64: 32, 96>}, {pipeline_mode = #tpu.pipeline_mode<synchronous>, transform_indices = @transform_4, window_bounds = array<i64: 1, 96>}, {pipeline_mode = #tpu.pipeline_mode<synchronous>, transform_indices = @transform_5, window_bounds = array<i64: 32, 32>}, {pipeline_mode = #tpu.pipeline_mode<synchronous>, transform_indices = @transform_6, window_bounds = array<i64: 1, 32>}, {transform_indices = @transform_7, window_bounds = array<i64: 1, 16, 8, 32>}]} {
    %c0 = arith.constant 0 : index
    %c0_0 = arith.constant 0 : index
    %c0_1 = arith.constant 0 : index
    %c0_2 = arith.constant 0 : index
    %0 = vector.load %arg3[%c0, %c0_0, %c0_1, %c0_2] : memref<1x16x8x32xf32, #tpu.memory_space<vmem>>, vector<1x16x8x32xf32>
    %1 = vector.shape_cast %0 : vector<1x16x8x32xf32> to vector<16x8x32xf32>
    %cst = arith.constant dense<0.000000e+00> : vector<16x8xf32>
    %2 = vector.multi_reduction <add>, %1, %cst [2] : vector<16x8x32xf32> to vector<16x8xf32>
    %3 = vector.shape_cast %2 : vector<16x8xf32> to vector<16x8x1xf32>
    %cst_3 = arith.constant 3.200000e+01 : f32
    %4 = vector.broadcast %cst_3 : f32 to vector<16x8x1xf32>
    %5 = arith.divf %3, %4 : vector<16x8x1xf32>
    %6 = vector.broadcast %5 : vector<16x8x1xf32> to vector<16x8x32xf32>
    %7 = arith.subf %1, %6 : vector<16x8x32xf32>
    %8 = arith.mulf %7, %7 : vector<16x8x32xf32>
    %cst_4 = arith.constant dense<0.000000e+00> : vector<16x8xf32>
    %9 = vector.multi_reduction <add>, %8, %cst_4 [2] : vector<16x8x32xf32> to vector<16x8xf32>
    %10 = vector.shape_cast %9 : vector<16x8xf32> to vector<16x8x1xf32>
    %cst_5 = arith.constant 3.200000e+01 : f32
    %11 = vector.broadcast %cst_5 : f32 to vector<16x8x1xf32>
    %12 = arith.divf %10, %11 : vector<16x8x1xf32>
    %cst_6 = arith.constant 9.99999974E-6 : f32
    %13 = vector.broadcast %cst_6 : f32 to vector<16x8x1xf32>
    %14 = arith.addf %12, %13 : vector<16x8x1xf32>
    %15 = math.rsqrt %14 : vector<16x8x1xf32>
    %16 = vector.broadcast %15 : vector<16x8x1xf32> to vector<16x8x32xf32>
    %17 = arith.mulf %7, %16 : vector<16x8x32xf32>
    %c0_7 = arith.constant 0 : index
    %c0_8 = arith.constant 0 : index
    %18 = vector.load %arg4[%c0_7, %c0_8] : memref<1x32xf32, #tpu.memory_space<vmem>>, vector<1x32xf32>
    %19 = vector.shape_cast %18 : vector<1x32xf32> to vector<1x1x32xf32>
    %20 = vector.broadcast %19 : vector<1x1x32xf32> to vector<16x8x32xf32>
    %21 = arith.mulf %17, %20 : vector<16x8x32xf32>
    %c0_9 = arith.constant 0 : index
    %c0_10 = arith.constant 0 : index
    %22 = vector.load %arg5[%c0_9, %c0_10] : memref<1x32xf32, #tpu.memory_space<vmem>>, vector<1x32xf32>
    %23 = vector.shape_cast %22 : vector<1x32xf32> to vector<1x1x32xf32>
    %24 = vector.broadcast %23 : vector<1x1x32xf32> to vector<16x8x32xf32>
    %25 = arith.addf %21, %24 : vector<16x8x32xf32>
    %26 = vector.shape_cast %25 : vector<16x8x32xf32> to vector<128x32xf32>
    %27 = arith.truncf %26 : vector<128x32xf32> to vector<128x32xbf16>
    %c0_11 = arith.constant 0 : index
    %c0_12 = arith.constant 0 : index
    %28 = vector.load %arg6[%c0_11, %c0_12] : memref<32x96xbf16, #tpu.memory_space<vmem>>, vector<32x96xbf16>
    %cst_13 = arith.constant dense<0.000000e+00> : vector<128x96xf32>
    %29 = tpu.matmul %27, %28, %cst_13 {dimension_numbers = #tpu.dot_dimension_numbers<[1], [0], [0], [1], [0, 0, 1, 1], [], []>} : vector<128x32xbf16>, vector<32x96xbf16>, vector<128x96xf32> -> vector<128x96xf32>
    %c0_14 = arith.constant 0 : index
    %c0_15 = arith.constant 0 : index
    %30 = vector.load %arg7[%c0_14, %c0_15] : memref<1x96xf32, #tpu.memory_space<vmem>>, vector<1x96xf32>
    %31 = vector.broadcast %30 : vector<1x96xf32> to vector<128x96xf32>
    %32 = arith.addf %29, %31 : vector<128x96xf32>
    %33 = arith.truncf %32 : vector<128x96xf32> to vector<128x96xbf16>
    %34 = vector.extract_strided_slice %33 {offsets = [0, 0], sizes = [128, 8], strides = [1, 1]} : vector<128x96xbf16> to vector<128x8xbf16>
    %35 = vector.shape_cast %34 : vector<128x8xbf16> to vector<2x64x8xbf16>
    %36 = vector.extract_strided_slice %33 {offsets = [0, 32], sizes = [128, 8], strides = [1, 1]} : vector<128x96xbf16> to vector<128x8xbf16>
    %37 = vector.shape_cast %36 : vector<128x8xbf16> to vector<2x64x8xbf16>
    %38 = vector.extract_strided_slice %33 {offsets = [0, 64], sizes = [128, 8], strides = [1, 1]} : vector<128x96xbf16> to vector<128x8xbf16>
    %39 = vector.shape_cast %38 : vector<128x8xbf16> to vector<2x64x8xbf16>
    "tpu.trace_start"() <{level = 10 : i32, message = "bqd,bkd->bqk"}> : () -> ()
    %cst_16 = arith.constant dense<0.000000e+00> : vector<2x64x64xf32>
    %40 = tpu.matmul %35, %37, %cst_16 {dimension_numbers = #tpu.dot_dimension_numbers<[2], [2], [1], [1], [0, 0, 0, 1, 1, 1], [0], [0]>} : vector<2x64x8xbf16>, vector<2x64x8xbf16>, vector<2x64x64xf32> -> vector<2x64x64xf32>
    "tpu.trace_stop"() : () -> ()
    %cst_17 = arith.constant dense<0xFF800000> : vector<2x64xf32>
    %41 = vector.multi_reduction <maximumf>, %40, %cst_17 [2] : vector<2x64x64xf32> to vector<2x64xf32>
    %42 = vector.shape_cast %41 : vector<2x64xf32> to vector<2x64x1xf32>
    %43 = vector.broadcast %42 : vector<2x64x1xf32> to vector<2x64x64xf32>
    %44 = arith.subf %40, %43 : vector<2x64x64xf32>
    %45 = math.exp %44 : vector<2x64x64xf32>
    %cst_18 = arith.constant dense<0.000000e+00> : vector<2x64xf32>
    %46 = vector.multi_reduction <add>, %45, %cst_18 [2] : vector<2x64x64xf32> to vector<2x64xf32>
    %47 = vector.shape_cast %46 : vector<2x64xf32> to vector<2x64x1xf32>
    %48 = tpu.reciprocal %47 {approx = true} : vector<2x64x1xf32> -> vector<2x64x1xf32>
    %49 = vector.broadcast %48 : vector<2x64x1xf32> to vector<2x64x64xf32>
    %50 = arith.mulf %45, %49 : vector<2x64x64xf32>
    %51 = arith.truncf %50 : vector<2x64x64xf32> to vector<2x64x64xbf16>
    "tpu.trace_start"() <{level = 10 : i32, message = "bqk,bkd->bqd"}> : () -> ()
    %cst_19 = arith.constant dense<0.000000e+00> : vector<2x64x8xf32>
    %52 = tpu.matmul %51, %39, %cst_19 {dimension_numbers = #tpu.dot_dimension_numbers<[2], [1], [1], [2], [0, 0, 0, 1, 1, 2], [0], [0]>} : vector<2x64x64xbf16>, vector<2x64x8xbf16>, vector<2x64x8xf32> -> vector<2x64x8xf32>
    "tpu.trace_stop"() : () -> ()
    %53 = vector.shape_cast %52 : vector<2x64x8xf32> to vector<128x8xf32>
    %54 = arith.truncf %53 : vector<128x8xf32> to vector<128x8xbf16>
    %c0_20 = arith.constant 0 : index
    %c0_21 = arith.constant 0 : index
    %55 = vector.load %arg11[%c0_20, %c0_21] : memref<128x32xbf16, #tpu.memory_space<vmem>>, vector<128x8xbf16>
    tpu.vector_store %arg11[%c0_20, %c0_21], %54 {strides = array<i32>} : memref<128x32xbf16, #tpu.memory_space<vmem>>, vector<128x8xbf16>,
    %56 = vector.extract_strided_slice %33 {offsets = [0, 8], sizes = [128, 8], strides = [1, 1]} : vector<128x96xbf16> to vector<128x8xbf16>
    %57 = vector.shape_cast %56 : vector<128x8xbf16> to vector<2x64x8xbf16>
    %58 = vector.extract_strided_slice %33 {offsets = [0, 40], sizes = [128, 8], strides = [1, 1]} : vector<128x96xbf16> to vector<128x8xbf16>
    %59 = vector.shape_cast %58 : vector<128x8xbf16> to vector<2x64x8xbf16>
    %60 = vector.extract_strided_slice %33 {offsets = [0, 72], sizes = [128, 8], strides = [1, 1]} : vector<128x96xbf16> to vector<128x8xbf16>
    %61 = vector.shape_cast %60 : vector<128x8xbf16> to vector<2x64x8xbf16>
    "tpu.trace_start"() <{level = 10 : i32, message = "bqd,bkd->bqk"}> : () -> ()
    %cst_22 = arith.constant dense<0.000000e+00> : vector<2x64x64xf32>
    %62 = tpu.matmul %57, %59, %cst_22 {dimension_numbers = #tpu.dot_dimension_numbers<[2], [2], [1], [1], [0, 0, 0, 1, 1, 1], [0], [0]>} : vector<2x64x8xbf16>, vector<2x64x8xbf16>, vector<2x64x64xf32> -> vector<2x64x64xf32>
    "tpu.trace_stop"() : () -> ()
    %cst_23 = arith.constant dense<0xFF800000> : vector<2x64xf32>
    %63 = vector.multi_reduction <maximumf>, %62, %cst_23 [2] : vector<2x64x64xf32> to vector<2x64xf32>
    %64 = vector.shape_cast %63 : vector<2x64xf32> to vector<2x64x1xf32>
    %65 = vector.broadcast %64 : vector<2x64x1xf32> to vector<2x64x64xf32>
    %66 = arith.subf %62, %65 : vector<2x64x64xf32>
    %67 = math.exp %66 : vector<2x64x64xf32>
    %cst_24 = arith.constant dense<0.000000e+00> : vector<2x64xf32>
    %68 = vector.multi_reduction <add>, %67, %cst_24 [2] : vector<2x64x64xf32> to vector<2x64xf32>
    %69 = vector.shape_cast %68 : vector<2x64xf32> to vector<2x64x1xf32>
    %70 = tpu.reciprocal %69 {approx = true} : vector<2x64x1xf32> -> vector<2x64x1xf32>
    %71 = vector.broadcast %70 : vector<2x64x1xf32> to vector<2x64x64xf32>
    %72 = arith.mulf %67, %71 : vector<2x64x64xf32>
    %73 = arith.truncf %72 : vector<2x64x64xf32> to vector<2x64x64xbf16>
    "tpu.trace_start"() <{level = 10 : i32, message = "bqk,bkd->bqd"}> : () -> ()
    %cst_25 = arith.constant dense<0.000000e+00> : vector<2x64x8xf32>
    %74 = tpu.matmul %73, %61, %cst_25 {dimension_numbers = #tpu.dot_dimension_numbers<[2], [1], [1], [2], [0, 0, 0, 1, 1, 2], [0], [0]>} : vector<2x64x64xbf16>, vector<2x64x8xbf16>, vector<2x64x8xf32> -> vector<2x64x8xf32>
    "tpu.trace_stop"() : () -> ()
    %75 = vector.shape_cast %74 : vector<2x64x8xf32> to vector<128x8xf32>
    %76 = arith.truncf %75 : vector<128x8xf32> to vector<128x8xbf16>
    %c0_26 = arith.constant 0 : index
    %c8 = arith.constant 8 : index
    %77 = vector.load %arg11[%c0_26, %c8] : memref<128x32xbf16, #tpu.memory_space<vmem>>, vector<128x8xbf16>
    tpu.vector_store %arg11[%c0_26, %c8], %76 {strides = array<i32>} : memref<128x32xbf16, #tpu.memory_space<vmem>>, vector<128x8xbf16>,
    %78 = vector.extract_strided_slice %33 {offsets = [0, 16], sizes = [128, 8], strides = [1, 1]} : vector<128x96xbf16> to vector<128x8xbf16>
    %79 = vector.shape_cast %78 : vector<128x8xbf16> to vector<2x64x8xbf16>
    %80 = vector.extract_strided_slice %33 {offsets = [0, 48], sizes = [128, 8], strides = [1, 1]} : vector<128x96xbf16> to vector<128x8xbf16>
    %81 = vector.shape_cast %80 : vector<128x8xbf16> to vector<2x64x8xbf16>
    %82 = vector.extract_strided_slice %33 {offsets = [0, 80], sizes = [128, 8], strides = [1, 1]} : vector<128x96xbf16> to vector<128x8xbf16>
    %83 = vector.shape_cast %82 : vector<128x8xbf16> to vector<2x64x8xbf16>
    "tpu.trace_start"() <{level = 10 : i32, message = "bqd,bkd->bqk"}> : () -> ()
    %cst_27 = arith.constant dense<0.000000e+00> : vector<2x64x64xf32>
    %84 = tpu.matmul %79, %81, %cst_27 {dimension_numbers = #tpu.dot_dimension_numbers<[2], [2], [1], [1], [0, 0, 0, 1, 1, 1], [0], [0]>} : vector<2x64x8xbf16>, vector<2x64x8xbf16>, vector<2x64x64xf32> -> vector<2x64x64xf32>
    "tpu.trace_stop"() : () -> ()
    %cst_28 = arith.constant dense<0xFF800000> : vector<2x64xf32>
    %85 = vector.multi_reduction <maximumf>, %84, %cst_28 [2] : vector<2x64x64xf32> to vector<2x64xf32>
    %86 = vector.shape_cast %85 : vector<2x64xf32> to vector<2x64x1xf32>
    %87 = vector.broadcast %86 : vector<2x64x1xf32> to vector<2x64x64xf32>
    %88 = arith.subf %84, %87 : vector<2x64x64xf32>
    %89 = math.exp %88 : vector<2x64x64xf32>
    %cst_29 = arith.constant dense<0.000000e+00> : vector<2x64xf32>
    %90 = vector.multi_reduction <add>, %89, %cst_29 [2] : vector<2x64x64xf32> to vector<2x64xf32>
    %91 = vector.shape_cast %90 : vector<2x64xf32> to vector<2x64x1xf32>
    %92 = tpu.reciprocal %91 {approx = true} : vector<2x64x1xf32> -> vector<2x64x1xf32>
    %93 = vector.broadcast %92 : vector<2x64x1xf32> to vector<2x64x64xf32>
    %94 = arith.mulf %89, %93 : vector<2x64x64xf32>
    %95 = arith.truncf %94 : vector<2x64x64xf32> to vector<2x64x64xbf16>
    "tpu.trace_start"() <{level = 10 : i32, message = "bqk,bkd->bqd"}> : () -> ()
    %cst_30 = arith.constant dense<0.000000e+00> : vector<2x64x8xf32>
    %96 = tpu.matmul %95, %83, %cst_30 {dimension_numbers = #tpu.dot_dimension_numbers<[2], [1], [1], [2], [0, 0, 0, 1, 1, 2], [0], [0]>} : vector<2x64x64xbf16>, vector<2x64x8xbf16>, vector<2x64x8xf32> -> vector<2x64x8xf32>
    "tpu.trace_stop"() : () -> ()
    %97 = vector.shape_cast %96 : vector<2x64x8xf32> to vector<128x8xf32>
    %98 = arith.truncf %97 : vector<128x8xf32> to vector<128x8xbf16>
    %c0_31 = arith.constant 0 : index
    %c16 = arith.constant 16 : index
    %99 = vector.load %arg11[%c0_31, %c16] : memref<128x32xbf16, #tpu.memory_space<vmem>>, vector<128x8xbf16>
    tpu.vector_store %arg11[%c0_31, %c16], %98 {strides = array<i32>} : memref<128x32xbf16, #tpu.memory_space<vmem>>, vector<128x8xbf16>,
    %100 = vector.extract_strided_slice %33 {offsets = [0, 24], sizes = [128, 8], strides = [1, 1]} : vector<128x96xbf16> to vector<128x8xbf16>
    %101 = vector.shape_cast %100 : vector<128x8xbf16> to vector<2x64x8xbf16>
    %102 = vector.extract_strided_slice %33 {offsets = [0, 56], sizes = [128, 8], strides = [1, 1]} : vector<128x96xbf16> to vector<128x8xbf16>
    %103 = vector.shape_cast %102 : vector<128x8xbf16> to vector<2x64x8xbf16>
    %104 = vector.extract_strided_slice %33 {offsets = [0, 88], sizes = [128, 8], strides = [1, 1]} : vector<128x96xbf16> to vector<128x8xbf16>
    %105 = vector.shape_cast %104 : vector<128x8xbf16> to vector<2x64x8xbf16>
    "tpu.trace_start"() <{level = 10 : i32, message = "bqd,bkd->bqk"}> : () -> ()
    %cst_32 = arith.constant dense<0.000000e+00> : vector<2x64x64xf32>
    %106 = tpu.matmul %101, %103, %cst_32 {dimension_numbers = #tpu.dot_dimension_numbers<[2], [2], [1], [1], [0, 0, 0, 1, 1, 1], [0], [0]>} : vector<2x64x8xbf16>, vector<2x64x8xbf16>, vector<2x64x64xf32> -> vector<2x64x64xf32>
    "tpu.trace_stop"() : () -> ()
    %cst_33 = arith.constant dense<0xFF800000> : vector<2x64xf32>
    %107 = vector.multi_reduction <maximumf>, %106, %cst_33 [2] : vector<2x64x64xf32> to vector<2x64xf32>
    %108 = vector.shape_cast %107 : vector<2x64xf32> to vector<2x64x1xf32>
    %109 = vector.broadcast %108 : vector<2x64x1xf32> to vector<2x64x64xf32>
    %110 = arith.subf %106, %109 : vector<2x64x64xf32>
    %111 = math.exp %110 : vector<2x64x64xf32>
    %cst_34 = arith.constant dense<0.000000e+00> : vector<2x64xf32>
    %112 = vector.multi_reduction <add>, %111, %cst_34 [2] : vector<2x64x64xf32> to vector<2x64xf32>
    %113 = vector.shape_cast %112 : vector<2x64xf32> to vector<2x64x1xf32>
    %114 = tpu.reciprocal %113 {approx = true} : vector<2x64x1xf32> -> vector<2x64x1xf32>
    %115 = vector.broadcast %114 : vector<2x64x1xf32> to vector<2x64x64xf32>
    %116 = arith.mulf %111, %115 : vector<2x64x64xf32>
    %117 = arith.truncf %116 : vector<2x64x64xf32> to vector<2x64x64xbf16>
    "tpu.trace_start"() <{level = 10 : i32, message = "bqk,bkd->bqd"}> : () -> ()
    %cst_35 = arith.constant dense<0.000000e+00> : vector<2x64x8xf32>
    %118 = tpu.matmul %117, %105, %cst_35 {dimension_numbers = #tpu.dot_dimension_numbers<[2], [1], [1], [2], [0, 0, 0, 1, 1, 2], [0], [0]>} : vector<2x64x64xbf16>, vector<2x64x8xbf16>, vector<2x64x8xf32> -> vector<2x64x8xf32>
    "tpu.trace_stop"() : () -> ()
    %119 = vector.shape_cast %118 : vector<2x64x8xf32> to vector<128x8xf32>
    %120 = arith.truncf %119 : vector<128x8xf32> to vector<128x8xbf16>
    %c0_36 = arith.constant 0 : index
    %c24 = arith.constant 24 : index
    %121 = vector.load %arg11[%c0_36, %c24] : memref<128x32xbf16, #tpu.memory_space<vmem>>, vector<128x8xbf16>
    tpu.vector_store %arg11[%c0_36, %c24], %120 {strides = array<i32>} : memref<128x32xbf16, #tpu.memory_space<vmem>>, vector<128x8xbf16>,
    %c0_37 = arith.constant 0 : index
    %c0_38 = arith.constant 0 : index
    %122 = vector.load %arg11[%c0_37, %c0_38] : memref<128x32xbf16, #tpu.memory_space<vmem>>, vector<128x32xbf16>
    %c0_39 = arith.constant 0 : index
    %c0_40 = arith.constant 0 : index
    %123 = vector.load %arg8[%c0_39, %c0_40] : memref<32x32xbf16, #tpu.memory_space<vmem>>, vector<32x32xbf16>
    %cst_41 = arith.constant dense<0.000000e+00> : vector<128x32xf32>
    %124 = tpu.matmul %122, %123, %cst_41 {dimension_numbers = #tpu.dot_dimension_numbers<[1], [0], [0], [1], [0, 0, 1, 1], [], []>} : vector<128x32xbf16>, vector<32x32xbf16>, vector<128x32xf32> -> vector<128x32xf32>
    %c0_42 = arith.constant 0 : index
    %c0_43 = arith.constant 0 : index
    %125 = vector.load %arg9[%c0_42, %c0_43] : memref<1x32xf32, #tpu.memory_space<vmem>>, vector<1x32xf32>
    %126 = vector.broadcast %125 : vector<1x32xf32> to vector<128x32xf32>
    %127 = arith.addf %124, %126 : vector<128x32xf32>
    %c0_44 = arith.constant 0 : index
    %c0_45 = arith.constant 0 : index
    %c0_46 = arith.constant 0 : index
    %c0_47 = arith.constant 0 : index
    %128 = vector.load %arg3[%c0_44, %c0_45, %c0_46, %c0_47] : memref<1x16x8x32xf32, #tpu.memory_space<vmem>>, vector<1x16x8x32xf32>
    %129 = vector.shape_cast %128 : vector<1x16x8x32xf32> to vector<16x8x32xf32>
    %130 = vector.shape_cast %127 : vector<128x32xf32> to vector<16x8x32xf32>
    %131 = arith.addf %129, %130 : vector<16x8x32xf32>
    %c0_48 = arith.constant 0 : index
    %c0_49 = arith.constant 0 : index
    %c0_50 = arith.constant 0 : index
    %c0_51 = arith.constant 0 : index
    %132 = vector.load %arg10[%c0_48, %c0_49, %c0_50, %c0_51] : memref<1x16x8x32xf32, #tpu.memory_space<vmem>>, vector<1x16x8x32xf32>
    %133 = vector.shape_cast %132 : vector<1x16x8x32xf32> to vector<16x8x32xf32>
    %134 = vector.shape_cast %131 : vector<16x8x32xf32> to vector<1x16x8x32xf32>
    tpu.vector_store %arg10[%c0_48, %c0_49, %c0_50, %c0_51], %134 {strides = array<i32>} : memref<1x16x8x32xf32, #tpu.memory_space<vmem>>, vector<1x16x8x32xf32>,
    return
  }
  func.func @transform_0(%arg0: i32, %arg1: i32, %arg2: i32) -> (i32, i32, i32, i32) {
    %c0_i32 = arith.constant 0 : i32
    %c0_i32_0 = arith.constant 0 : i32
    return %arg0, %arg1, %arg2, %c0_i32 : i32, i32, i32, i32
  }
  func.func @transform_1(%arg0: i32, %arg1: i32, %arg2: i32) -> (i32, i32) {
    %c0_i32 = arith.constant 0 : i32
    %c0_i32_0 = arith.constant 0 : i32
    %c0_i32_1 = arith.constant 0 : i32
    return %c0_i32, %c0_i32_0 : i32, i32
  }
  func.func @transform_2(%arg0: i32, %arg1: i32, %arg2: i32) -> (i32, i32) {
    %c0_i32 = arith.constant 0 : i32
    %c0_i32_0 = arith.constant 0 : i32
    %c0_i32_1 = arith.constant 0 : i32
    return %c0_i32, %c0_i32_0 : i32, i32
  }
  func.func @transform_3(%arg0: i32, %arg1: i32, %arg2: i32) -> (i32, i32) {
    %c0_i32 = arith.constant 0 : i32
    %c0_i32_0 = arith.constant 0 : i32
    %c0_i32_1 = arith.constant 0 : i32
    return %c0_i32, %c0_i32_0 : i32, i32
  }
  func.func @transform_4(%arg0: i32, %arg1: i32, %arg2: i32) -> (i32, i32) {
    %c0_i32 = arith.constant 0 : i32
    %c0_i32_0 = arith.constant 0 : i32
    %c0_i32_1 = arith.constant 0 : i32
    return %c0_i32, %c0_i32_0 : i32, i32
  }
  func.func @transform_5(%arg0: i32, %arg1: i32, %arg2: i32) -> (i32, i32) {
    %c0_i32 = arith.constant 0 : i32
    %c0_i32_0 = arith.constant 0 : i32
    %c0_i32_1 = arith.constant 0 : i32
    return %c0_i32, %c0_i32_0 : i32, i32
  }
  func.func @transform_6(%arg0: i32, %arg1: i32, %arg2: i32) -> (i32, i32) {
    %c0_i32 = arith.constant 0 : i32
    %c0_i32_0 = arith.constant 0 : i32
    %c0_i32_1 = arith.constant 0 : i32
    return %c0_i32, %c0_i32_0 : i32, i32
  }
  func.func @transform_7(%arg0: i32, %arg1: i32, %arg2: i32) -> (i32, i32, i32, i32) {
    %c0_i32 = arith.constant 0 : i32
    %c0_i32_0 = arith.constant 0 : i32
    return %arg0, %arg1, %arg2, %c0_i32 : i32, i32, i32, i32
  }
}

</mosaic_0001>

<llo_original>
// kernel: _lambda_.1
$region0: #{_lambda_.1}
  #allocation0 [shape = 'u32[]', space=smem, size = 0x4, offset = 0x4, fixed_abs, tag = 'smem constant byte address 0x4 - core index']
  #allocation1 [shape = 'u32[72,128]{1,0:T(1,128)}', space=vmem, size = 0x9000, scoped, tag = 'internal scratch']
  #allocation2 [shape = 'bf16[128,32]{1,0:T(8,128)(2,1)}', space=vmem, size = 0x8000, scoped, tag = 'scratch operand']
  %s0 = inlined_call_operand.vmem [shape: f32[2,16,16,32], index: 0, kind: input, shape index: {}]
  %s1 = inlined_call_operand.vmem [shape: f32[1,32], index: 1, kind: input, shape index: {}]
  %s2 = inlined_call_operand.vmem [shape: f32[1,32], index: 2, kind: input, shape index: {}]
  %s3 = inlined_call_operand.vmem [shape: bf16[32,96], index: 3, kind: input, shape index: {}]
  %s4 = inlined_call_operand.vmem [shape: f32[1,96], index: 4, kind: input, shape index: {}]
  %s5 = inlined_call_operand.vmem [shape: bf16[32,32], index: 5, kind: input, shape index: {}]
  %s6 = inlined_call_operand.vmem [shape: f32[1,32], index: 6, kind: input, shape index: {}]
  %s7 = inlined_call_operand.vmem [shape: f32[2,16,16,32], index: 7, kind: output, shape index: {}]
  %s8 = sld [smem:[#allocation0]]
  $region133: #{_lambda_.1} parent=0
    _
  %s10 = ssub.s32 1, %s8
  %s11 = scalar_select 0, %s10, %s8
  $region1: #{_lambda_.1} parent=0
    #allocation3 [shape = 'u8[131072]{0}', space=vmem, size = 0x20000, scoped, tag = 'input window, operand 0']
    #allocation4 [shape = 'u8[131072]{0}', space=vmem, size = 0x20000, scoped, tag = 'output window, operand 0']
    loop: start=0, step=1, limit=6
    $region2: #{_lambda_.1} parent=1 // loop_pre_header
      _
    $region3: #{_lambda_.1} parent=1 // loop_header
      %s13 = sphi 0, %s17
      %p14 = scmp.ge.s32.totalorder %s13, 6
      %s20 = sphi 0, %s39
      %s21 = sphi 0, %s35
      %s22 = sphi 0, %s31
      %s23 = sphi 0, %s20
      %s24 = sphi 0, %s21
      %s25 = sphi 0, %s22
      %s26 = sphi 0, %s23
      %s27 = sphi 0, %s24
      %s28 = sphi 0, %s25
      %s46 = sphi 0, %s48
      %s49 = sphi 0, %s46
      %s50 = sphi 0, %s49
      %s66 = sphi 0, %s50
      %s70 = sphi 0, %s70
      %s72 = sphi 0, %s70
      %s73 = sphi 0, %s72
      %s87 = sphi 0, %s73
      %s91 = sphi 0, %s91
      %s93 = sphi 0, %s91
      %s94 = sphi 0, %s93
      %s108 = sphi 0, %s94
      %s112 = sphi 0, %s112
      %s114 = sphi 0, %s112
      %s115 = sphi 0, %s114
      %s129 = sphi 0, %s115
      %s133 = sphi 0, %s133
      %s135 = sphi 0, %s133
      %s136 = sphi 0, %s135
      %s150 = sphi 0, %s136
      %s154 = sphi 0, %s154
      %s156 = sphi 0, %s154
      %s157 = sphi 0, %s156
      %s171 = sphi 0, %s157
      %s175 = sphi 0, %s175
      %s177 = sphi 0, %s175
      %s178 = sphi 0, %s177
      %s192 = sphi 0, %s178
      %s202 = sphi 0, %s204
      %s205 = sphi 0, %s202
      %s206 = sphi 0, %s205
      %s222 = sphi 0, %s206
    $region4: #{_lambda_.1} parent=1 // loop_header_branch
      %16 = sbr.rel (%p14) target = $region8
    $region5: #{_lambda_.1} parent=1 // loop_body
      %s18 = ssub.s32 %s13, 1
      %s19 = ssub.s32 %s13, 2
      %s29 = sadd.s32 1, %s22
      %p30 = scmp.ge.s32.totalorder %s29, 2
      %s31 = scalar_select %p30, 0, %s29
      %s32 = sadd.s32 1, %s21
      %s33 = scalar_select %p30, %s32, %s21
      %p34 = scmp.ge.s32.totalorder %s33, 1
      %s35 = scalar_select %p34, 0, %s33
      %s36 = sadd.s32 1, %s20
      %s37 = scalar_select %p34, %s36, %s20
      %p38 = scmp.ge.s32.totalorder %s37, 2
      %s39 = scalar_select %p38, 0, %s37
      %s40 = ssub.s32 %s20, %s39
      %s41 = ssub.s32 %s21, %s35
      %s42 = sor.u32 %s40, %s41
      %s43 = ssub.s32 %s22, %s31
      %s44 = sor.u32 %s42, %s43
      %p45 = scmp.eq.s32.totalorder %s44, 0
      %s47 = sadd.s32 %s46, 1
      %s48 = scalar_select %p45, %s46, %s47
      %p51 = pneg %p45
      %p52 = scmp.eq.s32.totalorder %s13, 3
      %p53 = por %p51, %p52
      %p54 = scmp.ne.s32.totalorder %s46, %s49
      %p55 = scmp.eq.s32.totalorder %s13, 0
      %p56 = por %p54, %p55
      %p57 = scmp.ne.s32.totalorder %s46, %s49
      %p58 = scmp.eq.s32.totalorder %s18, 3
      %p59 = por %p57, %p58
      %p60 = scmp.ne.s32.totalorder %s49, %s50
      %p61 = scmp.eq.s32.totalorder %s18, 0
      %p62 = por %p60, %p61
      %p63 = scmp.ne.s32.totalorder %s49, %s50
      %p64 = scmp.eq.s32.totalorder %s19, 3
      %p65 = por %p63, %p64
      %p67 = scmp.ne.s32.totalorder %s50, %s66
      %p68 = scmp.eq.s32.totalorder %s19, 0
      %p69 = por %p67, %p68
      %s71 = sadd.s32 %s70, 1
      %p74 = scmp.eq.s32.totalorder %s13, 3
      %p75 = scmp.ne.s32.totalorder %s70, %s72
      %p76 = scmp.eq.s32.totalorder %s13, 0
      %p77 = por %p75, %p76
      %p78 = scmp.ne.s32.totalorder %s70, %s72
      %p79 = scmp.eq.s32.totalorder %s18, 3
      %p80 = por %p78, %p79
      %p81 = scmp.ne.s32.totalorder %s72, %s73
      %p82 = scmp.eq.s32.totalorder %s18, 0
      %p83 = por %p81, %p82
      %p84 = scmp.ne.s32.totalorder %s72, %s73
      %p85 = scmp.eq.s32.totalorder %s19, 3
      %p86 = por %p84, %p85
      %p88 = scmp.ne.s32.totalorder %s73, %s87
      %p89 = scmp.eq.s32.totalorder %s19, 0
      %p90 = por %p88, %p89
      %s92 = sadd.s32 %s91, 1
      %p95 = scmp.eq.s32.totalorder %s13, 3
      %p96 = scmp.ne.s32.totalorder %s91, %s93
      %p97 = scmp.eq.s32.totalorder %s13, 0
      %p98 = por %p96, %p97
      %p99 = scmp.ne.s32.totalorder %s91, %s93
      %p100 = scmp.eq.s32.totalorder %s18, 3
      %p101 = por %p99, %p100
      %p102 = scmp.ne.s32.totalorder %s93, %s94
      %p103 = scmp.eq.s32.totalorder %s18, 0
      %p104 = por %p102, %p103
      %p105 = scmp.ne.s32.totalorder %s93, %s94
      %p106 = scmp.eq.s32.totalorder %s19, 3
      %p107 = por %p105, %p106
      %p109 = scmp.ne.s32.totalorder %s94, %s108
      %p110 = scmp.eq.s32.totalorder %s19, 0
      %p111 = por %p109, %p110
      %s113 = sadd.s32 %s112, 1
      %p116 = scmp.eq.s32.totalorder %s13, 3
      %p117 = scmp.ne.s32.totalorder %s112, %s114
      %p118 = scmp.eq.s32.totalorder %s13, 0
      %p119 = por %p117, %p118
      %p120 = scmp.ne.s32.totalorder %s112, %s114
      %p121 = scmp.eq.s32.totalorder %s18, 3
      %p122 = por %p120, %p121
      %p123 = scmp.ne.s32.totalorder %s114, %s115
      %p124 = scmp.eq.s32.totalorder %s18, 0
      %p125 = por %p123, %p124
      %p126 = scmp.ne.s32.totalorder %s114, %s115
      %p127 = scmp.eq.s32.totalorder %s19, 3
      %p128 = por %p126, %p127
      %p130 = scmp.ne.s32.totalorder %s115, %s129
      %p131 = scmp.eq.s32.totalorder %s19, 0
      %p132 = por %p130, %p131
      %s134 = sadd.s32 %s133, 1
      %p137 = scmp.eq.s32.totalorder %s13, 3
      %p138 = scmp.ne.s32.totalorder %s133, %s135
      %p139 = scmp.eq.s32.totalorder %s13, 0
      %p140 = por %p138, %p139
      %p141 = scmp.ne.s32.totalorder %s133, %s135
      %p142 = scmp.eq.s32.totalorder %s18, 3
      %p143 = por %p141, %p142
      %p144 = scmp.ne.s32.totalorder %s135, %s136
      %p145 = scmp.eq.s32.totalorder %s18, 0
      %p146 = por %p144, %p145
      %p147 = scmp.ne.s32.totalorder %s135, %s136
      %p148 = scmp.eq.s32.totalorder %s19, 3
      %p149 = por %p147, %p148
      %p151 = scmp.ne.s32.totalorder %s136, %s150
      %p152 = scmp.eq.s32.totalorder %s19, 0
      %p153 = por %p151, %p152
      %s155 = sadd.s32 %s154, 1
      %p158 = scmp.eq.s32.totalorder %s13, 3
      %p159 = scmp.ne.s32.totalorder %s154, %s156
      %p160 = scmp.eq.s32.totalorder %s13, 0
      %p161 = por %p159, %p160
      %p162 = scmp.ne.s32.totalorder %s154, %s156
      %p163 = scmp.eq.s32.totalorder %s18, 3
      %p164 = por %p162, %p163
      %p165 = scmp.ne.s32.totalorder %s156, %s157
      %p166 = scmp.eq.s32.totalorder %s18, 0
      %p167 = por %p165, %p166
      %p168 = scmp.ne.s32.totalorder %s156, %s157
      %p169 = scmp.eq.s32.totalorder %s19, 3
      %p170 = por %p168, %p169
      %p172 = scmp.ne.s32.totalorder %s157, %s171
      %p173 = scmp.eq.s32.totalorder %s19, 0
      %p174 = por %p172, %p173
      %s176 = sadd.s32 %s175, 1
      %p179 = scmp.eq.s32.totalorder %s13, 3
      %p180 = scmp.ne.s32.totalorder %s175, %s177
      %p181 = scmp.eq.s32.totalorder %s13, 0
      %p182 = por %p180, %p181
      %p183 = scmp.ne.s32.totalorder %s175, %s177
      %p184 = scmp.eq.s32.totalorder %s18, 3
      %p185 = por %p183, %p184
      %p186 = scmp.ne.s32.totalorder %s177, %s178
      %p187 = scmp.eq.s32.totalorder %s18, 0
      %p188 = por %p186, %p187
      %p189 = scmp.ne.s32.totalorder %s177, %s178
      %p190 = scmp.eq.s32.totalorder %s19, 3
      %p191 = por %p189, %p190
      %p193 = scmp.ne.s32.totalorder %s178, %s192
      %p194 = scmp.eq.s32.totalorder %s19, 0
      %p195 = por %p193, %p194
      %s196 = ssub.s32 %s20, %s39
      %s197 = ssub.s32 %s21, %s35
      %s198 = sor.u32 %s196, %s197
      %s199 = ssub.s32 %s22, %s31
      %s200 = sor.u32 %s198, %s199
      %p201 = scmp.eq.s32.totalorder %s200, 0
      %s203 = sadd.s32 %s202, 1
      %s204 = scalar_select %p201, %s202, %s203
      %p207 = pneg %p201
      %p208 = scmp.eq.s32.totalorder %s13, 3
      %p209 = por %p207, %p208
      %p210 = scmp.ne.s32.totalorder %s202, %s205
      %p211 = scmp.eq.s32.totalorder %s13, 0
      %p212 = por %p210, %p211
      %p213 = scmp.ne.s32.totalorder %s202, %s205
      %p214 = scmp.eq.s32.totalorder %s18, 3
      %p215 = por %p213, %p214
      %p216 = scmp.ne.s32.totalorder %s205, %s206
      %p217 = scmp.eq.s32.totalorder %s18, 0
      %p218 = por %p216, %p217
      %p219 = scmp.ne.s32.totalorder %s205, %s206
      %p220 = scmp.eq.s32.totalorder %s19, 3
      %p221 = por %p219, %p220
      %p223 = scmp.ne.s32.totalorder %s206, %s222
      %p224 = scmp.eq.s32.totalorder %s19, 0
      %p225 = por %p223, %p224
      %p226 = scmp.le.s32.totalorder 1, %s13
      %p227 = scmp.lt.s32.totalorder %s13, 5
      %p228 = pnand %p226, %p227
      %p229 = pneg %p228
      // Predicated region
      $region9: #{_lambda_.1} parent=5 // pred_check
        _
      $region10: #{_lambda_.1} parent=5 // pred_check_branch
        %231 = sbr.rel (%p228) target = $region12
      $region11: #{_lambda_.1} parent=5 // pred_region
        %s232 = ssub.s32 %s13, 1
        // Predicated region
        $region13: #{_lambda_.1} parent=11 // pred_check
          %p233 = pneg %p83
        $region14: #{_lambda_.1} parent=11 // pred_check_branch
          %235 = sbr.rel (%p233) target = $region16
        $region15: #{_lambda_.1} parent=11 // pred_region
          _
        $region16: #{_lambda_.1} parent=11 // pred_fallthru
          _
        // Predicated region
        $region17: #{_lambda_.1} parent=11 // pred_check
          %p236 = pneg %p104
        $region18: #{_lambda_.1} parent=11 // pred_check_branch
          %238 = sbr.rel (%p236) target = $region20
        $region19: #{_lambda_.1} parent=11 // pred_region
          _
        $region20: #{_lambda_.1} parent=11 // pred_fallthru
          _
        // Predicated region
        $region21: #{_lambda_.1} parent=11 // pred_check
          %p239 = pneg %p125
        $region22: #{_lambda_.1} parent=11 // pred_check_branch
          %241 = sbr.rel (%p239) target = $region24
        $region23: #{_lambda_.1} parent=11 // pred_region
          _
        $region24: #{_lambda_.1} parent=11 // pred_fallthru
          _
        // Predicated region
        $region25: #{_lambda_.1} parent=11 // pred_check
          %p242 = pneg %p146
        $region26: #{_lambda_.1} parent=11 // pred_check_branch
          %244 = sbr.rel (%p242) target = $region28
        $region27: #{_lambda_.1} parent=11 // pred_region
          _
        $region28: #{_lambda_.1} parent=11 // pred_fallthru
          _
        // Predicated region
        $region29: #{_lambda_.1} parent=11 // pred_check
          %p245 = pneg %p167
        $region30: #{_lambda_.1} parent=11 // pred_check_branch
          %247 = sbr.rel (%p245) target = $region32
        $region31: #{_lambda_.1} parent=11 // pred_region
          _
        $region32: #{_lambda_.1} parent=11 // pred_fallthru
          _
        // Predicated region
        $region33: #{_lambda_.1} parent=11 // pred_check
          %p248 = pneg %p188
        $region34: #{_lambda_.1} parent=11 // pred_check_branch
          %250 = sbr.rel (%p248) target = $region36
        $region35: #{_lambda_.1} parent=11 // pred_region
          _
        $region36: #{_lambda_.1} parent=11 // pred_fallthru
          _
      $region12: #{_lambda_.1} parent=5 // pred_fallthru
        _
      %p251 = scmp.lt.s32.totalorder %s13, 4
      // Predicated region
      $region37: #{_lambda_.1} parent=5 // pred_check
        %p252 = pneg %p251
      $region38: #{_lambda_.1} parent=5 // pred_check_branch
        %254 = sbr.rel (%p252) target = $region40
      $region39: #{_lambda_.1} parent=5 // pred_region
        // Predicated region
        $region41: #{_lambda_.1} parent=39 // pred_check
          %p255 = pneg %p56
        $region42: #{_lambda_.1} parent=39 // pred_check_branch
          %257 = sbr.rel (%p255) target = $region44
        $region43: #{_lambda_.1} parent=39 // pred_region
          %s258 = sand.u32 %s46, 1
          %s259 = sand.u32 %s46, 1
          %s260 = smul.addr %s259, 128
          %s261 = scalar_lea.vmem [#allocation3], %s260
          %s262 = smul.u32 16, %s21
          %s263 = smul.addr %s262, 2
          %s264 = sadd.s32 %s22, %s263
          %s265 = smul.addr %s20, 32
          %s266 = sadd.s32 %s264, %s265
          %s267 = smul.addr %s266, 8
          %s268 = scalar_lea.vmem %s0, %s267
          // Predicated region
          $region45: #{_lambda_.1} parent=43 // pred_check
            _
          $region46: #{_lambda_.1} parent=43 // pred_check_branch
            %270 = sbr.rel (0) target = $region48
          $region47: #{_lambda_.1} parent=43 // pred_region
            // Predicated region
            $region49: #{_lambda_.1} parent=47 // pred_check
              _
            $region50: #{_lambda_.1} parent=47 // pred_check_branch
              %272 = sbr.rel (0) target = $region52
            $region51: #{_lambda_.1} parent=47 // pred_region
              // Predicated region
              $region64: #{_lambda_.1} parent=51 // pred_check
                _
              $region65: #{_lambda_.1} parent=51 // pred_check_branch
                %318 = sbr.rel (0) target = $region67
              $region66: #{_lambda_.1} parent=51 // pred_region
                loop: start=0, step=1, limit=1
                $region68: #{_lambda_.1} parent=66 // loop_pre_header
                  _
                $region69: #{_lambda_.1} parent=66 // loop_header
                  %s320 = sphi 0, %s324
                  %p321 = scmp.ge.s32.totalorder %s320, 1
                  %s325 = sphi %s268, %s268
                  %s326 = sphi %s261, %s261
                $region70: #{_lambda_.1} parent=66 // loop_header_branch
                  %323 = sbr.rel (%p321) target = $region74
                $region71: #{_lambda_.1} parent=66 // loop_body
                  %v327 = vld [vmem:[%s325] sm:$0xff]
                  %328 = vst [vmem:[%s326] sm:$0xff] %v327
                  %v329 = vld [vmem:[%s325 + $0x10] sm:$0xff]
                  %330 = vst [vmem:[%s326 + $0x8] sm:$0xff] %v329
                  %v331 = vld [vmem:[%s325 + $0x20] sm:$0xff]
                  %332 = vst [vmem:[%s326 + $0x10] sm:$0xff] %v331
                  %v333 = vld [vmem:[%s325 + $0x30] sm:$0xff]
                  %334 = vst [vmem:[%s326 + $0x18] sm:$0xff] %v333
                  %v335 = vld [vmem:[%s325 + $0x40] sm:$0xff]
                  %336 = vst [vmem:[%s326 + $0x20] sm:$0xff] %v335
                  %v337 = vld [vmem:[%s325 + $0x50] sm:$0xff]
                  %338 = vst [vmem:[%s326 + $0x28] sm:$0xff] %v337
                  %v339 = vld [vmem:[%s325 + $0x60] sm:$0xff]
                  %340 = vst [vmem:[%s326 + $0x30] sm:$0xff] %v339
                  %v341 = vld [vmem:[%s325 + $0x70] sm:$0xff]
                  %342 = vst [vmem:[%s326 + $0x38] sm:$0xff] %v341
                  %v343 = vld [vmem:[%s325 + $0x80] sm:$0xff]
                  %344 = vst [vmem:[%s326 + $0x40] sm:$0xff] %v343
                  %v345 = vld [vmem:[%s325 + $0x90] sm:$0xff]
                  %346 = vst [vmem:[%s326 + $0x48] sm:$0xff] %v345
                  %v347 = vld [vmem:[%s325 + $0xa0] sm:$0xff]
                  %348 = vst [vmem:[%s326 + $0x50] sm:$0xff] %v347
                  %v349 = vld [vmem:[%s325 + $0xb0] sm:$0xff]
                  %350 = vst [vmem:[%s326 + $0x58] sm:$0xff] %v349
                  %v351 = vld [vmem:[%s325 + $0xc0] sm:$0xff]
                  %352 = vst [vmem:[%s326 + $0x60] sm:$0xff] %v351
                  %v353 = vld [vmem:[%s325 + $0xd0] sm:$0xff]
                  %354 = vst [vmem:[%s326 + $0x68] sm:$0xff] %v353
                  %v355 = vld [vmem:[%s325 + $0xe0] sm:$0xff]
                  %356 = vst [vmem:[%s326 + $0x70] sm:$0xff] %v355
                  %v357 = vld [vmem:[%s325 + $0xf0] sm:$0xff]
                  %358 = vst [vmem:[%s326 + $0x78] sm:$0xff] %v357
                $region72: #{_lambda_.1} parent=66 // loop_footer
                  %s324 = sadd.s32 1, %s320
                $region73: #{_lambda_.1} parent=66 // loop_footer_branch
                  %319 = sbr.rel target = $region69
                $region74: #{_lambda_.1} parent=66 // loop_exit
                  _
              $region67: #{_lambda_.1} parent=51 // pred_fallthru
                _
              // Predicated region
              $region75: #{_lambda_.1} parent=51 // pred_check
                _
              $region76: #{_lambda_.1} parent=51 // pred_check_branch
                %360 = sbr.rel target = $region78
              $region77: #{_lambda_.1} parent=51 // pred_region
                _
              $region78: #{_lambda_.1} parent=51 // pred_fallthru
                _
            $region52: #{_lambda_.1} parent=47 // pred_fallthru
              _
            // Predicated region
            $region53: #{_lambda_.1} parent=47 // pred_check
              _
            $region54: #{_lambda_.1} parent=47 // pred_check_branch
              %274 = sbr.rel target = $region56
            $region55: #{_lambda_.1} parent=47 // pred_region
              %s276 = ssub.s32 256, 1
              loop: start=0, step=1, limit=1
              $region57: #{_lambda_.1} parent=55 // loop_pre_header
                _
              $region58: #{_lambda_.1} parent=55 // loop_header
                %s278 = sphi 0, %s282
                %p279 = scmp.ge.s32.totalorder %s278, 1
                %s283 = sphi %s268, %s268
                %s284 = sphi %s261, %s261
              $region59: #{_lambda_.1} parent=55 // loop_header_branch
                %281 = sbr.rel (%p279) target = $region63
              $region60: #{_lambda_.1} parent=55 // loop_body
                %v285 = vld [vmem:[%s283] sm:%s276]
                %286 = vst [vmem:[%s284] sm:%s276] %v285
                %v287 = vld [vmem:[%s283 + $0x10] sm:%s276]
                %288 = vst [vmem:[%s284 + $0x8] sm:%s276] %v287
                %v289 = vld [vmem:[%s283 + $0x20] sm:%s276]
                %290 = vst [vmem:[%s284 + $0x10] sm:%s276] %v289
                %v291 = vld [vmem:[%s283 + $0x30] sm:%s276]
                %292 = vst [vmem:[%s284 + $0x18] sm:%s276] %v291
                %v293 = vld [vmem:[%s283 + $0x40] sm:%s276]
                %294 = vst [vmem:[%s284 + $0x20] sm:%s276] %v293
                %v295 = vld [vmem:[%s283 + $0x50] sm:%s276]
                %296 = vst [vmem:[%s284 + $0x28] sm:%s276] %v295
                %v297 = vld [vmem:[%s283 + $0x60] sm:%s276]
                %298 = vst [vmem:[%s284 + $0x30] sm:%s276] %v297
                %v299 = vld [vmem:[%s283 + $0x70] sm:%s276]
                %300 = vst [vmem:[%s284 + $0x38] sm:%s276] %v299
                %v301 = vld [vmem:[%s283 + $0x80] sm:%s276]
                %302 = vst [vmem:[%s284 + $0x40] sm:%s276] %v301
                %v303 = vld [vmem:[%s283 + $0x90] sm:%s276]
                %304 = vst [vmem:[%s284 + $0x48] sm:%s276] %v303
                %v305 = vld [vmem:[%s283 + $0xa0] sm:%s276]
                %306 = vst [vmem:[%s284 + $0x50] sm:%s276] %v305
                %v307 = vld [vmem:[%s283 + $0xb0] sm:%s276]
                %308 = vst [vmem:[%s284 + $0x58] sm:%s276] %v307
                %v309 = vld [vmem:[%s283 + $0xc0] sm:%s276]
                %310 = vst [vmem:[%s284 + $0x60] sm:%s276] %v309
                %v311 = vld [vmem:[%s283 + $0xd0] sm:%s276]
                %312 = vst [vmem:[%s284 + $0x68] sm:%s276] %v311
                %v313 = vld [vmem:[%s283 + $0xe0] sm:%s276]
                %314 = vst [vmem:[%s284 + $0x70] sm:%s276] %v313
                %v315 = vld [vmem:[%s283 + $0xf0] sm:%s276]
                %316 = vst [vmem:[%s284 + $0x78] sm:%s276] %v315
              $region61: #{_lambda_.1} parent=55 // loop_footer
                %s282 = sadd.s32 1, %s278
              $region62: #{_lambda_.1} parent=55 // loop_footer_branch
                %277 = sbr.rel target = $region58
              $region63: #{_lambda_.1} parent=55 // loop_exit
                _
            $region56: #{_lambda_.1} parent=47 // pred_fallthru
              _
          $region48: #{_lambda_.1} parent=43 // pred_fallthru
            _
          %361 = vnop
        $region44: #{_lambda_.1} parent=39 // pred_fallthru
          _
      $region40: #{_lambda_.1} parent=5 // pred_fallthru
        _
      %p362 = scmp.le.s32.totalorder 1, %s13
      %p363 = scmp.lt.s32.totalorder %s13, 5
      %p364 = pnand %p362, %p363
      %p365 = pneg %p364
      // Predicated region
      $region79: #{_lambda_.1} parent=5 // pred_check
        _
      $region80: #{_lambda_.1} parent=5 // pred_check_branch
        %367 = sbr.rel (%p364) target = $region82
      $region81: #{_lambda_.1} parent=5 // pred_region
        %s368 = ssub.s32 %s13, 1
        %s369 = sand.u32 %s49, 1
        %s370 = sand.u32 %s49, 1
        %s371 = smul.addr %s370, 128
        %s372 = scalar_lea.vmem [#allocation3], %s371
        // Predicated region
        $region83: #{_lambda_.1} parent=81 // pred_check
          %p373 = pneg %p62
        $region84: #{_lambda_.1} parent=81 // pred_check_branch
          %375 = sbr.rel (%p373) target = $region86
        $region85: #{_lambda_.1} parent=81 // pred_region
          _
        $region86: #{_lambda_.1} parent=81 // pred_fallthru
          _
        %s376 = sand.u32 %s49, 1
        %s377 = sand.u32 %s49, 1
        %s378 = smul.addr %s377, 128
        %s379 = scalar_lea.vmem [#allocation3], %s378
        %p380 = pneg %p62
        %p381 = pneg %p59
        %p382 = pneg %p83
        %p383 = pneg %p80
        %p384 = pneg %p104
        %p385 = pneg %p101
        %p386 = pneg %p125
        %p387 = pneg %p122
        %p388 = pneg %p146
        %p389 = pneg %p143
        %p390 = pneg %p167
        %p391 = pneg %p164
        %p392 = pneg %p188
        %p393 = pneg %p185
        %p394 = pneg %p218
        %p395 = pneg %p215
        %s396 = sand.u32 %s205, 1
        %s397 = sand.u32 %s205, 1
        %s398 = smul.addr %s397, 128
        %s399 = scalar_lea.vmem [#allocation4], %s398
        %s400 = smul.u32 16, %s24
        %s401 = smul.u32 16, %s24
        %v403 = vld [vmem:[%s372] sm:$0xff]
        %v404 = vld [vmem:[%s372 + $0x8] sm:$0xff]
        %v405 = vld [vmem:[%s372 + $0x10] sm:$0xff]
        %v406 = vld [vmem:[%s372 + $0x18] sm:$0xff]
        %v407 = vld [vmem:[%s372 + $0x20] sm:$0xff]
        %v408 = vld [vmem:[%s372 + $0x28] sm:$0xff]
        %v409 = vld [vmem:[%s372 + $0x30] sm:$0xff]
        %v410 = vld [vmem:[%s372 + $0x38] sm:$0xff]
        %v411 = vld [vmem:[%s372 + $0x40] sm:$0xff]
        %v412 = vld [vmem:[%s372 + $0x48] sm:$0xff]
        %v413 = vld [vmem:[%s372 + $0x50] sm:$0xff]
        %v414 = vld [vmem:[%s372 + $0x58] sm:$0xff]
        %v415 = vld [vmem:[%s372 + $0x60] sm:$0xff]
        %v416 = vld [vmem:[%s372 + $0x68] sm:$0xff]
        %v417 = vld [vmem:[%s372 + $0x70] sm:$0xff]
        %v418 = vld [vmem:[%s372 + $0x78] sm:$0xff]
        %vm419 = vcmask 261120
        %v420 = vsel %vm419, %v403, 0.0
        %421 = vadd.xlane.f32.xlu0 %v420
        %v422 = vpop.xlane.xlu0 %421
        %v423 = vsel %vm419, %v404, 0.0
        %424 = vadd.xlane.f32.xlu0 %v423
        %v425 = vpop.xlane.xlu0 %424
        %v426 = vsel %vm419, %v405, 0.0
        %427 = vadd.xlane.f32.xlu0 %v426
        %v428 = vpop.xlane.xlu0 %427
        %v429 = vsel %vm419, %v406, 0.0
        %430 = vadd.xlane.f32.xlu0 %v429
        %v431 = vpop.xlane.xlu0 %430
        %v432 = vsel %vm419, %v407, 0.0
        %433 = vadd.xlane.f32.xlu0 %v432
        %v434 = vpop.xlane.xlu0 %433
        %v435 = vsel %vm419, %v408, 0.0
        %436 = vadd.xlane.f32.xlu0 %v435
        %v437 = vpop.xlane.xlu0 %436
        %v438 = vsel %vm419, %v409, 0.0
        %439 = vadd.xlane.f32.xlu0 %v438
        %v440 = vpop.xlane.xlu0 %439
        %v441 = vsel %vm419, %v410, 0.0
        %442 = vadd.xlane.f32.xlu0 %v441
        %v443 = vpop.xlane.xlu0 %442
        %v444 = vsel %vm419, %v411, 0.0
        %445 = vadd.xlane.f32.xlu0 %v444
        %v446 = vpop.xlane.xlu0 %445
        %v447 = vsel %vm419, %v412, 0.0
        %448 = vadd.xlane.f32.xlu0 %v447
        %v449 = vpop.xlane.xlu0 %448
        %v450 = vsel %vm419, %v413, 0.0
        %451 = vadd.xlane.f32.xlu0 %v450
        %v452 = vpop.xlane.xlu0 %451
        %v453 = vsel %vm419, %v414, 0.0
        %454 = vadd.xlane.f32.xlu0 %v453
        %v455 = vpop.xlane.xlu0 %454
        %v456 = vsel %vm419, %v415, 0.0
        %457 = vadd.xlane.f32.xlu0 %v456
        %v458 = vpop.xlane.xlu0 %457
        %v459 = vsel %vm419, %v416, 0.0
        %460 = vadd.xlane.f32.xlu0 %v459
        %v461 = vpop.xlane.xlu0 %460
        %v462 = vsel %vm419, %v417, 0.0
        %463 = vadd.xlane.f32.xlu0 %v462
        %v464 = vpop.xlane.xlu0 %463
        %v465 = vsel %vm419, %v418, 0.0
        %466 = vadd.xlane.f32.xlu0 %v465
        %v467 = vpop.xlane.xlu0 %466
        %v468 = vrcp.pop 32.0
        %v469 = vmul.f32 32.0, %v468
        %v470 = vsub.f32 1.0, %v469
        %v471 = vmul.f32 %v468, %v470
        %v472 = vadd.f32 %v468, %v471
        %vm473 = vweird.f32 %v468
        %v474 = vsel %vm473, %v468, %v472
        %v475 = vmul.f32 %v422, %v474
        %v476 = vmul.f32 %v425, %v474
        %v477 = vmul.f32 %v428, %v474
        %v478 = vmul.f32 %v431, %v474
        %v479 = vmul.f32 %v434, %v474
        %v480 = vmul.f32 %v437, %v474
        %v481 = vmul.f32 %v440, %v474
        %v482 = vmul.f32 %v443, %v474
        %v483 = vmul.f32 %v446, %v474
        %v484 = vmul.f32 %v449, %v474
        %v485 = vmul.f32 %v452, %v474
        %v486 = vmul.f32 %v455, %v474
        %v487 = vmul.f32 %v458, %v474
        %v488 = vmul.f32 %v461, %v474
        %v489 = vmul.f32 %v464, %v474
        %v490 = vmul.f32 %v467, %v474
        %v491 = vsub.f32 %v403, %v475
        %v492 = vsub.f32 %v404, %v476
        %v493 = vsub.f32 %v405, %v477
        %v494 = vsub.f32 %v406, %v478
        %v495 = vsub.f32 %v407, %v479
        %v496 = vsub.f32 %v408, %v480
        %v497 = vsub.f32 %v409, %v481
        %v498 = vsub.f32 %v410, %v482
        %v499 = vsub.f32 %v411, %v483
        %v500 = vsub.f32 %v412, %v484
        %v501 = vsub.f32 %v413, %v485
        %v502 = vsub.f32 %v414, %v486
        %v503 = vsub.f32 %v415, %v487
        %v504 = vsub.f32 %v416, %v488
        %v505 = vsub.f32 %v417, %v489
        %v506 = vsub.f32 %v418, %v490
        %v507 = vmul.f32 %v491, %v491
        %v508 = vmul.f32 %v492, %v492
        %v509 = vmul.f32 %v493, %v493
        %v510 = vmul.f32 %v494, %v494
        %v511 = vmul.f32 %v495, %v495
        %v512 = vmul.f32 %v496, %v496
        %v513 = vmul.f32 %v497, %v497
        %v514 = vmul.f32 %v498, %v498
        %v515 = vmul.f32 %v499, %v499
        %v516 = vmul.f32 %v500, %v500
        %v517 = vmul.f32 %v501, %v501
        %v518 = vmul.f32 %v502, %v502
        %v519 = vmul.f32 %v503, %v503
        %v520 = vmul.f32 %v504, %v504
        %v521 = vmul.f32 %v505, %v505
        %v522 = vmul.f32 %v506, %v506
        %v523 = vsel %vm419, %v507, 0.0
        %524 = vadd.xlane.f32.xlu0 %v523
        %v525 = vpop.xlane.xlu0 %524
        %v526 = vsel %vm419, %v508, 0.0
        %527 = vadd.xlane.f32.xlu0 %v526
        %v528 = vpop.xlane.xlu0 %527
        %v529 = vsel %vm419, %v509, 0.0
        %530 = vadd.xlane.f32.xlu0 %v529
        %v531 = vpop.xlane.xlu0 %530
        %v532 = vsel %vm419, %v510, 0.0
        %533 = vadd.xlane.f32.xlu0 %v532
        %v534 = vpop.xlane.xlu0 %533
        %v535 = vsel %vm419, %v511, 0.0
        %536 = vadd.xlane.f32.xlu0 %v535
        %v537 = vpop.xlane.xlu0 %536
        %v538 = vsel %vm419, %v512, 0.0
        %539 = vadd.xlane.f32.xlu0 %v538
        %v540 = vpop.xlane.xlu0 %539
        %v541 = vsel %vm419, %v513, 0.0
        %542 = vadd.xlane.f32.xlu0 %v541
        %v543 = vpop.xlane.xlu0 %542
        %v544 = vsel %vm419, %v514, 0.0
        %545 = vadd.xlane.f32.xlu0 %v544
        %v546 = vpop.xlane.xlu0 %545
        %v547 = vsel %vm419, %v515, 0.0
        %548 = vadd.xlane.f32.xlu0 %v547
        %v549 = vpop.xlane.xlu0 %548
        %v550 = vsel %vm419, %v516, 0.0
        %551 = vadd.xlane.f32.xlu0 %v550
        %v552 = vpop.xlane.xlu0 %551
        %v553 = vsel %vm419, %v517, 0.0
        %554 = vadd.xlane.f32.xlu0 %v553
        %v555 = vpop.xlane.xlu0 %554
        %v556 = vsel %vm419, %v518, 0.0
        %557 = vadd.xlane.f32.xlu0 %v556
        %v558 = vpop.xlane.xlu0 %557
        %v559 = vsel %vm419, %v519, 0.0
        %560 = vadd.xlane.f32.xlu0 %v559
        %v561 = vpop.xlane.xlu0 %560
        %v562 = vsel %vm419, %v520, 0.0
        %563 = vadd.xlane.f32.xlu0 %v562
        %v564 = vpop.xlane.xlu0 %563
        %v565 = vsel %vm419, %v521, 0.0
        %566 = vadd.xlane.f32.xlu0 %v565
        %v567 = vpop.xlane.xlu0 %566
        %v568 = vsel %vm419, %v522, 0.0
        %569 = vadd.xlane.f32.xlu0 %v568
        %v570 = vpop.xlane.xlu0 %569
        %v571 = vmul.f32 %v525, %v474
        %v572 = vmul.f32 %v528, %v474
        %v573 = vmul.f32 %v531, %v474
        %v574 = vmul.f32 %v534, %v474
        %v575 = vmul.f32 %v537, %v474
        %v576 = vmul.f32 %v540, %v474
        %v577 = vmul.f32 %v543, %v474
        %v578 = vmul.f32 %v546, %v474
        %v579 = vmul.f32 %v549, %v474
        %v580 = vmul.f32 %v552, %v474
        %v581 = vmul.f32 %v555, %v474
        %v582 = vmul.f32 %v558, %v474
        %v583 = vmul.f32 %v561, %v474
        %v584 = vmul.f32 %v564, %v474
        %v585 = vmul.f32 %v567, %v474
        %v586 = vmul.f32 %v570, %v474
        %v587 = vadd.f32 %v571, 1e-05
        %v588 = vadd.f32 %v572, 1e-05
        %v589 = vadd.f32 %v573, 1e-05
        %v590 = vadd.f32 %v574, 1e-05
        %v591 = vadd.f32 %v575, 1e-05
        %v592 = vadd.f32 %v576, 1e-05
        %v593 = vadd.f32 %v577, 1e-05
        %v594 = vadd.f32 %v578, 1e-05
        %v595 = vadd.f32 %v579, 1e-05
        %v596 = vadd.f32 %v580, 1e-05
        %v597 = vadd.f32 %v581, 1e-05
        %v598 = vadd.f32 %v582, 1e-05
        %v599 = vadd.f32 %v583, 1e-05
        %v600 = vadd.f32 %v584, 1e-05
        %v601 = vadd.f32 %v585, 1e-05
        %v602 = vadd.f32 %v586, 1e-05
        %v603 = vrsqrt.pop %v587
        %v604 = vmul.f32 %v603, %v587
        %v605 = vmul.f32 %v604, %v603
        %v606 = vmul.f32 0.5, %v605
        %v607 = vsub.f32 1.5, %v606
        %v608 = vmul.f32 %v603, %v607
        %vm609 = vweird.f32 %v587
        %vm610 = vweird.f32 %v603
        %vm611 = vmor %vm609, %vm610
        %v612 = vsel %vm611, %v603, %v608
        %v613 = vrsqrt.pop %v588
        %v614 = vmul.f32 %v613, %v588
        %v615 = vmul.f32 %v614, %v613
        %v616 = vmul.f32 0.5, %v615
        %v617 = vsub.f32 1.5, %v616
        %v618 = vmul.f32 %v613, %v617
        %vm619 = vweird.f32 %v588
        %vm620 = vweird.f32 %v613
        %vm621 = vmor %vm619, %vm620
        %v622 = vsel %vm621, %v613, %v618
        %v623 = vrsqrt.pop %v589
        %v624 = vmul.f32 %v623, %v589
        %v625 = vmul.f32 %v624, %v623
        %v626 = vmul.f32 0.5, %v625
        %v627 = vsub.f32 1.5, %v626
        %v628 = vmul.f32 %v623, %v627
        %vm629 = vweird.f32 %v589
        %vm630 = vweird.f32 %v623
        %vm631 = vmor %vm629, %vm630
        %v632 = vsel %vm631, %v623, %v628
        %v633 = vrsqrt.pop %v590
        %v634 = vmul.f32 %v633, %v590
        %v635 = vmul.f32 %v634, %v633
        %v636 = vmul.f32 0.5, %v635
        %v637 = vsub.f32 1.5, %v636
        %v638 = vmul.f32 %v633, %v637
        %vm639 = vweird.f32 %v590
        %vm640 = vweird.f32 %v633
        %vm641 = vmor %vm639, %vm640
        %v642 = vsel %vm641, %v633, %v638
        %v643 = vrsqrt.pop %v591
        %v644 = vmul.f32 %v643, %v591
        %v645 = vmul.f32 %v644, %v643
        %v646 = vmul.f32 0.5, %v645
        %v647 = vsub.f32 1.5, %v646
        %v648 = vmul.f32 %v643, %v647
        %vm649 = vweird.f32 %v591
        %vm650 = vweird.f32 %v643
        %vm651 = vmor %vm649, %vm650
        %v652 = vsel %vm651, %v643, %v648
        %v653 = vrsqrt.pop %v592
        %v654 = vmul.f32 %v653, %v592
        %v655 = vmul.f32 %v654, %v653
        %v656 = vmul.f32 0.5, %v655
        %v657 = vsub.f32 1.5, %v656
        %v658 = vmul.f32 %v653, %v657
        %vm659 = vweird.f32 %v592
        %vm660 = vweird.f32 %v653
        %vm661 = vmor %vm659, %vm660
        %v662 = vsel %vm661, %v653, %v658
        %v663 = vrsqrt.pop %v593
        %v664 = vmul.f32 %v663, %v593
        %v665 = vmul.f32 %v664, %v663
        %v666 = vmul.f32 0.5, %v665
        %v667 = vsub.f32 1.5, %v666
        %v668 = vmul.f32 %v663, %v667
        %vm669 = vweird.f32 %v593
        %vm670 = vweird.f32 %v663
        %vm671 = vmor %vm669, %vm670
        %v672 = vsel %vm671, %v663, %v668
        %v673 = vrsqrt.pop %v594
        %v674 = vmul.f32 %v673, %v594
        %v675 = vmul.f32 %v674, %v673
        %v676 = vmul.f32 0.5, %v675
        %v677 = vsub.f32 1.5, %v676
        %v678 = vmul.f32 %v673, %v677
        %vm679 = vweird.f32 %v594
        %vm680 = vweird.f32 %v673
        %vm681 = vmor %vm679, %vm680
        %v682 = vsel %vm681, %v673, %v678
        %v683 = vrsqrt.pop %v595
        %v684 = vmul.f32 %v683, %v595
        %v685 = vmul.f32 %v684, %v683
        %v686 = vmul.f32 0.5, %v685
        %v687 = vsub.f32 1.5, %v686
        %v688 = vmul.f32 %v683, %v687
        %vm689 = vweird.f32 %v595
        %vm690 = vweird.f32 %v683
        %vm691 = vmor %vm689, %vm690
        %v692 = vsel %vm691, %v683, %v688
        %v693 = vrsqrt.pop %v596
        %v694 = vmul.f32 %v693, %v596
        %v695 = vmul.f32 %v694, %v693
        %v696 = vmul.f32 0.5, %v695
        %v697 = vsub.f32 1.5, %v696
        %v698 = vmul.f32 %v693, %v697
        %vm699 = vweird.f32 %v596
        %vm700 = vweird.f32 %v693
        %vm701 = vmor %vm699, %vm700
        %v702 = vsel %vm701, %v693, %v698
        %v703 = vrsqrt.pop %v597
        %v704 = vmul.f32 %v703, %v597
        %v705 = vmul.f32 %v704, %v703
        %v706 = vmul.f32 0.5, %v705
        %v707 = vsub.f32 1.5, %v706
        %v708 = vmul.f32 %v703, %v707
        %vm709 = vweird.f32 %v597
        %vm710 = vweird.f32 %v703
        %vm711 = vmor %vm709, %vm710
        %v712 = vsel %vm711, %v703, %v708
        %v713 = vrsqrt.pop %v598
        %v714 = vmul.f32 %v713, %v598
        %v715 = vmul.f32 %v714, %v713
        %v716 = vmul.f32 0.5, %v715
        %v717 = vsub.f32 1.5, %v716
        %v718 = vmul.f32 %v713, %v717
        %vm719 = vweird.f32 %v598
        %vm720 = vweird.f32 %v713
        %vm721 = vmor %vm719, %vm720
        %v722 = vsel %vm721, %v713, %v718
        %v723 = vrsqrt.pop %v599
        %v724 = vmul.f32 %v723, %v599
        %v725 = vmul.f32 %v724, %v723
        %v726 = vmul.f32 0.5, %v725
        %v727 = vsub.f32 1.5, %v726
        %v728 = vmul.f32 %v723, %v727
        %vm729 = vweird.f32 %v599
        %vm730 = vweird.f32 %v723
        %vm731 = vmor %vm729, %vm730
        %v732 = vsel %vm731, %v723, %v728
        %v733 = vrsqrt.pop %v600
        %v734 = vmul.f32 %v733, %v600
        %v735 = vmul.f32 %v734, %v733
        %v736 = vmul.f32 0.5, %v735
        %v737 = vsub.f32 1.5, %v736
        %v738 = vmul.f32 %v733, %v737
        %vm739 = vweird.f32 %v600
        %vm740 = vweird.f32 %v733
        %vm741 = vmor %vm739, %vm740
        %v742 = vsel %vm741, %v733, %v738
        %v743 = vrsqrt.pop %v601
        %v744 = vmul.f32 %v743, %v601
        %v745 = vmul.f32 %v744, %v743
        %v746 = vmul.f32 0.5, %v745
        %v747 = vsub.f32 1.5, %v746
        %v748 = vmul.f32 %v743, %v747
        %vm749 = vweird.f32 %v601
        %vm750 = vweird.f32 %v743
        %vm751 = vmor %vm749, %vm750
        %v752 = vsel %vm751, %v743, %v748
        %v753 = vrsqrt.pop %v602
        %v754 = vmul.f32 %v753, %v602
        %v755 = vmul.f32 %v754, %v753
        %v756 = vmul.f32 0.5, %v755
        %v757 = vsub.f32 1.5, %v756
        %v758 = vmul.f32 %v753, %v757
        %vm759 = vweird.f32 %v602
        %vm760 = vweird.f32 %v753
        %vm761 = vmor %vm759, %vm760
        %v762 = vsel %vm761, %v753, %v758
        %v763 = vmul.f32 %v491, %v612
        %v764 = vmul.f32 %v492, %v622
        %v765 = vmul.f32 %v493, %v632
        %v766 = vmul.f32 %v494, %v642
        %v767 = vmul.f32 %v495, %v652
        %v768 = vmul.f32 %v496, %v662
        %v769 = vmul.f32 %v497, %v672
        %v770 = vmul.f32 %v498, %v682
        %v771 = vmul.f32 %v499, %v692
        %v772 = vmul.f32 %v500, %v702
        %v773 = vmul.f32 %v501, %v712
        %v774 = vmul.f32 %v502, %v722
        %v775 = vmul.f32 %v503, %v732
        %v776 = vmul.f32 %v504, %v742
        %v777 = vmul.f32 %v505, %v752
        %v778 = vmul.f32 %v506, %v762
        %v779 = vld [vmem:[%s1] sm:$0x1]
        %v781 = vperm.slane %v779, 0
        %v783 = vmul.f32 %v763, %v781
        %v784 = vmul.f32 %v764, %v781
        %v785 = vmul.f32 %v765, %v781
        %v786 = vmul.f32 %v766, %v781
        %v787 = vmul.f32 %v767, %v781
        %v788 = vmul.f32 %v768, %v781
        %v789 = vmul.f32 %v769, %v781
        %v790 = vmul.f32 %v770, %v781
        %v791 = vmul.f32 %v771, %v781
        %v792 = vmul.f32 %v772, %v781
        %v793 = vmul.f32 %v773, %v781
        %v794 = vmul.f32 %v774, %v781
        %v795 = vmul.f32 %v775, %v781
        %v796 = vmul.f32 %v776, %v781
        %v797 = vmul.f32 %v777, %v781
        %v798 = vmul.f32 %v778, %v781
        %v799 = vld [vmem:[%s2] sm:$0x1]
        %v801 = vperm.slane %v799, 0
        %v803 = vadd.f32 %v783, %v801
        %v804 = vadd.f32 %v784, %v801
        %v805 = vadd.f32 %v785, %v801
        %v806 = vadd.f32 %v786, %v801
        %v807 = vadd.f32 %v787, %v801
        %v808 = vadd.f32 %v788, %v801
        %v809 = vadd.f32 %v789, %v801
        %v810 = vadd.f32 %v790, %v801
        %v811 = vadd.f32 %v791, %v801
        %v812 = vadd.f32 %v792, %v801
        %v813 = vadd.f32 %v793, %v801
        %v814 = vadd.f32 %v794, %v801
        %v815 = vadd.f32 %v795, %v801
        %v816 = vadd.f32 %v796, %v801
        %v817 = vadd.f32 %v797, %v801
        %v818 = vadd.f32 %v798, %v801
        %v819 = vpack.c.bf16 %v804, %v803
        %v820 = vpack.c.bf16 %v806, %v805
        %v821 = vpack.c.bf16 %v808, %v807
        %v822 = vpack.c.bf16 %v810, %v809
        %v823 = vpack.c.bf16 %v812, %v811
        %v824 = vpack.c.bf16 %v814, %v813
        %v825 = vpack.c.bf16 %v816, %v815
        %v826 = vpack.c.bf16 %v818, %v817
        %v827 = vld [vmem:[%s3] sm:$0xf]
        %v828 = vld [vmem:[%s3 + $0x4] sm:$0xf]
        %v829 = vld [vmem:[%s3 + $0x8] sm:$0xf]
        %v830 = vld [vmem:[%s3 + $0xc] sm:$0xf]
        %v831 = vld [vmem:[%s4] sm:$0x1]
        %v833 = vperm.slane %v831, 0
        %v839 = vunpack.c.l.b16 %v827
        %v840 = vunpack.c.l.b16 %v828
        %v841 = vunpack.c.l.b16 %v829
        %v842 = vunpack.c.l.b16 %v830
        %v843 = vpack.c.b16 %v840, %v839
        %v844 = vpack.c.b16 %v842, %v841
        %v848 = vsel %vm419, %v819, 0
        %v851 = vsel %vm419, %v820, 0
        %v854 = vsel %vm419, %v821, 0
        %v857 = vsel %vm419, %v822, 0
        %v860 = vsel %vm419, %v823, 0
        %v863 = vsel %vm419, %v824, 0
        %v866 = vsel %vm419, %v825, 0
        %v869 = vsel %vm419, %v826, 0
        %871 = vmatpush.bf16.msra.mxu0 0
        %872 = vmatpush.bf16.msra.mxu0 0
        %873 = vmatpush.bf16.msra.mxu0 0
        %874 = vmatpush.bf16.msra.mxu0 0
        %875 = vmatpush.bf16.msra.mxu0 0
        %876 = vmatpush.bf16.msra.mxu0 0
        %877 = vmatpush.bf16.msra.mxu0 %v844
        %878 = vmatpush.bf16.msra.mxu0 %v843
        %879 = vmatmul.bf16.gmra.mxu0 %v848
        %v880 = vpop.f32.mrf.mxu0
        %v881 = vadd.f32 %v833, %v880
        %v882 = vpop.f32.mrf.mxu0
        %v883 = vadd.f32 %v833, %v882
        %884 = vmatmul.bf16.gmra.mxu0 %v851
        %v885 = vpop.f32.mrf.mxu0
        %v886 = vadd.f32 %v833, %v885
        %v887 = vpop.f32.mrf.mxu0
        %v888 = vadd.f32 %v833, %v887
        %889 = vmatmul.bf16.gmra.mxu0 %v854
        %v890 = vpop.f32.mrf.mxu0
        %v891 = vadd.f32 %v833, %v890
        %v892 = vpop.f32.mrf.mxu0
        %v893 = vadd.f32 %v833, %v892
        %894 = vmatmul.bf16.gmra.mxu0 %v857
        %v895 = vpop.f32.mrf.mxu0
        %v896 = vadd.f32 %v833, %v895
        %v897 = vpop.f32.mrf.mxu0
        %v898 = vadd.f32 %v833, %v897
        %899 = vmatmul.bf16.gmra.mxu0 %v860
        %v900 = vpop.f32.mrf.mxu0
        %v901 = vadd.f32 %v833, %v900
        %v902 = vpop.f32.mrf.mxu0
        %v903 = vadd.f32 %v833, %v902
        %904 = vmatmul.bf16.gmra.mxu0 %v863
        %v905 = vpop.f32.mrf.mxu0
        %v906 = vadd.f32 %v833, %v905
        %v907 = vpop.f32.mrf.mxu0
        %v908 = vadd.f32 %v833, %v907
        %909 = vmatmul.bf16.gmra.mxu0 %v866
        %v910 = vpop.f32.mrf.mxu0
        %v911 = vadd.f32 %v833, %v910
        %v912 = vpop.f32.mrf.mxu0
        %v913 = vadd.f32 %v833, %v912
        %914 = vmatmul.bf16.gmra.mxu0 %v869
        %v915 = vpop.f32.mrf.mxu0
        %v916 = vadd.f32 %v833, %v915
        %v917 = vpop.f32.mrf.mxu0
        %v918 = vadd.f32 %v833, %v917
        %919 = vdwg.mxu0
        %v920 = vpack.c.bf16 %v881, %v881
        %v921 = vpack.c.bf16 %v883, %v883
        %v922 = vpack.c.bf16 %v886, %v886
        %v923 = vpack.c.bf16 %v888, %v888
        %v924 = vpack.c.bf16 %v891, %v891
        %v925 = vpack.c.bf16 %v893, %v893
        %v926 = vpack.c.bf16 %v896, %v896
        %v927 = vpack.c.bf16 %v898, %v898
        %v928 = vpack.c.bf16 %v901, %v901
        %v929 = vpack.c.bf16 %v903, %v903
        %v930 = vpack.c.bf16 %v906, %v906
        %v931 = vpack.c.bf16 %v908, %v908
        %v932 = vpack.c.bf16 %v911, %v911
        %v933 = vpack.c.bf16 %v913, %v913
        %v934 = vpack.c.bf16 %v916, %v916
        %v935 = vpack.c.bf16 %v918, %v918
        %v944 = vunpack.c.l.b16 %v920
        %v945 = vunpack.c.l.b16 %v921
        %v946 = vunpack.c.l.b16 %v922
        %v947 = vunpack.c.l.b16 %v923
        %v948 = vunpack.c.l.b16 %v924
        %v949 = vunpack.c.l.b16 %v925
        %v950 = vunpack.c.l.b16 %v926
        %v951 = vunpack.c.l.b16 %v927
        %v952 = vpack.c.b16 %v945, %v944
        %v953 = vpack.c.b16 %v947, %v946
        %v954 = vpack.c.b16 %v949, %v948
        %v955 = vpack.c.b16 %v951, %v950
        %956 = vrot.lane.b32.xlu0 %v952, 96
        %v957 = vpop.permute.xlu0 %956
        %958 = vrot.lane.b32.xlu0 %v953, 96
        %v959 = vpop.permute.xlu0 %958
        %960 = vrot.lane.b32.xlu0 %v954, 96
        %v961 = vpop.permute.xlu0 %960
        %962 = vrot.lane.b32.xlu0 %v955, 96
        %v963 = vpop.permute.xlu0 %962
        %vm964 = vcmask 64512
        %v966 = vsel %vm964, %v952, 0
        %v969 = vsel %vm964, %v953, 0
        %v972 = vsel %vm964, %v954, 0
        %v975 = vsel %vm964, %v955, 0
        %v978 = vsel %vm964, %v957, 0
        %v981 = vsel %vm964, %v959, 0
        %v984 = vsel %vm964, %v961, 0
        %v987 = vsel %vm964, %v963, 0
        %989 = vmatpush.bf16.xpose.msra.mxu0 0
        %990 = vmatpush.bf16.xpose.msra.mxu0 0
        %991 = vmatpush.bf16.xpose.msra.mxu0 0
        %992 = vmatpush.bf16.xpose.msra.mxu0 0
        %993 = vmatpush.bf16.xpose.msra.mxu0 %v987
        %994 = vmatpush.bf16.xpose.msra.mxu0 %v984
        %995 = vmatpush.bf16.xpose.msra.mxu0 %v981
        %996 = vmatpush.bf16.xpose.msra.mxu0 %v978
        %997 = vmatmul.bf16.gmra.mxu0 %v966
        %v998 = vpop.f32.mrf.mxu0
        %v999 = vadd.f32 0.0, %v998
        %v1000 = vpop.f32.mrf.mxu0
        %v1001 = vadd.f32 0.0, %v1000
        %1002 = vmatmul.bf16.gmra.mxu0 %v969
        %v1003 = vpop.f32.mrf.mxu0
        %v1004 = vadd.f32 0.0, %v1003
        %v1005 = vpop.f32.mrf.mxu0
        %v1006 = vadd.f32 0.0, %v1005
        %1007 = vmatmul.bf16.gmra.mxu0 %v972
        %v1008 = vpop.f32.mrf.mxu0
        %v1009 = vadd.f32 0.0, %v1008
        %v1010 = vpop.f32.mrf.mxu0
        %v1011 = vadd.f32 0.0, %v1010
        %1012 = vmatmul.bf16.gmra.mxu0 %v975
        %v1013 = vpop.f32.mrf.mxu0
        %v1014 = vadd.f32 0.0, %v1013
        %v1015 = vpop.f32.mrf.mxu0
        %v1016 = vadd.f32 0.0, %v1015
        %1017 = vdwg.mxu0
        %v1026 = vunpack.c.l.b16 %v928
        %v1027 = vunpack.c.l.b16 %v929
        %v1028 = vunpack.c.l.b16 %v930
        %v1029 = vunpack.c.l.b16 %v931
        %v1030 = vunpack.c.l.b16 %v932
        %v1031 = vunpack.c.l.b16 %v933
        %v1032 = vunpack.c.l.b16 %v934
        %v1033 = vunpack.c.l.b16 %v935
        %v1034 = vpack.c.b16 %v1027, %v1026
        %v1035 = vpack.c.b16 %v1029, %v1028
        %v1036 = vpack.c.b16 %v1031, %v1030
        %v1037 = vpack.c.b16 %v1033, %v1032
        %1038 = vrot.lane.b32.xlu0 %v1034, 96
        %v1039 = vpop.permute.xlu0 %1038
        %1040 = vrot.lane.b32.xlu0 %v1035, 96
        %v1041 = vpop.permute.xlu0 %1040
        %1042 = vrot.lane.b32.xlu0 %v1036, 96
        %v1043 = vpop.permute.xlu0 %1042
        %1044 = vrot.lane.b32.xlu0 %v1037, 96
        %v1045 = vpop.permute.xlu0 %1044
        %v1047 = vsel %vm964, %v1034, 0
        %v1050 = vsel %vm964, %v1035, 0
        %v1053 = vsel %vm964, %v1036, 0
        %v1056 = vsel %vm964, %v1037, 0
        %v1059 = vsel %vm964, %v1039, 0
        %v1062 = vsel %vm964, %v1041, 0
        %v1065 = vsel %vm964, %v1043, 0
        %v1068 = vsel %vm964, %v1045, 0
        %1070 = vmatpush.bf16.xpose.msra.mxu0 0
        %1071 = vmatpush.bf16.xpose.msra.mxu0 0
        %1072 = vmatpush.bf16.xpose.msra.mxu0 0
        %1073 = vmatpush.bf16.xpose.msra.mxu0 0
        %1074 = vmatpush.bf16.xpose.msra.mxu0 %v1068
        %1075 = vmatpush.bf16.xpose.msra.mxu0 %v1065
        %1076 = vmatpush.bf16.xpose.msra.mxu0 %v1062
        %1077 = vmatpush.bf16.xpose.msra.mxu0 %v1059
        %1078 = vmatmul.bf16.gmra.mxu0 %v1047
        %v1079 = vpop.f32.mrf.mxu0
        %v1080 = vadd.f32 0.0, %v1079
        %v1081 = vpop.f32.mrf.mxu0
        %v1082 = vadd.f32 0.0, %v1081
        %1083 = vmatmul.bf16.gmra.mxu0 %v1050
        %v1084 = vpop.f32.mrf.mxu0
        %v1085 = vadd.f32 0.0, %v1084
        %v1086 = vpop.f32.mrf.mxu0
        %v1087 = vadd.f32 0.0, %v1086
        %1088 = vmatmul.bf16.gmra.mxu0 %v1053
        %v1089 = vpop.f32.mrf.mxu0
        %v1090 = vadd.f32 0.0, %v1089
        %v1091 = vpop.f32.mrf.mxu0
        %v1092 = vadd.f32 0.0, %v1091
        %1093 = vmatmul.bf16.gmra.mxu0 %v1056
        %v1094 = vpop.f32.mrf.mxu0
        %v1095 = vadd.f32 0.0, %v1094
        %v1096 = vpop.f32.mrf.mxu0
        %v1097 = vadd.f32 0.0, %v1096
        %1098 = vdwg.mxu0
        %vm1099 = vcmask 523264
        %v1100 = vsel %vm1099, %v999, -inf
        %1101 = vmax.xlane.f32.xlu0 %v1100
        %v1102 = vpop.xlane.xlu0 %1101
        %v1103 = vsel %vm1099, %v1001, -inf
        %1104 = vmax.xlane.f32.xlu0 %v1103
        %v1105 = vpop.xlane.xlu0 %1104
        %v1106 = vsel %vm1099, %v1004, -inf
        %1107 = vmax.xlane.f32.xlu0 %v1106
        %v1108 = vpop.xlane.xlu0 %1107
        %v1109 = vsel %vm1099, %v1006, -inf
        %1110 = vmax.xlane.f32.xlu0 %v1109
        %v1111 = vpop.xlane.xlu0 %1110
        %v1112 = vsel %vm1099, %v1009, -inf
        %1113 = vmax.xlane.f32.xlu0 %v1112
        %v1114 = vpop.xlane.xlu0 %1113
        %v1115 = vsel %vm1099, %v1011, -inf
        %1116 = vmax.xlane.f32.xlu0 %v1115
        %v1117 = vpop.xlane.xlu0 %1116
        %v1118 = vsel %vm1099, %v1014, -inf
        %1119 = vmax.xlane.f32.xlu0 %v1118
        %v1120 = vpop.xlane.xlu0 %1119
        %v1121 = vsel %vm1099, %v1016, -inf
        %1122 = vmax.xlane.f32.xlu0 %v1121
        %v1123 = vpop.xlane.xlu0 %1122
        %v1124 = vsel %vm1099, %v1080, -inf
        %1125 = vmax.xlane.f32.xlu0 %v1124
        %v1126 = vpop.xlane.xlu0 %1125
        %v1127 = vsel %vm1099, %v1082, -inf
        %1128 = vmax.xlane.f32.xlu0 %v1127
        %v1129 = vpop.xlane.xlu0 %1128
        %v1130 = vsel %vm1099, %v1085, -inf
        %1131 = vmax.xlane.f32.xlu0 %v1130
        %v1132 = vpop.xlane.xlu0 %1131
        %v1133 = vsel %vm1099, %v1087, -inf
        %1134 = vmax.xlane.f32.xlu0 %v1133
        %v1135 = vpop.xlane.xlu0 %1134
        %v1136 = vsel %vm1099, %v1090, -inf
        %1137 = vmax.xlane.f32.xlu0 %v1136
        %v1138 = vpop.xlane.xlu0 %1137
        %v1139 = vsel %vm1099, %v1092, -inf
        %1140 = vmax.xlane.f32.xlu0 %v1139
        %v1141 = vpop.xlane.xlu0 %1140
        %v1142 = vsel %vm1099, %v1095, -inf
        %1143 = vmax.xlane.f32.xlu0 %v1142
        %v1144 = vpop.xlane.xlu0 %1143
        %v1145 = vsel %vm1099, %v1097, -inf
        %1146 = vmax.xlane.f32.xlu0 %v1145
        %v1147 = vpop.xlane.xlu0 %1146
        %v1148 = vsub.f32 %v999, %v1102
        %v1149 = vsub.f32 %v1001, %v1105
        %v1150 = vsub.f32 %v1004, %v1108
        %v1151 = vsub.f32 %v1006, %v1111
        %v1152 = vsub.f32 %v1009, %v1114
        %v1153 = vsub.f32 %v1011, %v1117
        %v1154 = vsub.f32 %v1014, %v1120
        %v1155 = vsub.f32 %v1016, %v1123
        %v1156 = vsub.f32 %v1080, %v1126
        %v1157 = vsub.f32 %v1082, %v1129
        %v1158 = vsub.f32 %v1085, %v1132
        %v1159 = vsub.f32 %v1087, %v1135
        %v1160 = vsub.f32 %v1090, %v1138
        %v1161 = vsub.f32 %v1092, %v1141
        %v1162 = vsub.f32 %v1095, %v1144
        %v1163 = vsub.f32 %v1097, %v1147
        %v1164 = vmul.f32 %v1148, 1.442695
        %v1165 = vpow.pop %v1164
        %v1166 = vmul.f32 %v1149, 1.442695
        %v1167 = vpow.pop %v1166
        %v1168 = vmul.f32 %v1150, 1.442695
        %v1169 = vpow.pop %v1168
        %v1170 = vmul.f32 %v1151, 1.442695
        %v1171 = vpow.pop %v1170
        %v1172 = vmul.f32 %v1152, 1.442695
        %v1173 = vpow.pop %v1172
        %v1174 = vmul.f32 %v1153, 1.442695
        %v1175 = vpow.pop %v1174
        %v1176 = vmul.f32 %v1154, 1.442695
        %v1177 = vpow.pop %v1176
        %v1178 = vmul.f32 %v1155, 1.442695
        %v1179 = vpow.pop %v1178
        %v1180 = vmul.f32 %v1156, 1.442695
        %v1181 = vpow.pop %v1180
        %v1182 = vmul.f32 %v1157, 1.442695
        %v1183 = vpow.pop %v1182
        %v1184 = vmul.f32 %v1158, 1.442695
        %v1185 = vpow.pop %v1184
        %v1186 = vmul.f32 %v1159, 1.442695
        %v1187 = vpow.pop %v1186
        %v1188 = vmul.f32 %v1160, 1.442695
        %v1189 = vpow.pop %v1188
        %v1190 = vmul.f32 %v1161, 1.442695
        %v1191 = vpow.pop %v1190
        %v1192 = vmul.f32 %v1162, 1.442695
        %v1193 = vpow.pop %v1192
        %v1194 = vmul.f32 %v1163, 1.442695
        %v1195 = vpow.pop %v1194
        %v1196 = vsel %vm1099, %v1165, 0.0
        %1197 = vadd.xlane.f32.xlu0 %v1196
        %v1198 = vpop.xlane.xlu0 %1197
        %v1199 = vsel %vm1099, %v1167, 0.0
        %1200 = vadd.xlane.f32.xlu0 %v1199
        %v1201 = vpop.xlane.xlu0 %1200
        %v1202 = vsel %vm1099, %v1169, 0.0
        %1203 = vadd.xlane.f32.xlu0 %v1202
        %v1204 = vpop.xlane.xlu0 %1203
        %v1205 = vsel %vm1099, %v1171, 0.0
        %1206 = vadd.xlane.f32.xlu0 %v1205
        %v1207 = vpop.xlane.xlu0 %1206
        %v1208 = vsel %vm1099, %v1173, 0.0
        %1209 = vadd.xlane.f32.xlu0 %v1208
        %v1210 = vpop.xlane.xlu0 %1209
        %v1211 = vsel %vm1099, %v1175, 0.0
        %1212 = vadd.xlane.f32.xlu0 %v1211
        %v1213 = vpop.xlane.xlu0 %1212
        %v1214 = vsel %vm1099, %v1177, 0.0
        %1215 = vadd.xlane.f32.xlu0 %v1214
        %v1216 = vpop.xlane.xlu0 %1215
        %v1217 = vsel %vm1099, %v1179, 0.0
        %1218 = vadd.xlane.f32.xlu0 %v1217
        %v1219 = vpop.xlane.xlu0 %1218
        %v1220 = vsel %vm1099, %v1181, 0.0
        %1221 = vadd.xlane.f32.xlu0 %v1220
        %v1222 = vpop.xlane.xlu0 %1221
        %v1223 = vsel %vm1099, %v1183, 0.0
        %1224 = vadd.xlane.f32.xlu0 %v1223
        %v1225 = vpop.xlane.xlu0 %1224
        %v1226 = vsel %vm1099, %v1185, 0.0
        %1227 = vadd.xlane.f32.xlu0 %v1226
        %v1228 = vpop.xlane.xlu0 %1227
        %v1229 = vsel %vm1099, %v1187, 0.0
        %1230 = vadd.xlane.f32.xlu0 %v1229
        %v1231 = vpop.xlane.xlu0 %1230
        %v1232 = vsel %vm1099, %v1189, 0.0
        %1233 = vadd.xlane.f32.xlu0 %v1232
        %v1234 = vpop.xlane.xlu0 %1233
        %v1235 = vsel %vm1099, %v1191, 0.0
        %1236 = vadd.xlane.f32.xlu0 %v1235
        %v1237 = vpop.xlane.xlu0 %1236
        %v1238 = vsel %vm1099, %v1193, 0.0
        %1239 = vadd.xlane.f32.xlu0 %v1238
        %v1240 = vpop.xlane.xlu0 %1239
        %v1241 = vsel %vm1099, %v1195, 0.0
        %1242 = vadd.xlane.f32.xlu0 %v1241
        %v1243 = vpop.xlane.xlu0 %1242
        %v1244 = vrcp.pop %v1198
        %v1245 = vrcp.pop %v1201
        %v1246 = vrcp.pop %v1204
        %v1247 = vrcp.pop %v1207
        %v1248 = vrcp.pop %v1210
        %v1249 = vrcp.pop %v1213
        %v1250 = vrcp.pop %v1216
        %v1251 = vrcp.pop %v1219
        %v1252 = vrcp.pop %v1222
        %v1253 = vrcp.pop %v1225
        %v1254 = vrcp.pop %v1228
        %v1255 = vrcp.pop %v1231
        %v1256 = vrcp.pop %v1234
        %v1257 = vrcp.pop %v1237
        %v1258 = vrcp.pop %v1240
        %v1259 = vrcp.pop %v1243
        %v1260 = vmul.f32 %v1165, %v1244
        %v1261 = vmul.f32 %v1167, %v1245
        %v1262 = vmul.f32 %v1169, %v1246
        %v1263 = vmul.f32 %v1171, %v1247
        %v1264 = vmul.f32 %v1173, %v1248
        %v1265 = vmul.f32 %v1175, %v1249
        %v1266 = vmul.f32 %v1177, %v1250
        %v1267 = vmul.f32 %v1179, %v1251
        %v1268 = vmul.f32 %v1181, %v1252
        %v1269 = vmul.f32 %v1183, %v1253
        %v1270 = vmul.f32 %v1185, %v1254
        %v1271 = vmul.f32 %v1187, %v1255
        %v1272 = vmul.f32 %v1189, %v1256
        %v1273 = vmul.f32 %v1191, %v1257
        %v1274 = vmul.f32 %v1193, %v1258
        %v1275 = vmul.f32 %v1195, %v1259
        %v1276 = vpack.c.bf16 %v1260, %v1260
        %v1277 = vpack.c.bf16 %v1261, %v1261
        %v1278 = vpack.c.bf16 %v1262, %v1262
        %v1279 = vpack.c.bf16 %v1263, %v1263
        %v1280 = vpack.c.bf16 %v1264, %v1264
        %v1281 = vpack.c.bf16 %v1265, %v1265
        %v1282 = vpack.c.bf16 %v1266, %v1266
        %v1283 = vpack.c.bf16 %v1267, %v1267
        %v1284 = vpack.c.bf16 %v1268, %v1268
        %v1285 = vpack.c.bf16 %v1269, %v1269
        %v1286 = vpack.c.bf16 %v1270, %v1270
        %v1287 = vpack.c.bf16 %v1271, %v1271
        %v1288 = vpack.c.bf16 %v1272, %v1272
        %v1289 = vpack.c.bf16 %v1273, %v1273
        %v1290 = vpack.c.bf16 %v1274, %v1274
        %v1291 = vpack.c.bf16 %v1275, %v1275
        %v1300 = vunpack.c.l.b16 %v1276
        %v1301 = vunpack.c.l.b16 %v1277
        %v1302 = vunpack.c.l.b16 %v1278
        %v1303 = vunpack.c.l.b16 %v1279
        %v1304 = vunpack.c.l.b16 %v1280
        %v1305 = vunpack.c.l.b16 %v1281
        %v1306 = vunpack.c.l.b16 %v1282
        %v1307 = vunpack.c.l.b16 %v1283
        %v1308 = vpack.c.b16 %v1301, %v1300
        %v1309 = vpack.c.b16 %v1303, %v1302
        %v1310 = vpack.c.b16 %v1305, %v1304
        %v1311 = vpack.c.b16 %v1307, %v1306
        %1312 = vrot.lane.b32.xlu0 %v952, 64
        %v1313 = vpop.permute.xlu0 %1312
        %1314 = vrot.lane.b32.xlu0 %v953, 64
        %v1315 = vpop.permute.xlu0 %1314
        %1316 = vrot.lane.b32.xlu0 %v954, 64
        %v1317 = vpop.permute.xlu0 %1316
        %1318 = vrot.lane.b32.xlu0 %v955, 64
        %v1319 = vpop.permute.xlu0 %1318
        %v1325 = vsel %vm1099, %v1308, 0
        %v1328 = vsel %vm1099, %v1309, 0
        %v1331 = vsel %vm1099, %v1310, 0
        %v1334 = vsel %vm1099, %v1311, 0
        %1336 = vmatpush.bf16.msra.mxu0 0
        %1337 = vmatpush.bf16.msra.mxu0 0
        %1338 = vmatpush.bf16.msra.mxu0 0
        %1339 = vmatpush.bf16.msra.mxu0 0
        %1340 = vmatpush.bf16.msra.mxu0 %v1319
        %1341 = vmatpush.bf16.msra.mxu0 %v1317
        %1342 = vmatpush.bf16.msra.mxu0 %v1315
        %1343 = vmatpush.bf16.msra.mxu0 %v1313
        %1344 = vmatmul.bf16.gmra.mxu0 %v1325
        %v1345 = vpop.f32.mrf.mxu0
        %v1346 = vadd.f32 0.0, %v1345
        %v1347 = vpop.f32.mrf.mxu0
        %v1348 = vadd.f32 0.0, %v1347
        %1349 = vmatmul.bf16.gmra.mxu0 %v1328
        %v1350 = vpop.f32.mrf.mxu0
        %v1351 = vadd.f32 0.0, %v1350
        %v1352 = vpop.f32.mrf.mxu0
        %v1353 = vadd.f32 0.0, %v1352
        %1354 = vmatmul.bf16.gmra.mxu0 %v1331
        %v1355 = vpop.f32.mrf.mxu0
        %v1356 = vadd.f32 0.0, %v1355
        %v1357 = vpop.f32.mrf.mxu0
        %v1358 = vadd.f32 0.0, %v1357
        %1359 = vmatmul.bf16.gmra.mxu0 %v1334
        %v1360 = vpop.f32.mrf.mxu0
        %v1361 = vadd.f32 0.0, %v1360
        %v1362 = vpop.f32.mrf.mxu0
        %v1363 = vadd.f32 0.0, %v1362
        %1364 = vdwg.mxu0
        %v1373 = vunpack.c.l.b16 %v1284
        %v1374 = vunpack.c.l.b16 %v1285
        %v1375 = vunpack.c.l.b16 %v1286
        %v1376 = vunpack.c.l.b16 %v1287
        %v1377 = vunpack.c.l.b16 %v1288
        %v1378 = vunpack.c.l.b16 %v1289
        %v1379 = vunpack.c.l.b16 %v1290
        %v1380 = vunpack.c.l.b16 %v1291
        %v1381 = vpack.c.b16 %v1374, %v1373
        %v1382 = vpack.c.b16 %v1376, %v1375
        %v1383 = vpack.c.b16 %v1378, %v1377
        %v1384 = vpack.c.b16 %v1380, %v1379
        %1385 = vrot.lane.b32.xlu0 %v1034, 64
        %v1386 = vpop.permute.xlu0 %1385
        %1387 = vrot.lane.b32.xlu0 %v1035, 64
        %v1388 = vpop.permute.xlu0 %1387
        %1389 = vrot.lane.b32.xlu0 %v1036, 64
        %v1390 = vpop.permute.xlu0 %1389
        %1391 = vrot.lane.b32.xlu0 %v1037, 64
        %v1392 = vpop.permute.xlu0 %1391
        %v1398 = vsel %vm1099, %v1381, 0
        %v1401 = vsel %vm1099, %v1382, 0
        %v1404 = vsel %vm1099, %v1383, 0
        %v1407 = vsel %vm1099, %v1384, 0
        %1409 = vmatpush.bf16.msra.mxu0 0
        %1410 = vmatpush.bf16.msra.mxu0 0
        %1411 = vmatpush.bf16.msra.mxu0 0
        %1412 = vmatpush.bf16.msra.mxu0 0
        %1413 = vmatpush.bf16.msra.mxu0 %v1392
        %1414 = vmatpush.bf16.msra.mxu0 %v1390
        %1415 = vmatpush.bf16.msra.mxu0 %v1388
        %1416 = vmatpush.bf16.msra.mxu0 %v1386
        %1417 = vmatmul.bf16.gmra.mxu0 %v1398
        %v1418 = vpop.f32.mrf.mxu0
        %v1419 = vadd.f32 0.0, %v1418
        %v1420 = vpop.f32.mrf.mxu0
        %v1421 = vadd.f32 0.0, %v1420
        %1422 = vmatmul.bf16.gmra.mxu0 %v1401
        %v1423 = vpop.f32.mrf.mxu0
        %v1424 = vadd.f32 0.0, %v1423
        %v1425 = vpop.f32.mrf.mxu0
        %v1426 = vadd.f32 0.0, %v1425
        %1427 = vmatmul.bf16.gmra.mxu0 %v1404
        %v1428 = vpop.f32.mrf.mxu0
        %v1429 = vadd.f32 0.0, %v1428
        %v1430 = vpop.f32.mrf.mxu0
        %v1431 = vadd.f32 0.0, %v1430
        %1432 = vmatmul.bf16.gmra.mxu0 %v1407
        %v1433 = vpop.f32.mrf.mxu0
        %v1434 = vadd.f32 0.0, %v1433
        %v1435 = vpop.f32.mrf.mxu0
        %v1436 = vadd.f32 0.0, %v1435
        %1437 = vdwg.mxu0
        %v1438 = vpack.c.bf16 %v1346, %v1346
        %v1439 = vpack.c.bf16 %v1348, %v1348
        %v1440 = vpack.c.bf16 %v1351, %v1351
        %v1441 = vpack.c.bf16 %v1353, %v1353
        %v1442 = vpack.c.bf16 %v1356, %v1356
        %v1443 = vpack.c.bf16 %v1358, %v1358
        %v1444 = vpack.c.bf16 %v1361, %v1361
        %v1445 = vpack.c.bf16 %v1363, %v1363
        %v1446 = vpack.c.bf16 %v1419, %v1419
        %v1447 = vpack.c.bf16 %v1421, %v1421
        %v1448 = vpack.c.bf16 %v1424, %v1424
        %v1449 = vpack.c.bf16 %v1426, %v1426
        %v1450 = vpack.c.bf16 %v1429, %v1429
        %v1451 = vpack.c.bf16 %v1431, %v1431
        %v1452 = vpack.c.bf16 %v1434, %v1434
        %v1453 = vpack.c.bf16 %v1436, %v1436
        %vm1454 = vcmask 60416
        %1455 = vst.msk [vmem:[#allocation2] sm:$0xf] %vm1454, %v1438
        %1456 = vst.msk [vmem:[#allocation2 + $0x4] sm:$0xf] %vm1454, %v1439
        %1457 = vst.msk [vmem:[#allocation2 + $0x8] sm:$0xf] %vm1454, %v1440
        %1458 = vst.msk [vmem:[#allocation2 + $0xc] sm:$0xf] %vm1454, %v1441
        %1459 = vst.msk [vmem:[#allocation2 + $0x10] sm:$0xf] %vm1454, %v1442
        %1460 = vst.msk [vmem:[#allocation2 + $0x14] sm:$0xf] %vm1454, %v1443
        %1461 = vst.msk [vmem:[#allocation2 + $0x18] sm:$0xf] %vm1454, %v1444
        %1462 = vst.msk [vmem:[#allocation2 + $0x1c] sm:$0xf] %vm1454, %v1445
        %1463 = vst.msk [vmem:[#allocation2 + $0x20] sm:$0xf] %vm1454, %v1446
        %1464 = vst.msk [vmem:[#allocation2 + $0x24] sm:$0xf] %vm1454, %v1447
        %1465 = vst.msk [vmem:[#allocation2 + $0x28] sm:$0xf] %vm1454, %v1448
        %1466 = vst.msk [vmem:[#allocation2 + $0x2c] sm:$0xf] %vm1454, %v1449
        %1467 = vst.msk [vmem:[#allocation2 + $0x30] sm:$0xf] %vm1454, %v1450
        %1468 = vst.msk [vmem:[#allocation2 + $0x34] sm:$0xf] %vm1454, %v1451
        %1469 = vst.msk [vmem:[#allocation2 + $0x38] sm:$0xf] %vm1454, %v1452
        %1470 = vst.msk [vmem:[#allocation2 + $0x3c] sm:$0xf] %vm1454, %v1453
        %1471 = vrot.lane.b32.xlu0 %v952, 120
        %v1472 = vpop.permute.xlu0 %1471
        %1473 = vrot.lane.b32.xlu0 %v953, 120
        %v1474 = vpop.permute.xlu0 %1473
        %1475 = vrot.lane.b32.xlu0 %v954, 120
        %v1476 = vpop.permute.xlu0 %1475
        %1477 = vrot.lane.b32.xlu0 %v955, 120
        %v1478 = vpop.permute.xlu0 %1477
        %1479 = vrot.lane.b32.xlu0 %v952, 88
        %v1480 = vpop.permute.xlu0 %1479
        %1481 = vrot.lane.b32.xlu0 %v953, 88
        %v1482 = vpop.permute.xlu0 %1481
        %1483 = vrot.lane.b32.xlu0 %v954, 88
        %v1484 = vpop.permute.xlu0 %1483
        %1485 = vrot.lane.b32.xlu0 %v955, 88
        %v1486 = vpop.permute.xlu0 %1485
        %v1488 = vsel %vm964, %v1472, 0
        %v1491 = vsel %vm964, %v1474, 0
        %v1494 = vsel %vm964, %v1476, 0
        %v1497 = vsel %vm964, %v1478, 0
        %v1500 = vsel %vm964, %v1480, 0
        %v1503 = vsel %vm964, %v1482, 0
        %v1506 = vsel %vm964, %v1484, 0
        %v1509 = vsel %vm964, %v1486, 0
        %1511 = vmatpush.bf16.xpose.msra.mxu0 0
        %1512 = vmatpush.bf16.xpose.msra.mxu0 0
        %1513 = vmatpush.bf16.xpose.msra.mxu0 0
        %1514 = vmatpush.bf16.xpose.msra.mxu0 0
        %1515 = vmatpush.bf16.xpose.msra.mxu0 %v1509
        %1516 = vmatpush.bf16.xpose.msra.mxu0 %v1506
        %1517 = vmatpush.bf16.xpose.msra.mxu0 %v1503
        %1518 = vmatpush.bf16.xpose.msra.mxu0 %v1500
        %1519 = vmatmul.bf16.gmra.mxu0 %v1488
        %v1520 = vpop.f32.mrf.mxu0
        %v1521 = vadd.f32 0.0, %v1520
        %v1522 = vpop.f32.mrf.mxu0
        %v1523 = vadd.f32 0.0, %v1522
        %1524 = vmatmul.bf16.gmra.mxu0 %v1491
        %v1525 = vpop.f32.mrf.mxu0
        %v1526 = vadd.f32 0.0, %v1525
        %v1527 = vpop.f32.mrf.mxu0
        %v1528 = vadd.f32 0.0, %v1527
        %1529 = vmatmul.bf16.gmra.mxu0 %v1494
        %v1530 = vpop.f32.mrf.mxu0
        %v1531 = vadd.f32 0.0, %v1530
        %v1532 = vpop.f32.mrf.mxu0
        %v1533 = vadd.f32 0.0, %v1532
        %1534 = vmatmul.bf16.gmra.mxu0 %v1497
        %v1535 = vpop.f32.mrf.mxu0
        %v1536 = vadd.f32 0.0, %v1535
        %v1537 = vpop.f32.mrf.mxu0
        %v1538 = vadd.f32 0.0, %v1537
        %1539 = vdwg.mxu0
        %1540 = vrot.lane.b32.xlu0 %v1034, 120
        %v1541 = vpop.permute.xlu0 %1540
        %1542 = vrot.lane.b32.xlu0 %v1035, 120
        %v1543 = vpop.permute.xlu0 %1542
        %1544 = vrot.lane.b32.xlu0 %v1036, 120
        %v1545 = vpop.permute.xlu0 %1544
        %1546 = vrot.lane.b32.xlu0 %v1037, 120
        %v1547 = vpop.permute.xlu0 %1546
        %1548 = vrot.lane.b32.xlu0 %v1034, 88
        %v1549 = vpop.permute.xlu0 %1548
        %1550 = vrot.lane.b32.xlu0 %v1035, 88
        %v1551 = vpop.permute.xlu0 %1550
        %1552 = vrot.lane.b32.xlu0 %v1036, 88
        %v1553 = vpop.permute.xlu0 %1552
        %1554 = vrot.lane.b32.xlu0 %v1037, 88
        %v1555 = vpop.permute.xlu0 %1554
        %v1557 = vsel %vm964, %v1541, 0
        %v1560 = vsel %vm964, %v1543, 0
        %v1563 = vsel %vm964, %v1545, 0
        %v1566 = vsel %vm964, %v1547, 0
        %v1569 = vsel %vm964, %v1549, 0
        %v1572 = vsel %vm964, %v1551, 0
        %v1575 = vsel %vm964, %v1553, 0
        %v1578 = vsel %vm964, %v1555, 0
        %1580 = vmatpush.bf16.xpose.msra.mxu0 0
        %1581 = vmatpush.bf16.xpose.msra.mxu0 0
        %1582 = vmatpush.bf16.xpose.msra.mxu0 0
        %1583 = vmatpush.bf16.xpose.msra.mxu0 0
        %1584 = vmatpush.bf16.xpose.msra.mxu0 %v1578
        %1585 = vmatpush.bf16.xpose.msra.mxu0 %v1575
        %1586 = vmatpush.bf16.xpose.msra.mxu0 %v1572
        %1587 = vmatpush.bf16.xpose.msra.mxu0 %v1569
        %1588 = vmatmul.bf16.gmra.mxu0 %v1557
        %v1589 = vpop.f32.mrf.mxu0
        %v1590 = vadd.f32 0.0, %v1589
        %v1591 = vpop.f32.mrf.mxu0
        %v1592 = vadd.f32 0.0, %v1591
        %1593 = vmatmul.bf16.gmra.mxu0 %v1560
        %v1594 = vpop.f32.mrf.mxu0
        %v1595 = vadd.f32 0.0, %v1594
        %v1596 = vpop.f32.mrf.mxu0
        %v1597 = vadd.f32 0.0, %v1596
        %1598 = vmatmul.bf16.gmra.mxu0 %v1563
        %v1599 = vpop.f32.mrf.mxu0
        %v1600 = vadd.f32 0.0, %v1599
        %v1601 = vpop.f32.mrf.mxu0
        %v1602 = vadd.f32 0.0, %v1601
        %1603 = vmatmul.bf16.gmra.mxu0 %v1566
        %v1604 = vpop.f32.mrf.mxu0
        %v1605 = vadd.f32 0.0, %v1604
        %v1606 = vpop.f32.mrf.mxu0
        %v1607 = vadd.f32 0.0, %v1606
        %1608 = vdwg.mxu0
        %v1609 = vsel %vm1099, %v1521, -inf
        %1610 = vmax.xlane.f32.xlu0 %v1609
        %v1611 = vpop.xlane.xlu0 %1610
        %v1612 = vsel %vm1099, %v1523, -inf
        %1613 = vmax.xlane.f32.xlu0 %v1612
        %v1614 = vpop.xlane.xlu0 %1613
        %v1615 = vsel %vm1099, %v1526, -inf
        %1616 = vmax.xlane.f32.xlu0 %v1615
        %v1617 = vpop.xlane.xlu0 %1616
        %v1618 = vsel %vm1099, %v1528, -inf
        %1619 = vmax.xlane.f32.xlu0 %v1618
        %v1620 = vpop.xlane.xlu0 %1619
        %v1621 = vsel %vm1099, %v1531, -inf
        %1622 = vmax.xlane.f32.xlu0 %v1621
        %v1623 = vpop.xlane.xlu0 %1622
        %v1624 = vsel %vm1099, %v1533, -inf
        %1625 = vmax.xlane.f32.xlu0 %v1624
        %v1626 = vpop.xlane.xlu0 %1625
        %v1627 = vsel %vm1099, %v1536, -inf
        %1628 = vmax.xlane.f32.xlu0 %v1627
        %v1629 = vpop.xlane.xlu0 %1628
        %v1630 = vsel %vm1099, %v1538, -inf
        %1631 = vmax.xlane.f32.xlu0 %v1630
        %v1632 = vpop.xlane.xlu0 %1631
        %v1633 = vsel %vm1099, %v1590, -inf
        %1634 = vmax.xlane.f32.xlu0 %v1633
        %v1635 = vpop.xlane.xlu0 %1634
        %v1636 = vsel %vm1099, %v1592, -inf
        %1637 = vmax.xlane.f32.xlu0 %v1636
        %v1638 = vpop.xlane.xlu0 %1637
        %v1639 = vsel %vm1099, %v1595, -inf
        %1640 = vmax.xlane.f32.xlu0 %v1639
        %v1641 = vpop.xlane.xlu0 %1640
        %v1642 = vsel %vm1099, %v1597, -inf
        %1643 = vmax.xlane.f32.xlu0 %v1642
        %v1644 = vpop.xlane.xlu0 %1643
        %v1645 = vsel %vm1099, %v1600, -inf
        %1646 = vmax.xlane.f32.xlu0 %v1645
        %v1647 = vpop.xlane.xlu0 %1646
        %v1648 = vsel %vm1099, %v1602, -inf
        %1649 = vmax.xlane.f32.xlu0 %v1648
        %v1650 = vpop.xlane.xlu0 %1649
        %v1651 = vsel %vm1099, %v1605, -inf
        %1652 = vmax.xlane.f32.xlu0 %v1651
        %v1653 = vpop.xlane.xlu0 %1652
        %v1654 = vsel %vm1099, %v1607, -inf
        %1655 = vmax.xlane.f32.xlu0 %v1654
        %v1656 = vpop.xlane.xlu0 %1655
        %v1657 = vsub.f32 %v1521, %v1611
        %v1658 = vsub.f32 %v1523, %v1614
        %v1659 = vsub.f32 %v1526, %v1617
        %v1660 = vsub.f32 %v1528, %v1620
        %v1661 = vsub.f32 %v1531, %v1623
        %v1662 = vsub.f32 %v1533, %v1626
        %v1663 = vsub.f32 %v1536, %v1629
        %v1664 = vsub.f32 %v1538, %v1632
        %v1665 = vsub.f32 %v1590, %v1635
        %v1666 = vsub.f32 %v1592, %v1638
        %v1667 = vsub.f32 %v1595, %v1641
        %v1668 = vsub.f32 %v1597, %v1644
        %v1669 = vsub.f32 %v1600, %v1647
        %v1670 = vsub.f32 %v1602, %v1650
        %v1671 = vsub.f32 %v1605, %v1653
        %v1672 = vsub.f32 %v1607, %v1656
        %v1673 = vmul.f32 %v1657, 1.442695
        %v1674 = vpow.pop %v1673
        %v1675 = vmul.f32 %v1658, 1.442695
        %v1676 = vpow.pop %v1675
        %v1677 = vmul.f32 %v1659, 1.442695
        %v1678 = vpow.pop %v1677
        %v1679 = vmul.f32 %v1660, 1.442695
        %v1680 = vpow.pop %v1679
        %v1681 = vmul.f32 %v1661, 1.442695
        %v1682 = vpow.pop %v1681
        %v1683 = vmul.f32 %v1662, 1.442695
        %v1684 = vpow.pop %v1683
        %v1685 = vmul.f32 %v1663, 1.442695
        %v1686 = vpow.pop %v1685
        %v1687 = vmul.f32 %v1664, 1.442695
        %v1688 = vpow.pop %v1687
        %v1689 = vmul.f32 %v1665, 1.442695
        %v1690 = vpow.pop %v1689
        %v1691 = vmul.f32 %v1666, 1.442695
        %v1692 = vpow.pop %v1691
        %v1693 = vmul.f32 %v1667, 1.442695
        %v1694 = vpow.pop %v1693
        %v1695 = vmul.f32 %v1668, 1.442695
        %v1696 = vpow.pop %v1695
        %v1697 = vmul.f32 %v1669, 1.442695
        %v1698 = vpow.pop %v1697
        %v1699 = vmul.f32 %v1670, 1.442695
        %v1700 = vpow.pop %v1699
        %v1701 = vmul.f32 %v1671, 1.442695
        %v1702 = vpow.pop %v1701
        %v1703 = vmul.f32 %v1672, 1.442695
        %v1704 = vpow.pop %v1703
        %v1705 = vsel %vm1099, %v1674, 0.0
        %1706 = vadd.xlane.f32.xlu0 %v1705
        %v1707 = vpop.xlane.xlu0 %1706
        %v1708 = vsel %vm1099, %v1676, 0.0
        %1709 = vadd.xlane.f32.xlu0 %v1708
        %v1710 = vpop.xlane.xlu0 %1709
        %v1711 = vsel %vm1099, %v1678, 0.0
        %1712 = vadd.xlane.f32.xlu0 %v1711
        %v1713 = vpop.xlane.xlu0 %1712
        %v1714 = vsel %vm1099, %v1680, 0.0
        %1715 = vadd.xlane.f32.xlu0 %v1714
        %v1716 = vpop.xlane.xlu0 %1715
        %v1717 = vsel %vm1099, %v1682, 0.0
        %1718 = vadd.xlane.f32.xlu0 %v1717
        %v1719 = vpop.xlane.xlu0 %1718
        %v1720 = vsel %vm1099, %v1684, 0.0
        %1721 = vadd.xlane.f32.xlu0 %v1720
        %v1722 = vpop.xlane.xlu0 %1721
        %v1723 = vsel %vm1099, %v1686, 0.0
        %1724 = vadd.xlane.f32.xlu0 %v1723
        %v1725 = vpop.xlane.xlu0 %1724
        %v1726 = vsel %vm1099, %v1688, 0.0
        %1727 = vadd.xlane.f32.xlu0 %v1726
        %v1728 = vpop.xlane.xlu0 %1727
        %v1729 = vsel %vm1099, %v1690, 0.0
        %1730 = vadd.xlane.f32.xlu0 %v1729
        %v1731 = vpop.xlane.xlu0 %1730
        %v1732 = vsel %vm1099, %v1692, 0.0
        %1733 = vadd.xlane.f32.xlu0 %v1732
        %v1734 = vpop.xlane.xlu0 %1733
        %v1735 = vsel %vm1099, %v1694, 0.0
        %1736 = vadd.xlane.f32.xlu0 %v1735
        %v1737 = vpop.xlane.xlu0 %1736
        %v1738 = vsel %vm1099, %v1696, 0.0
        %1739 = vadd.xlane.f32.xlu0 %v1738
        %v1740 = vpop.xlane.xlu0 %1739
        %v1741 = vsel %vm1099, %v1698, 0.0
        %1742 = vadd.xlane.f32.xlu0 %v1741
        %v1743 = vpop.xlane.xlu0 %1742
        %v1744 = vsel %vm1099, %v1700, 0.0
        %1745 = vadd.xlane.f32.xlu0 %v1744
        %v1746 = vpop.xlane.xlu0 %1745
        %v1747 = vsel %vm1099, %v1702, 0.0
        %1748 = vadd.xlane.f32.xlu0 %v1747
        %v1749 = vpop.xlane.xlu0 %1748
        %v1750 = vsel %vm1099, %v1704, 0.0
        %1751 = vadd.xlane.f32.xlu0 %v1750
        %v1752 = vpop.xlane.xlu0 %1751
        %v1753 = vrcp.pop %v1707
        %v1754 = vrcp.pop %v1710
        %v1755 = vrcp.pop %v1713
        %v1756 = vrcp.pop %v1716
        %v1757 = vrcp.pop %v1719
        %v1758 = vrcp.pop %v1722
        %v1759 = vrcp.pop %v1725
        %v1760 = vrcp.pop %v1728
        %v1761 = vrcp.pop %v1731
        %v1762 = vrcp.pop %v1734
        %v1763 = vrcp.pop %v1737
        %v1764 = vrcp.pop %v1740
        %v1765 = vrcp.pop %v1743
        %v1766 = vrcp.pop %v1746
        %v1767 = vrcp.pop %v1749
        %v1768 = vrcp.pop %v1752
        %v1769 = vmul.f32 %v1674, %v1753
        %v1770 = vmul.f32 %v1676, %v1754
        %v1771 = vmul.f32 %v1678, %v1755
        %v1772 = vmul.f32 %v1680, %v1756
        %v1773 = vmul.f32 %v1682, %v1757
        %v1774 = vmul.f32 %v1684, %v1758
        %v1775 = vmul.f32 %v1686, %v1759
        %v1776 = vmul.f32 %v1688, %v1760
        %v1777 = vmul.f32 %v1690, %v1761
        %v1778 = vmul.f32 %v1692, %v1762
        %v1779 = vmul.f32 %v1694, %v1763
        %v1780 = vmul.f32 %v1696, %v1764
        %v1781 = vmul.f32 %v1698, %v1765
        %v1782 = vmul.f32 %v1700, %v1766
        %v1783 = vmul.f32 %v1702, %v1767
        %v1784 = vmul.f32 %v1704, %v1768
        %v1785 = vpack.c.bf16 %v1769, %v1769
        %v1786 = vpack.c.bf16 %v1770, %v1770
        %v1787 = vpack.c.bf16 %v1771, %v1771
        %v1788 = vpack.c.bf16 %v1772, %v1772
        %v1789 = vpack.c.bf16 %v1773, %v1773
        %v1790 = vpack.c.bf16 %v1774, %v1774
        %v1791 = vpack.c.bf16 %v1775, %v1775
        %v1792 = vpack.c.bf16 %v1776, %v1776
        %v1793 = vpack.c.bf16 %v1777, %v1777
        %v1794 = vpack.c.bf16 %v1778, %v1778
        %v1795 = vpack.c.bf16 %v1779, %v1779
        %v1796 = vpack.c.bf16 %v1780, %v1780
        %v1797 = vpack.c.bf16 %v1781, %v1781
        %v1798 = vpack.c.bf16 %v1782, %v1782
        %v1799 = vpack.c.bf16 %v1783, %v1783
        %v1800 = vpack.c.bf16 %v1784, %v1784
        %v1809 = vunpack.c.l.b16 %v1785
        %v1810 = vunpack.c.l.b16 %v1786
        %v1811 = vunpack.c.l.b16 %v1787
        %v1812 = vunpack.c.l.b16 %v1788
        %v1813 = vunpack.c.l.b16 %v1789
        %v1814 = vunpack.c.l.b16 %v1790
        %v1815 = vunpack.c.l.b16 %v1791
        %v1816 = vunpack.c.l.b16 %v1792
        %v1817 = vpack.c.b16 %v1810, %v1809
        %v1818 = vpack.c.b16 %v1812, %v1811
        %v1819 = vpack.c.b16 %v1814, %v1813
        %v1820 = vpack.c.b16 %v1816, %v1815
        %1821 = vrot.lane.b32.xlu0 %v952, 56
        %v1822 = vpop.permute.xlu0 %1821
        %1823 = vrot.lane.b32.xlu0 %v953, 56
        %v1824 = vpop.permute.xlu0 %1823
        %1825 = vrot.lane.b32.xlu0 %v954, 56
        %v1826 = vpop.permute.xlu0 %1825
        %1827 = vrot.lane.b32.xlu0 %v955, 56
        %v1828 = vpop.permute.xlu0 %1827
        %v1834 = vsel %vm1099, %v1817, 0
        %v1837 = vsel %vm1099, %v1818, 0
        %v1840 = vsel %vm1099, %v1819, 0
        %v1843 = vsel %vm1099, %v1820, 0
        %1845 = vmatpush.bf16.msra.mxu0 0
        %1846 = vmatpush.bf16.msra.mxu0 0
        %1847 = vmatpush.bf16.msra.mxu0 0
        %1848 = vmatpush.bf16.msra.mxu0 0
        %1849 = vmatpush.bf16.msra.mxu0 %v1828
        %1850 = vmatpush.bf16.msra.mxu0 %v1826
        %1851 = vmatpush.bf16.msra.mxu0 %v1824
        %1852 = vmatpush.bf16.msra.mxu0 %v1822
        %1853 = vmatmul.bf16.gmra.mxu0 %v1834
        %v1854 = vpop.f32.mrf.mxu0
        %v1855 = vadd.f32 0.0, %v1854
        %v1856 = vpop.f32.mrf.mxu0
        %v1857 = vadd.f32 0.0, %v1856
        %1858 = vmatmul.bf16.gmra.mxu0 %v1837
        %v1859 = vpop.f32.mrf.mxu0
        %v1860 = vadd.f32 0.0, %v1859
        %v1861 = vpop.f32.mrf.mxu0
        %v1862 = vadd.f32 0.0, %v1861
        %1863 = vmatmul.bf16.gmra.mxu0 %v1840
        %v1864 = vpop.f32.mrf.mxu0
        %v1865 = vadd.f32 0.0, %v1864
        %v1866 = vpop.f32.mrf.mxu0
        %v1867 = vadd.f32 0.0, %v1866
        %1868 = vmatmul.bf16.gmra.mxu0 %v1843
        %v1869 = vpop.f32.mrf.mxu0
        %v1870 = vadd.f32 0.0, %v1869
        %v1871 = vpop.f32.mrf.mxu0
        %v1872 = vadd.f32 0.0, %v1871
        %1873 = vdwg.mxu0
        %v1882 = vunpack.c.l.b16 %v1793
        %v1883 = vunpack.c.l.b16 %v1794
        %v1884 = vunpack.c.l.b16 %v1795
        %v1885 = vunpack.c.l.b16 %v1796
        %v1886 = vunpack.c.l.b16 %v1797
        %v1887 = vunpack.c.l.b16 %v1798
        %v1888 = vunpack.c.l.b16 %v1799
        %v1889 = vunpack.c.l.b16 %v1800
        %v1890 = vpack.c.b16 %v1883, %v1882
        %v1891 = vpack.c.b16 %v1885, %v1884
        %v1892 = vpack.c.b16 %v1887, %v1886
        %v1893 = vpack.c.b16 %v1889, %v1888
        %1894 = vrot.lane.b32.xlu0 %v1034, 56
        %v1895 = vpop.permute.xlu0 %1894
        %1896 = vrot.lane.b32.xlu0 %v1035, 56
        %v1897 = vpop.permute.xlu0 %1896
        %1898 = vrot.lane.b32.xlu0 %v1036, 56
        %v1899 = vpop.permute.xlu0 %1898
        %1900 = vrot.lane.b32.xlu0 %v1037, 56
        %v1901 = vpop.permute.xlu0 %1900
        %v1907 = vsel %vm1099, %v1890, 0
        %v1910 = vsel %vm1099, %v1891, 0
        %v1913 = vsel %vm1099, %v1892, 0
        %v1916 = vsel %vm1099, %v1893, 0
        %1918 = vmatpush.bf16.msra.mxu0 0
        %1919 = vmatpush.bf16.msra.mxu0 0
        %1920 = vmatpush.bf16.msra.mxu0 0
        %1921 = vmatpush.bf16.msra.mxu0 0
        %1922 = vmatpush.bf16.msra.mxu0 %v1901
        %1923 = vmatpush.bf16.msra.mxu0 %v1899
        %1924 = vmatpush.bf16.msra.mxu0 %v1897
        %1925 = vmatpush.bf16.msra.mxu0 %v1895
        %1926 = vmatmul.bf16.gmra.mxu0 %v1907
        %v1927 = vpop.f32.mrf.mxu0
        %v1928 = vadd.f32 0.0, %v1927
        %v1929 = vpop.f32.mrf.mxu0
        %v1930 = vadd.f32 0.0, %v1929
        %1931 = vmatmul.bf16.gmra.mxu0 %v1910
        %v1932 = vpop.f32.mrf.mxu0
        %v1933 = vadd.f32 0.0, %v1932
        %v1934 = vpop.f32.mrf.mxu0
        %v1935 = vadd.f32 0.0, %v1934
        %1936 = vmatmul.bf16.gmra.mxu0 %v1913
        %v1937 = vpop.f32.mrf.mxu0
        %v1938 = vadd.f32 0.0, %v1937
        %v1939 = vpop.f32.mrf.mxu0
        %v1940 = vadd.f32 0.0, %v1939
        %1941 = vmatmul.bf16.gmra.mxu0 %v1916
        %v1942 = vpop.f32.mrf.mxu0
        %v1943 = vadd.f32 0.0, %v1942
        %v1944 = vpop.f32.mrf.mxu0
        %v1945 = vadd.f32 0.0, %v1944
        %1946 = vdwg.mxu0
        %v1947 = vpack.c.bf16 %v1855, %v1855
        %v1948 = vpack.c.bf16 %v1857, %v1857
        %v1949 = vpack.c.bf16 %v1860, %v1860
        %v1950 = vpack.c.bf16 %v1862, %v1862
        %v1951 = vpack.c.bf16 %v1865, %v1865
        %v1952 = vpack.c.bf16 %v1867, %v1867
        %v1953 = vpack.c.bf16 %v1870, %v1870
        %v1954 = vpack.c.bf16 %v1872, %v1872
        %v1955 = vpack.c.bf16 %v1928, %v1928
        %v1956 = vpack.c.bf16 %v1930, %v1930
        %v1957 = vpack.c.bf16 %v1933, %v1933
        %v1958 = vpack.c.bf16 %v1935, %v1935
        %v1959 = vpack.c.bf16 %v1938, %v1938
        %v1960 = vpack.c.bf16 %v1940, %v1940
        %v1961 = vpack.c.bf16 %v1943, %v1943
        %v1962 = vpack.c.bf16 %v1945, %v1945
        %1979 = vrot.lane.b32.xlu0 %v1947, 8
        %v1980 = vpop.permute.xlu0 %1979
        %1981 = vrot.lane.b32.xlu0 %v1948, 8
        %v1982 = vpop.permute.xlu0 %1981
        %1983 = vrot.lane.b32.xlu0 %v1949, 8
        %v1984 = vpop.permute.xlu0 %1983
        %1985 = vrot.lane.b32.xlu0 %v1950, 8
        %v1986 = vpop.permute.xlu0 %1985
        %1987 = vrot.lane.b32.xlu0 %v1951, 8
        %v1988 = vpop.permute.xlu0 %1987
        %1989 = vrot.lane.b32.xlu0 %v1952, 8
        %v1990 = vpop.permute.xlu0 %1989
        %1991 = vrot.lane.b32.xlu0 %v1953, 8
        %v1992 = vpop.permute.xlu0 %1991
        %1993 = vrot.lane.b32.xlu0 %v1954, 8
        %v1994 = vpop.permute.xlu0 %1993
        %1995 = vrot.lane.b32.xlu0 %v1955, 8
        %v1996 = vpop.permute.xlu0 %1995
        %1997 = vrot.lane.b32.xlu0 %v1956, 8
        %v1998 = vpop.permute.xlu0 %1997
        %1999 = vrot.lane.b32.xlu0 %v1957, 8
        %v2000 = vpop.permute.xlu0 %1999
        %2001 = vrot.lane.b32.xlu0 %v1958, 8
        %v2002 = vpop.permute.xlu0 %2001
        %2003 = vrot.lane.b32.xlu0 %v1959, 8
        %v2004 = vpop.permute.xlu0 %2003
        %2005 = vrot.lane.b32.xlu0 %v1960, 8
        %v2006 = vpop.permute.xlu0 %2005
        %2007 = vrot.lane.b32.xlu0 %v1961, 8
        %v2008 = vpop.permute.xlu0 %2007
        %2009 = vrot.lane.b32.xlu0 %v1962, 8
        %v2010 = vpop.permute.xlu0 %2009
        %vm2027 = vcmask 126016
        %2028 = vst.msk [vmem:[#allocation2] sm:$0xf] %vm2027, %v1980
        %2029 = vst.msk [vmem:[#allocation2 + $0x4] sm:$0xf] %vm2027, %v1982
        %2030 = vst.msk [vmem:[#allocation2 + $0x8] sm:$0xf] %vm2027, %v1984
        %2031 = vst.msk [vmem:[#allocation2 + $0xc] sm:$0xf] %vm2027, %v1986
        %2032 = vst.msk [vmem:[#allocation2 + $0x10] sm:$0xf] %vm2027, %v1988
        %2033 = vst.msk [vmem:[#allocation2 + $0x14] sm:$0xf] %vm2027, %v1990
        %2034 = vst.msk [vmem:[#allocation2 + $0x18] sm:$0xf] %vm2027, %v1992
        %2035 = vst.msk [vmem:[#allocation2 + $0x1c] sm:$0xf] %vm2027, %v1994
        %2036 = vst.msk [vmem:[#allocation2 + $0x20] sm:$0xf] %vm2027, %v1996
        %2037 = vst.msk [vmem:[#allocation2 + $0x24] sm:$0xf] %vm2027, %v1998
        %2038 = vst.msk [vmem:[#allocation2 + $0x28] sm:$0xf] %vm2027, %v2000
        %2039 = vst.msk [vmem:[#allocation2 + $0x2c] sm:$0xf] %vm2027, %v2002
        %2040 = vst.msk [vmem:[#allocation2 + $0x30] sm:$0xf] %vm2027, %v2004
        %2041 = vst.msk [vmem:[#allocation2 + $0x34] sm:$0xf] %vm2027, %v2006
        %2042 = vst.msk [vmem:[#allocation2 + $0x38] sm:$0xf] %vm2027, %v2008
        %2043 = vst.msk [vmem:[#allocation2 + $0x3c] sm:$0xf] %vm2027, %v2010
        %2044 = vrot.lane.b32.xlu0 %v952, 112
        %v2045 = vpop.permute.xlu0 %2044
        %2046 = vrot.lane.b32.xlu0 %v953, 112
        %v2047 = vpop.permute.xlu0 %2046
        %2048 = vrot.lane.b32.xlu0 %v954, 112
        %v2049 = vpop.permute.xlu0 %2048
        %2050 = vrot.lane.b32.xlu0 %v955, 112
        %v2051 = vpop.permute.xlu0 %2050
        %2052 = vrot.lane.b32.xlu0 %v952, 80
        %v2053 = vpop.permute.xlu0 %2052
        %2054 = vrot.lane.b32.xlu0 %v953, 80
        %v2055 = vpop.permute.xlu0 %2054
        %2056 = vrot.lane.b32.xlu0 %v954, 80
        %v2057 = vpop.permute.xlu0 %2056
        %2058 = vrot.lane.b32.xlu0 %v955, 80
        %v2059 = vpop.permute.xlu0 %2058
        %v2061 = vsel %vm964, %v2045, 0
        %v2064 = vsel %vm964, %v2047, 0
        %v2067 = vsel %vm964, %v2049, 0
        %v2070 = vsel %vm964, %v2051, 0
        %v2073 = vsel %vm964, %v2053, 0
        %v2076 = vsel %vm964, %v2055, 0
        %v2079 = vsel %vm964, %v2057, 0
        %v2082 = vsel %vm964, %v2059, 0
        %2084 = vmatpush.bf16.xpose.msra.mxu0 0
        %2085 = vmatpush.bf16.xpose.msra.mxu0 0
        %2086 = vmatpush.bf16.xpose.msra.mxu0 0
        %2087 = vmatpush.bf16.xpose.msra.mxu0 0
        %2088 = vmatpush.bf16.xpose.msra.mxu0 %v2082
        %2089 = vmatpush.bf16.xpose.msra.mxu0 %v2079
        %2090 = vmatpush.bf16.xpose.msra.mxu0 %v2076
        %2091 = vmatpush.bf16.xpose.msra.mxu0 %v2073
        %2092 = vmatmul.bf16.gmra.mxu0 %v2061
        %v2093 = vpop.f32.mrf.mxu0
        %v2094 = vadd.f32 0.0, %v2093
        %v2095 = vpop.f32.mrf.mxu0
        %v2096 = vadd.f32 0.0, %v2095
        %2097 = vmatmul.bf16.gmra.mxu0 %v2064
        %v2098 = vpop.f32.mrf.mxu0
        %v2099 = vadd.f32 0.0, %v2098
        %v2100 = vpop.f32.mrf.mxu0
        %v2101 = vadd.f32 0.0, %v2100
        %2102 = vmatmul.bf16.gmra.mxu0 %v2067
        %v2103 = vpop.f32.mrf.mxu0
        %v2104 = vadd.f32 0.0, %v2103
        %v2105 = vpop.f32.mrf.mxu0
        %v2106 = vadd.f32 0.0, %v2105
        %2107 = vmatmul.bf16.gmra.mxu0 %v2070
        %v2108 = vpop.f32.mrf.mxu0
        %v2109 = vadd.f32 0.0, %v2108
        %v2110 = vpop.f32.mrf.mxu0
        %v2111 = vadd.f32 0.0, %v2110
        %2112 = vdwg.mxu0
        %2113 = vrot.lane.b32.xlu0 %v1034, 112
        %v2114 = vpop.permute.xlu0 %2113
        %2115 = vrot.lane.b32.xlu0 %v1035, 112
        %v2116 = vpop.permute.xlu0 %2115
        %2117 = vrot.lane.b32.xlu0 %v1036, 112
        %v2118 = vpop.permute.xlu0 %2117
        %2119 = vrot.lane.b32.xlu0 %v1037, 112
        %v2120 = vpop.permute.xlu0 %2119
        %2121 = vrot.lane.b32.xlu0 %v1034, 80
        %v2122 = vpop.permute.xlu0 %2121
        %2123 = vrot.lane.b32.xlu0 %v1035, 80
        %v2124 = vpop.permute.xlu0 %2123
        %2125 = vrot.lane.b32.xlu0 %v1036, 80
        %v2126 = vpop.permute.xlu0 %2125
        %2127 = vrot.lane.b32.xlu0 %v1037, 80
        %v2128 = vpop.permute.xlu0 %2127
        %v2130 = vsel %vm964, %v2114, 0
        %v2133 = vsel %vm964, %v2116, 0
        %v2136 = vsel %vm964, %v2118, 0
        %v2139 = vsel %vm964, %v2120, 0
        %v2142 = vsel %vm964, %v2122, 0
        %v2145 = vsel %vm964, %v2124, 0
        %v2148 = vsel %vm964, %v2126, 0
        %v2151 = vsel %vm964, %v2128, 0
        %2153 = vmatpush.bf16.xpose.msra.mxu0 0
        %2154 = vmatpush.bf16.xpose.msra.mxu0 0
        %2155 = vmatpush.bf16.xpose.msra.mxu0 0
        %2156 = vmatpush.bf16.xpose.msra.mxu0 0
        %2157 = vmatpush.bf16.xpose.msra.mxu0 %v2151
        %2158 = vmatpush.bf16.xpose.msra.mxu0 %v2148
        %2159 = vmatpush.bf16.xpose.msra.mxu0 %v2145
        %2160 = vmatpush.bf16.xpose.msra.mxu0 %v2142
        %2161 = vmatmul.bf16.gmra.mxu0 %v2130
        %v2162 = vpop.f32.mrf.mxu0
        %v2163 = vadd.f32 0.0, %v2162
        %v2164 = vpop.f32.mrf.mxu0
        %v2165 = vadd.f32 0.0, %v2164
        %2166 = vmatmul.bf16.gmra.mxu0 %v2133
        %v2167 = vpop.f32.mrf.mxu0
        %v2168 = vadd.f32 0.0, %v2167
        %v2169 = vpop.f32.mrf.mxu0
        %v2170 = vadd.f32 0.0, %v2169
        %2171 = vmatmul.bf16.gmra.mxu0 %v2136
        %v2172 = vpop.f32.mrf.mxu0
        %v2173 = vadd.f32 0.0, %v2172
        %v2174 = vpop.f32.mrf.mxu0
        %v2175 = vadd.f32 0.0, %v2174
        %2176 = vmatmul.bf16.gmra.mxu0 %v2139
        %v2177 = vpop.f32.mrf.mxu0
        %v2178 = vadd.f32 0.0, %v2177
        %v2179 = vpop.f32.mrf.mxu0
        %v2180 = vadd.f32 0.0, %v2179
        %2181 = vdwg.mxu0
        %v2182 = vsel %vm1099, %v2094, -inf
        %2183 = vmax.xlane.f32.xlu0 %v2182
        %v2184 = vpop.xlane.xlu0 %2183
        %v2185 = vsel %vm1099, %v2096, -inf
        %2186 = vmax.xlane.f32.xlu0 %v2185
        %v2187 = vpop.xlane.xlu0 %2186
        %v2188 = vsel %vm1099, %v2099, -inf
        %2189 = vmax.xlane.f32.xlu0 %v2188
        %v2190 = vpop.xlane.xlu0 %2189
        %v2191 = vsel %vm1099, %v2101, -inf
        %2192 = vmax.xlane.f32.xlu0 %v2191
        %v2193 = vpop.xlane.xlu0 %2192
        %v2194 = vsel %vm1099, %v2104, -inf
        %2195 = vmax.xlane.f32.xlu0 %v2194
        %v2196 = vpop.xlane.xlu0 %2195
        %v2197 = vsel %vm1099, %v2106, -inf
        %2198 = vmax.xlane.f32.xlu0 %v2197
        %v2199 = vpop.xlane.xlu0 %2198
        %v2200 = vsel %vm1099, %v2109, -inf
        %2201 = vmax.xlane.f32.xlu0 %v2200
        %v2202 = vpop.xlane.xlu0 %2201
        %v2203 = vsel %vm1099, %v2111, -inf
        %2204 = vmax.xlane.f32.xlu0 %v2203
        %v2205 = vpop.xlane.xlu0 %2204
        %v2206 = vsel %vm1099, %v2163, -inf
        %2207 = vmax.xlane.f32.xlu0 %v2206
        %v2208 = vpop.xlane.xlu0 %2207
        %v2209 = vsel %vm1099, %v2165, -inf
        %2210 = vmax.xlane.f32.xlu0 %v2209
        %v2211 = vpop.xlane.xlu0 %2210
        %v2212 = vsel %vm1099, %v2168, -inf
        %2213 = vmax.xlane.f32.xlu0 %v2212
        %v2214 = vpop.xlane.xlu0 %2213
        %v2215 = vsel %vm1099, %v2170, -inf
        %2216 = vmax.xlane.f32.xlu0 %v2215
        %v2217 = vpop.xlane.xlu0 %2216
        %v2218 = vsel %vm1099, %v2173, -inf
        %2219 = vmax.xlane.f32.xlu0 %v2218
        %v2220 = vpop.xlane.xlu0 %2219
        %v2221 = vsel %vm1099, %v2175, -inf
        %2222 = vmax.xlane.f32.xlu0 %v2221
        %v2223 = vpop.xlane.xlu0 %2222
        %v2224 = vsel %vm1099, %v2178, -inf
        %2225 = vmax.xlane.f32.xlu0 %v2224
        %v2226 = vpop.xlane.xlu0 %2225
        %v2227 = vsel %vm1099, %v2180, -inf
        %2228 = vmax.xlane.f32.xlu0 %v2227
        %v2229 = vpop.xlane.xlu0 %2228
        %v2230 = vsub.f32 %v2094, %v2184
        %v2231 = vsub.f32 %v2096, %v2187
        %v2232 = vsub.f32 %v2099, %v2190
        %v2233 = vsub.f32 %v2101, %v2193
        %v2234 = vsub.f32 %v2104, %v2196
        %v2235 = vsub.f32 %v2106, %v2199
        %v2236 = vsub.f32 %v2109, %v2202
        %v2237 = vsub.f32 %v2111, %v2205
        %v2238 = vsub.f32 %v2163, %v2208
        %v2239 = vsub.f32 %v2165, %v2211
        %v2240 = vsub.f32 %v2168, %v2214
        %v2241 = vsub.f32 %v2170, %v2217
        %v2242 = vsub.f32 %v2173, %v2220
        %v2243 = vsub.f32 %v2175, %v2223
        %v2244 = vsub.f32 %v2178, %v2226
        %v2245 = vsub.f32 %v2180, %v2229
        %v2246 = vmul.f32 %v2230, 1.442695
        %v2247 = vpow.pop %v2246
        %v2248 = vmul.f32 %v2231, 1.442695
        %v2249 = vpow.pop %v2248
        %v2250 = vmul.f32 %v2232, 1.442695
        %v2251 = vpow.pop %v2250
        %v2252 = vmul.f32 %v2233, 1.442695
        %v2253 = vpow.pop %v2252
        %v2254 = vmul.f32 %v2234, 1.442695
        %v2255 = vpow.pop %v2254
        %v2256 = vmul.f32 %v2235, 1.442695
        %v2257 = vpow.pop %v2256
        %v2258 = vmul.f32 %v2236, 1.442695
        %v2259 = vpow.pop %v2258
        %v2260 = vmul.f32 %v2237, 1.442695
        %v2261 = vpow.pop %v2260
        %v2262 = vmul.f32 %v2238, 1.442695
        %v2263 = vpow.pop %v2262
        %v2264 = vmul.f32 %v2239, 1.442695
        %v2265 = vpow.pop %v2264
        %v2266 = vmul.f32 %v2240, 1.442695
        %v2267 = vpow.pop %v2266
        %v2268 = vmul.f32 %v2241, 1.442695
        %v2269 = vpow.pop %v2268
        %v2270 = vmul.f32 %v2242, 1.442695
        %v2271 = vpow.pop %v2270
        %v2272 = vmul.f32 %v2243, 1.442695
        %v2273 = vpow.pop %v2272
        %v2274 = vmul.f32 %v2244, 1.442695
        %v2275 = vpow.pop %v2274
        %v2276 = vmul.f32 %v2245, 1.442695
        %v2277 = vpow.pop %v2276
        %v2278 = vsel %vm1099, %v2247, 0.0
        %2279 = vadd.xlane.f32.xlu0 %v2278
        %v2280 = vpop.xlane.xlu0 %2279
        %v2281 = vsel %vm1099, %v2249, 0.0
        %2282 = vadd.xlane.f32.xlu0 %v2281
        %v2283 = vpop.xlane.xlu0 %2282
        %v2284 = vsel %vm1099, %v2251, 0.0
        %2285 = vadd.xlane.f32.xlu0 %v2284
        %v2286 = vpop.xlane.xlu0 %2285
        %v2287 = vsel %vm1099, %v2253, 0.0
        %2288 = vadd.xlane.f32.xlu0 %v2287
        %v2289 = vpop.xlane.xlu0 %2288
        %v2290 = vsel %vm1099, %v2255, 0.0
        %2291 = vadd.xlane.f32.xlu0 %v2290
        %v2292 = vpop.xlane.xlu0 %2291
        %v2293 = vsel %vm1099, %v2257, 0.0
        %2294 = vadd.xlane.f32.xlu0 %v2293
        %v2295 = vpop.xlane.xlu0 %2294
        %v2296 = vsel %vm1099, %v2259, 0.0
        %2297 = vadd.xlane.f32.xlu0 %v2296
        %v2298 = vpop.xlane.xlu0 %2297
        %v2299 = vsel %vm1099, %v2261, 0.0
        %2300 = vadd.xlane.f32.xlu0 %v2299
        %v2301 = vpop.xlane.xlu0 %2300
        %v2302 = vsel %vm1099, %v2263, 0.0
        %2303 = vadd.xlane.f32.xlu0 %v2302
        %v2304 = vpop.xlane.xlu0 %2303
        %v2305 = vsel %vm1099, %v2265, 0.0
        %2306 = vadd.xlane.f32.xlu0 %v2305
        %v2307 = vpop.xlane.xlu0 %2306
        %v2308 = vsel %vm1099, %v2267, 0.0
        %2309 = vadd.xlane.f32.xlu0 %v2308
        %v2310 = vpop.xlane.xlu0 %2309
        %v2311 = vsel %vm1099, %v2269, 0.0
        %2312 = vadd.xlane.f32.xlu0 %v2311
        %v2313 = vpop.xlane.xlu0 %2312
        %v2314 = vsel %vm1099, %v2271, 0.0
        %2315 = vadd.xlane.f32.xlu0 %v2314
        %v2316 = vpop.xlane.xlu0 %2315
        %v2317 = vsel %vm1099, %v2273, 0.0
        %2318 = vadd.xlane.f32.xlu0 %v2317
        %v2319 = vpop.xlane.xlu0 %2318
        %v2320 = vsel %vm1099, %v2275, 0.0
        %2321 = vadd.xlane.f32.xlu0 %v2320
        %v2322 = vpop.xlane.xlu0 %2321
        %v2323 = vsel %vm1099, %v2277, 0.0
        %2324 = vadd.xlane.f32.xlu0 %v2323
        %v2325 = vpop.xlane.xlu0 %2324
        %v2326 = vrcp.pop %v2280
        %v2327 = vrcp.pop %v2283
        %v2328 = vrcp.pop %v2286
        %v2329 = vrcp.pop %v2289
        %v2330 = vrcp.pop %v2292
        %v2331 = vrcp.pop %v2295
        %v2332 = vrcp.pop %v2298
        %v2333 = vrcp.pop %v2301
        %v2334 = vrcp.pop %v2304
        %v2335 = vrcp.pop %v2307
        %v2336 = vrcp.pop %v2310
        %v2337 = vrcp.pop %v2313
        %v2338 = vrcp.pop %v2316
        %v2339 = vrcp.pop %v2319
        %v2340 = vrcp.pop %v2322
        %v2341 = vrcp.pop %v2325
        %v2342 = vmul.f32 %v2247, %v2326
        %v2343 = vmul.f32 %v2249, %v2327
        %v2344 = vmul.f32 %v2251, %v2328
        %v2345 = vmul.f32 %v2253, %v2329
        %v2346 = vmul.f32 %v2255, %v2330
        %v2347 = vmul.f32 %v2257, %v2331
        %v2348 = vmul.f32 %v2259, %v2332
        %v2349 = vmul.f32 %v2261, %v2333
        %v2350 = vmul.f32 %v2263, %v2334
        %v2351 = vmul.f32 %v2265, %v2335
        %v2352 = vmul.f32 %v2267, %v2336
        %v2353 = vmul.f32 %v2269, %v2337
        %v2354 = vmul.f32 %v2271, %v2338
        %v2355 = vmul.f32 %v2273, %v2339
        %v2356 = vmul.f32 %v2275, %v2340
        %v2357 = vmul.f32 %v2277, %v2341
        %v2358 = vpack.c.bf16 %v2342, %v2342
        %v2359 = vpack.c.bf16 %v2343, %v2343
        %v2360 = vpack.c.bf16 %v2344, %v2344
        %v2361 = vpack.c.bf16 %v2345, %v2345
        %v2362 = vpack.c.bf16 %v2346, %v2346
        %v2363 = vpack.c.bf16 %v2347, %v2347
        %v2364 = vpack.c.bf16 %v2348, %v2348
        %v2365 = vpack.c.bf16 %v2349, %v2349
        %v2366 = vpack.c.bf16 %v2350, %v2350
        %v2367 = vpack.c.bf16 %v2351, %v2351
        %v2368 = vpack.c.bf16 %v2352, %v2352
        %v2369 = vpack.c.bf16 %v2353, %v2353
        %v2370 = vpack.c.bf16 %v2354, %v2354
        %v2371 = vpack.c.bf16 %v2355, %v2355
        %v2372 = vpack.c.bf16 %v2356, %v2356
        %v2373 = vpack.c.bf16 %v2357, %v2357
        %v2382 = vunpack.c.l.b16 %v2358
        %v2383 = vunpack.c.l.b16 %v2359
        %v2384 = vunpack.c.l.b16 %v2360
        %v2385 = vunpack.c.l.b16 %v2361
        %v2386 = vunpack.c.l.b16 %v2362
        %v2387 = vunpack.c.l.b16 %v2363
        %v2388 = vunpack.c.l.b16 %v2364
        %v2389 = vunpack.c.l.b16 %v2365
        %v2390 = vpack.c.b16 %v2383, %v2382
        %v2391 = vpack.c.b16 %v2385, %v2384
        %v2392 = vpack.c.b16 %v2387, %v2386
        %v2393 = vpack.c.b16 %v2389, %v2388
        %2394 = vrot.lane.b32.xlu0 %v952, 48
        %v2395 = vpop.permute.xlu0 %2394
        %2396 = vrot.lane.b32.xlu0 %v953, 48
        %v2397 = vpop.permute.xlu0 %2396
        %2398 = vrot.lane.b32.xlu0 %v954, 48
        %v2399 = vpop.permute.xlu0 %2398
        %2400 = vrot.lane.b32.xlu0 %v955, 48
        %v2401 = vpop.permute.xlu0 %2400
        %v2407 = vsel %vm1099, %v2390, 0
        %v2410 = vsel %vm1099, %v2391, 0
        %v2413 = vsel %vm1099, %v2392, 0
        %v2416 = vsel %vm1099, %v2393, 0
        %2418 = vmatpush.bf16.msra.mxu0 0
        %2419 = vmatpush.bf16.msra.mxu0 0
        %2420 = vmatpush.bf16.msra.mxu0 0
        %2421 = vmatpush.bf16.msra.mxu0 0
        %2422 = vmatpush.bf16.msra.mxu0 %v2401
        %2423 = vmatpush.bf16.msra.mxu0 %v2399
        %2424 = vmatpush.bf16.msra.mxu0 %v2397
        %2425 = vmatpush.bf16.msra.mxu0 %v2395
        %2426 = vmatmul.bf16.gmra.mxu0 %v2407
        %v2427 = vpop.f32.mrf.mxu0
        %v2428 = vadd.f32 0.0, %v2427
        %v2429 = vpop.f32.mrf.mxu0
        %v2430 = vadd.f32 0.0, %v2429
        %2431 = vmatmul.bf16.gmra.mxu0 %v2410
        %v2432 = vpop.f32.mrf.mxu0
        %v2433 = vadd.f32 0.0, %v2432
        %v2434 = vpop.f32.mrf.mxu0
        %v2435 = vadd.f32 0.0, %v2434
        %2436 = vmatmul.bf16.gmra.mxu0 %v2413
        %v2437 = vpop.f32.mrf.mxu0
        %v2438 = vadd.f32 0.0, %v2437
        %v2439 = vpop.f32.mrf.mxu0
        %v2440 = vadd.f32 0.0, %v2439
        %2441 = vmatmul.bf16.gmra.mxu0 %v2416
        %v2442 = vpop.f32.mrf.mxu0
        %v2443 = vadd.f32 0.0, %v2442
        %v2444 = vpop.f32.mrf.mxu0
        %v2445 = vadd.f32 0.0, %v2444
        %2446 = vdwg.mxu0
        %v2455 = vunpack.c.l.b16 %v2366
        %v2456 = vunpack.c.l.b16 %v2367
        %v2457 = vunpack.c.l.b16 %v2368
        %v2458 = vunpack.c.l.b16 %v2369
        %v2459 = vunpack.c.l.b16 %v2370
        %v2460 = vunpack.c.l.b16 %v2371
        %v2461 = vunpack.c.l.b16 %v2372
        %v2462 = vunpack.c.l.b16 %v2373
        %v2463 = vpack.c.b16 %v2456, %v2455
        %v2464 = vpack.c.b16 %v2458, %v2457
        %v2465 = vpack.c.b16 %v2460, %v2459
        %v2466 = vpack.c.b16 %v2462, %v2461
        %2467 = vrot.lane.b32.xlu0 %v1034, 48
        %v2468 = vpop.permute.xlu0 %2467
        %2469 = vrot.lane.b32.xlu0 %v1035, 48
        %v2470 = vpop.permute.xlu0 %2469
        %2471 = vrot.lane.b32.xlu0 %v1036, 48
        %v2472 = vpop.permute.xlu0 %2471
        %2473 = vrot.lane.b32.xlu0 %v1037, 48
        %v2474 = vpop.permute.xlu0 %2473
        %v2480 = vsel %vm1099, %v2463, 0
        %v2483 = vsel %vm1099, %v2464, 0
        %v2486 = vsel %vm1099, %v2465, 0
        %v2489 = vsel %vm1099, %v2466, 0
        %2491 = vmatpush.bf16.msra.mxu0 0
        %2492 = vmatpush.bf16.msra.mxu0 0
        %2493 = vmatpush.bf16.msra.mxu0 0
        %2494 = vmatpush.bf16.msra.mxu0 0
        %2495 = vmatpush.bf16.msra.mxu0 %v2474
        %2496 = vmatpush.bf16.msra.mxu0 %v2472
        %2497 = vmatpush.bf16.msra.mxu0 %v2470
        %2498 = vmatpush.bf16.msra.mxu0 %v2468
        %2499 = vmatmul.bf16.gmra.mxu0 %v2480
        %v2500 = vpop.f32.mrf.mxu0
        %v2501 = vadd.f32 0.0, %v2500
        %v2502 = vpop.f32.mrf.mxu0
        %v2503 = vadd.f32 0.0, %v2502
        %2504 = vmatmul.bf16.gmra.mxu0 %v2483
        %v2505 = vpop.f32.mrf.mxu0
        %v2506 = vadd.f32 0.0, %v2505
        %v2507 = vpop.f32.mrf.mxu0
        %v2508 = vadd.f32 0.0, %v2507
        %2509 = vmatmul.bf16.gmra.mxu0 %v2486
        %v2510 = vpop.f32.mrf.mxu0
        %v2511 = vadd.f32 0.0, %v2510
        %v2512 = vpop.f32.mrf.mxu0
        %v2513 = vadd.f32 0.0, %v2512
        %2514 = vmatmul.bf16.gmra.mxu0 %v2489
        %v2515 = vpop.f32.mrf.mxu0
        %v2516 = vadd.f32 0.0, %v2515
        %v2517 = vpop.f32.mrf.mxu0
        %v2518 = vadd.f32 0.0, %v2517
        %2519 = vdwg.mxu0
        %v2520 = vpack.c.bf16 %v2428, %v2428
        %v2521 = vpack.c.bf16 %v2430, %v2430
        %v2522 = vpack.c.bf16 %v2433, %v2433
        %v2523 = vpack.c.bf16 %v2435, %v2435
        %v2524 = vpack.c.bf16 %v2438, %v2438
        %v2525 = vpack.c.bf16 %v2440, %v2440
        %v2526 = vpack.c.bf16 %v2443, %v2443
        %v2527 = vpack.c.bf16 %v2445, %v2445
        %v2528 = vpack.c.bf16 %v2501, %v2501
        %v2529 = vpack.c.bf16 %v2503, %v2503
        %v2530 = vpack.c.bf16 %v2506, %v2506
        %v2531 = vpack.c.bf16 %v2508, %v2508
        %v2532 = vpack.c.bf16 %v2511, %v2511
        %v2533 = vpack.c.bf16 %v2513, %v2513
        %v2534 = vpack.c.bf16 %v2516, %v2516
        %v2535 = vpack.c.bf16 %v2518, %v2518
        %2552 = vrot.lane.b32.xlu0 %v2520, 16
        %v2553 = vpop.permute.xlu0 %2552
        %2554 = vrot.lane.b32.xlu0 %v2521, 16
        %v2555 = vpop.permute.xlu0 %2554
        %2556 = vrot.lane.b32.xlu0 %v2522, 16
        %v2557 = vpop.permute.xlu0 %2556
        %2558 = vrot.lane.b32.xlu0 %v2523, 16
        %v2559 = vpop.permute.xlu0 %2558
        %2560 = vrot.lane.b32.xlu0 %v2524, 16
        %v2561 = vpop.permute.xlu0 %2560
        %2562 = vrot.lane.b32.xlu0 %v2525, 16
        %v2563 = vpop.permute.xlu0 %2562
        %2564 = vrot.lane.b32.xlu0 %v2526, 16
        %v2565 = vpop.permute.xlu0 %2564
        %2566 = vrot.lane.b32.xlu0 %v2527, 16
        %v2567 = vpop.permute.xlu0 %2566
        %2568 = vrot.lane.b32.xlu0 %v2528, 16
        %v2569 = vpop.permute.xlu0 %2568
        %2570 = vrot.lane.b32.xlu0 %v2529, 16
        %v2571 = vpop.permute.xlu0 %2570
        %2572 = vrot.lane.b32.xlu0 %v2530, 16
        %v2573 = vpop.permute.xlu0 %2572
        %2574 = vrot.lane.b32.xlu0 %v2531, 16
        %v2575 = vpop.permute.xlu0 %2574
        %2576 = vrot.lane.b32.xlu0 %v2532, 16
        %v2577 = vpop.permute.xlu0 %2576
        %2578 = vrot.lane.b32.xlu0 %v2533, 16
        %v2579 = vpop.permute.xlu0 %2578
        %2580 = vrot.lane.b32.xlu0 %v2534, 16
        %v2581 = vpop.permute.xlu0 %2580
        %2582 = vrot.lane.b32.xlu0 %v2535, 16
        %v2583 = vpop.permute.xlu0 %2582
        %vm2600 = vcmask 191616
        %2601 = vst.msk [vmem:[#allocation2] sm:$0xf] %vm2600, %v2553
        %2602 = vst.msk [vmem:[#allocation2 + $0x4] sm:$0xf] %vm2600, %v2555
        %2603 = vst.msk [vmem:[#allocation2 + $0x8] sm:$0xf] %vm2600, %v2557
        %2604 = vst.msk [vmem:[#allocation2 + $0xc] sm:$0xf] %vm2600, %v2559
        %2605 = vst.msk [vmem:[#allocation2 + $0x10] sm:$0xf] %vm2600, %v2561
        %2606 = vst.msk [vmem:[#allocation2 + $0x14] sm:$0xf] %vm2600, %v2563
        %2607 = vst.msk [vmem:[#allocation2 + $0x18] sm:$0xf] %vm2600, %v2565
        %2608 = vst.msk [vmem:[#allocation2 + $0x1c] sm:$0xf] %vm2600, %v2567
        %2609 = vst.msk [vmem:[#allocation2 + $0x20] sm:$0xf] %vm2600, %v2569
        %2610 = vst.msk [vmem:[#allocation2 + $0x24] sm:$0xf] %vm2600, %v2571
        %2611 = vst.msk [vmem:[#allocation2 + $0x28] sm:$0xf] %vm2600, %v2573
        %2612 = vst.msk [vmem:[#allocation2 + $0x2c] sm:$0xf] %vm2600, %v2575
        %2613 = vst.msk [vmem:[#allocation2 + $0x30] sm:$0xf] %vm2600, %v2577
        %2614 = vst.msk [vmem:[#allocation2 + $0x34] sm:$0xf] %vm2600, %v2579
        %2615 = vst.msk [vmem:[#allocation2 + $0x38] sm:$0xf] %vm2600, %v2581
        %2616 = vst.msk [vmem:[#allocation2 + $0x3c] sm:$0xf] %vm2600, %v2583
        %2617 = vrot.lane.b32.xlu0 %v952, 104
        %v2618 = vpop.permute.xlu0 %2617
        %2619 = vrot.lane.b32.xlu0 %v953, 104
        %v2620 = vpop.permute.xlu0 %2619
        %2621 = vrot.lane.b32.xlu0 %v954, 104
        %v2622 = vpop.permute.xlu0 %2621
        %2623 = vrot.lane.b32.xlu0 %v955, 104
        %v2624 = vpop.permute.xlu0 %2623
        %2625 = vrot.lane.b32.xlu0 %v952, 72
        %v2626 = vpop.permute.xlu0 %2625
        %2627 = vrot.lane.b32.xlu0 %v953, 72
        %v2628 = vpop.permute.xlu0 %2627
        %2629 = vrot.lane.b32.xlu0 %v954, 72
        %v2630 = vpop.permute.xlu0 %2629
        %2631 = vrot.lane.b32.xlu0 %v955, 72
        %v2632 = vpop.permute.xlu0 %2631
        %v2634 = vsel %vm964, %v2618, 0
        %v2637 = vsel %vm964, %v2620, 0
        %v2640 = vsel %vm964, %v2622, 0
        %v2643 = vsel %vm964, %v2624, 0
        %v2646 = vsel %vm964, %v2626, 0
        %v2649 = vsel %vm964, %v2628, 0
        %v2652 = vsel %vm964, %v2630, 0
        %v2655 = vsel %vm964, %v2632, 0
        %2657 = vmatpush.bf16.xpose.msra.mxu0 0
        %2658 = vmatpush.bf16.xpose.msra.mxu0 0
        %2659 = vmatpush.bf16.xpose.msra.mxu0 0
        %2660 = vmatpush.bf16.xpose.msra.mxu0 0
        %2661 = vmatpush.bf16.xpose.msra.mxu0 %v2655
        %2662 = vmatpush.bf16.xpose.msra.mxu0 %v2652
        %2663 = vmatpush.bf16.xpose.msra.mxu0 %v2649
        %2664 = vmatpush.bf16.xpose.msra.mxu0 %v2646
        %2665 = vmatmul.bf16.gmra.mxu0 %v2634
        %v2666 = vpop.f32.mrf.mxu0
        %v2667 = vadd.f32 0.0, %v2666
        %v2668 = vpop.f32.mrf.mxu0
        %v2669 = vadd.f32 0.0, %v2668
        %2670 = vmatmul.bf16.gmra.mxu0 %v2637
        %v2671 = vpop.f32.mrf.mxu0
        %v2672 = vadd.f32 0.0, %v2671
        %v2673 = vpop.f32.mrf.mxu0
        %v2674 = vadd.f32 0.0, %v2673
        %2675 = vmatmul.bf16.gmra.mxu0 %v2640
        %v2676 = vpop.f32.mrf.mxu0
        %v2677 = vadd.f32 0.0, %v2676
        %v2678 = vpop.f32.mrf.mxu0
        %v2679 = vadd.f32 0.0, %v2678
        %2680 = vmatmul.bf16.gmra.mxu0 %v2643
        %v2681 = vpop.f32.mrf.mxu0
        %v2682 = vadd.f32 0.0, %v2681
        %v2683 = vpop.f32.mrf.mxu0
        %v2684 = vadd.f32 0.0, %v2683
        %2685 = vdwg.mxu0
        %2686 = vrot.lane.b32.xlu0 %v1034, 104
        %v2687 = vpop.permute.xlu0 %2686
        %2688 = vrot.lane.b32.xlu0 %v1035, 104
        %v2689 = vpop.permute.xlu0 %2688
        %2690 = vrot.lane.b32.xlu0 %v1036, 104
        %v2691 = vpop.permute.xlu0 %2690
        %2692 = vrot.lane.b32.xlu0 %v1037, 104
        %v2693 = vpop.permute.xlu0 %2692
        %2694 = vrot.lane.b32.xlu0 %v1034, 72
        %v2695 = vpop.permute.xlu0 %2694
        %2696 = vrot.lane.b32.xlu0 %v1035, 72
        %v2697 = vpop.permute.xlu0 %2696
        %2698 = vrot.lane.b32.xlu0 %v1036, 72
        %v2699 = vpop.permute.xlu0 %2698
        %2700 = vrot.lane.b32.xlu0 %v1037, 72
        %v2701 = vpop.permute.xlu0 %2700
        %v2703 = vsel %vm964, %v2687, 0
        %v2706 = vsel %vm964, %v2689, 0
        %v2709 = vsel %vm964, %v2691, 0
        %v2712 = vsel %vm964, %v2693, 0
        %v2715 = vsel %vm964, %v2695, 0
        %v2718 = vsel %vm964, %v2697, 0
        %v2721 = vsel %vm964, %v2699, 0
        %v2724 = vsel %vm964, %v2701, 0
        %2726 = vmatpush.bf16.xpose.msra.mxu0 0
        %2727 = vmatpush.bf16.xpose.msra.mxu0 0
        %2728 = vmatpush.bf16.xpose.msra.mxu0 0
        %2729 = vmatpush.bf16.xpose.msra.mxu0 0
        %2730 = vmatpush.bf16.xpose.msra.mxu0 %v2724
        %2731 = vmatpush.bf16.xpose.msra.mxu0 %v2721
        %2732 = vmatpush.bf16.xpose.msra.mxu0 %v2718
        %2733 = vmatpush.bf16.xpose.msra.mxu0 %v2715
        %2734 = vmatmul.bf16.gmra.mxu0 %v2703
        %v2735 = vpop.f32.mrf.mxu0
        %v2736 = vadd.f32 0.0, %v2735
        %v2737 = vpop.f32.mrf.mxu0
        %v2738 = vadd.f32 0.0, %v2737
        %2739 = vmatmul.bf16.gmra.mxu0 %v2706
        %v2740 = vpop.f32.mrf.mxu0
        %v2741 = vadd.f32 0.0, %v2740
        %v2742 = vpop.f32.mrf.mxu0
        %v2743 = vadd.f32 0.0, %v2742
        %2744 = vmatmul.bf16.gmra.mxu0 %v2709
        %v2745 = vpop.f32.mrf.mxu0
        %v2746 = vadd.f32 0.0, %v2745
        %v2747 = vpop.f32.mrf.mxu0
        %v2748 = vadd.f32 0.0, %v2747
        %2749 = vmatmul.bf16.gmra.mxu0 %v2712
        %v2750 = vpop.f32.mrf.mxu0
        %v2751 = vadd.f32 0.0, %v2750
        %v2752 = vpop.f32.mrf.mxu0
        %v2753 = vadd.f32 0.0, %v2752
        %2754 = vdwg.mxu0
        %v2755 = vsel %vm1099, %v2667, -inf
        %2756 = vmax.xlane.f32.xlu0 %v2755
        %v2757 = vpop.xlane.xlu0 %2756
        %v2758 = vsel %vm1099, %v2669, -inf
        %2759 = vmax.xlane.f32.xlu0 %v2758
        %v2760 = vpop.xlane.xlu0 %2759
        %v2761 = vsel %vm1099, %v2672, -inf
        %2762 = vmax.xlane.f32.xlu0 %v2761
        %v2763 = vpop.xlane.xlu0 %2762
        %v2764 = vsel %vm1099, %v2674, -inf
        %2765 = vmax.xlane.f32.xlu0 %v2764
        %v2766 = vpop.xlane.xlu0 %2765
        %v2767 = vsel %vm1099, %v2677, -inf
        %2768 = vmax.xlane.f32.xlu0 %v2767
        %v2769 = vpop.xlane.xlu0 %2768
        %v2770 = vsel %vm1099, %v2679, -inf
        %2771 = vmax.xlane.f32.xlu0 %v2770
        %v2772 = vpop.xlane.xlu0 %2771
        %v2773 = vsel %vm1099, %v2682, -inf
        %2774 = vmax.xlane.f32.xlu0 %v2773
        %v2775 = vpop.xlane.xlu0 %2774
        %v2776 = vsel %vm1099, %v2684, -inf
        %2777 = vmax.xlane.f32.xlu0 %v2776
        %v2778 = vpop.xlane.xlu0 %2777
        %v2779 = vsel %vm1099, %v2736, -inf
        %2780 = vmax.xlane.f32.xlu0 %v2779
        %v2781 = vpop.xlane.xlu0 %2780
        %v2782 = vsel %vm1099, %v2738, -inf
        %2783 = vmax.xlane.f32.xlu0 %v2782
        %v2784 = vpop.xlane.xlu0 %2783
        %v2785 = vsel %vm1099, %v2741, -inf
        %2786 = vmax.xlane.f32.xlu0 %v2785
        %v2787 = vpop.xlane.xlu0 %2786
        %v2788 = vsel %vm1099, %v2743, -inf
        %2789 = vmax.xlane.f32.xlu0 %v2788
        %v2790 = vpop.xlane.xlu0 %2789
        %v2791 = vsel %vm1099, %v2746, -inf
        %2792 = vmax.xlane.f32.xlu0 %v2791
        %v2793 = vpop.xlane.xlu0 %2792
        %v2794 = vsel %vm1099, %v2748, -inf
        %2795 = vmax.xlane.f32.xlu0 %v2794
        %v2796 = vpop.xlane.xlu0 %2795
        %v2797 = vsel %vm1099, %v2751, -inf
        %2798 = vmax.xlane.f32.xlu0 %v2797
        %v2799 = vpop.xlane.xlu0 %2798
        %v2800 = vsel %vm1099, %v2753, -inf
        %2801 = vmax.xlane.f32.xlu0 %v2800
        %v2802 = vpop.xlane.xlu0 %2801
        %v2803 = vsub.f32 %v2667, %v2757
        %v2804 = vsub.f32 %v2669, %v2760
        %v2805 = vsub.f32 %v2672, %v2763
        %v2806 = vsub.f32 %v2674, %v2766
        %v2807 = vsub.f32 %v2677, %v2769
        %v2808 = vsub.f32 %v2679, %v2772
        %v2809 = vsub.f32 %v2682, %v2775
        %v2810 = vsub.f32 %v2684, %v2778
        %v2811 = vsub.f32 %v2736, %v2781
        %v2812 = vsub.f32 %v2738, %v2784
        %v2813 = vsub.f32 %v2741, %v2787
        %v2814 = vsub.f32 %v2743, %v2790
        %v2815 = vsub.f32 %v2746, %v2793
        %v2816 = vsub.f32 %v2748, %v2796
        %v2817 = vsub.f32 %v2751, %v2799
        %v2818 = vsub.f32 %v2753, %v2802
        %v2819 = vmul.f32 %v2803, 1.442695
        %v2820 = vpow.pop %v2819
        %v2821 = vmul.f32 %v2804, 1.442695
        %v2822 = vpow.pop %v2821
        %v2823 = vmul.f32 %v2805, 1.442695
        %v2824 = vpow.pop %v2823
        %v2825 = vmul.f32 %v2806, 1.442695
        %v2826 = vpow.pop %v2825
        %v2827 = vmul.f32 %v2807, 1.442695
        %v2828 = vpow.pop %v2827
        %v2829 = vmul.f32 %v2808, 1.442695
        %v2830 = vpow.pop %v2829
        %v2831 = vmul.f32 %v2809, 1.442695
        %v2832 = vpow.pop %v2831
        %v2833 = vmul.f32 %v2810, 1.442695
        %v2834 = vpow.pop %v2833
        %v2835 = vmul.f32 %v2811, 1.442695
        %v2836 = vpow.pop %v2835
        %v2837 = vmul.f32 %v2812, 1.442695
        %v2838 = vpow.pop %v2837
        %v2839 = vmul.f32 %v2813, 1.442695
        %v2840 = vpow.pop %v2839
        %v2841 = vmul.f32 %v2814, 1.442695
        %v2842 = vpow.pop %v2841
        %v2843 = vmul.f32 %v2815, 1.442695
        %v2844 = vpow.pop %v2843
        %v2845 = vmul.f32 %v2816, 1.442695
        %v2846 = vpow.pop %v2845
        %v2847 = vmul.f32 %v2817, 1.442695
        %v2848 = vpow.pop %v2847
        %v2849 = vmul.f32 %v2818, 1.442695
        %v2850 = vpow.pop %v2849
        %v2851 = vsel %vm1099, %v2820, 0.0
        %2852 = vadd.xlane.f32.xlu0 %v2851
        %v2853 = vpop.xlane.xlu0 %2852
        %v2854 = vsel %vm1099, %v2822, 0.0
        %2855 = vadd.xlane.f32.xlu0 %v2854
        %v2856 = vpop.xlane.xlu0 %2855
        %v2857 = vsel %vm1099, %v2824, 0.0
        %2858 = vadd.xlane.f32.xlu0 %v2857
        %v2859 = vpop.xlane.xlu0 %2858
        %v2860 = vsel %vm1099, %v2826, 0.0
        %2861 = vadd.xlane.f32.xlu0 %v2860
        %v2862 = vpop.xlane.xlu0 %2861
        %v2863 = vsel %vm1099, %v2828, 0.0
        %2864 = vadd.xlane.f32.xlu0 %v2863
        %v2865 = vpop.xlane.xlu0 %2864
        %v2866 = vsel %vm1099, %v2830, 0.0
        %2867 = vadd.xlane.f32.xlu0 %v2866
        %v2868 = vpop.xlane.xlu0 %2867
        %v2869 = vsel %vm1099, %v2832, 0.0
        %2870 = vadd.xlane.f32.xlu0 %v2869
        %v2871 = vpop.xlane.xlu0 %2870
        %v2872 = vsel %vm1099, %v2834, 0.0
        %2873 = vadd.xlane.f32.xlu0 %v2872
        %v2874 = vpop.xlane.xlu0 %2873
        %v2875 = vsel %vm1099, %v2836, 0.0
        %2876 = vadd.xlane.f32.xlu0 %v2875
        %v2877 = vpop.xlane.xlu0 %2876
        %v2878 = vsel %vm1099, %v2838, 0.0
        %2879 = vadd.xlane.f32.xlu0 %v2878
        %v2880 = vpop.xlane.xlu0 %2879
        %v2881 = vsel %vm1099, %v2840, 0.0
        %2882 = vadd.xlane.f32.xlu0 %v2881
        %v2883 = vpop.xlane.xlu0 %2882
        %v2884 = vsel %vm1099, %v2842, 0.0
        %2885 = vadd.xlane.f32.xlu0 %v2884
        %v2886 = vpop.xlane.xlu0 %2885
        %v2887 = vsel %vm1099, %v2844, 0.0
        %2888 = vadd.xlane.f32.xlu0 %v2887
        %v2889 = vpop.xlane.xlu0 %2888
        %v2890 = vsel %vm1099, %v2846, 0.0
        %2891 = vadd.xlane.f32.xlu0 %v2890
        %v2892 = vpop.xlane.xlu0 %2891
        %v2893 = vsel %vm1099, %v2848, 0.0
        %2894 = vadd.xlane.f32.xlu0 %v2893
        %v2895 = vpop.xlane.xlu0 %2894
        %v2896 = vsel %vm1099, %v2850, 0.0
        %2897 = vadd.xlane.f32.xlu0 %v2896
        %v2898 = vpop.xlane.xlu0 %2897
        %v2899 = vrcp.pop %v2853
        %v2900 = vrcp.pop %v2856
        %v2901 = vrcp.pop %v2859
        %v2902 = vrcp.pop %v2862
        %v2903 = vrcp.pop %v2865
        %v2904 = vrcp.pop %v2868
        %v2905 = vrcp.pop %v2871
        %v2906 = vrcp.pop %v2874
        %v2907 = vrcp.pop %v2877
        %v2908 = vrcp.pop %v2880
        %v2909 = vrcp.pop %v2883
        %v2910 = vrcp.pop %v2886
        %v2911 = vrcp.pop %v2889
        %v2912 = vrcp.pop %v2892
        %v2913 = vrcp.pop %v2895
        %v2914 = vrcp.pop %v2898
        %v2915 = vmul.f32 %v2820, %v2899
        %v2916 = vmul.f32 %v2822, %v2900
        %v2917 = vmul.f32 %v2824, %v2901
        %v2918 = vmul.f32 %v2826, %v2902
        %v2919 = vmul.f32 %v2828, %v2903
        %v2920 = vmul.f32 %v2830, %v2904
        %v2921 = vmul.f32 %v2832, %v2905
        %v2922 = vmul.f32 %v2834, %v2906
        %v2923 = vmul.f32 %v2836, %v2907
        %v2924 = vmul.f32 %v2838, %v2908
        %v2925 = vmul.f32 %v2840, %v2909
        %v2926 = vmul.f32 %v2842, %v2910
        %v2927 = vmul.f32 %v2844, %v2911
        %v2928 = vmul.f32 %v2846, %v2912
        %v2929 = vmul.f32 %v2848, %v2913
        %v2930 = vmul.f32 %v2850, %v2914
        %v2931 = vpack.c.bf16 %v2915, %v2915
        %v2932 = vpack.c.bf16 %v2916, %v2916
        %v2933 = vpack.c.bf16 %v2917, %v2917
        %v2934 = vpack.c.bf16 %v2918, %v2918
        %v2935 = vpack.c.bf16 %v2919, %v2919
        %v2936 = vpack.c.bf16 %v2920, %v2920
        %v2937 = vpack.c.bf16 %v2921, %v2921
        %v2938 = vpack.c.bf16 %v2922, %v2922
        %v2939 = vpack.c.bf16 %v2923, %v2923
        %v2940 = vpack.c.bf16 %v2924, %v2924
        %v2941 = vpack.c.bf16 %v2925, %v2925
        %v2942 = vpack.c.bf16 %v2926, %v2926
        %v2943 = vpack.c.bf16 %v2927, %v2927
        %v2944 = vpack.c.bf16 %v2928, %v2928
        %v2945 = vpack.c.bf16 %v2929, %v2929
        %v2946 = vpack.c.bf16 %v2930, %v2930
        %v2955 = vunpack.c.l.b16 %v2931
        %v2956 = vunpack.c.l.b16 %v2932
        %v2957 = vunpack.c.l.b16 %v2933
        %v2958 = vunpack.c.l.b16 %v2934
        %v2959 = vunpack.c.l.b16 %v2935
        %v2960 = vunpack.c.l.b16 %v2936
        %v2961 = vunpack.c.l.b16 %v2937
        %v2962 = vunpack.c.l.b16 %v2938
        %v2963 = vpack.c.b16 %v2956, %v2955
        %v2964 = vpack.c.b16 %v2958, %v2957
        %v2965 = vpack.c.b16 %v2960, %v2959
        %v2966 = vpack.c.b16 %v2962, %v2961
        %2967 = vrot.lane.b32.xlu0 %v952, 40
        %v2968 = vpop.permute.xlu0 %2967
        %2969 = vrot.lane.b32.xlu0 %v953, 40
        %v2970 = vpop.permute.xlu0 %2969
        %2971 = vrot.lane.b32.xlu0 %v954, 40
        %v2972 = vpop.permute.xlu0 %2971
        %2973 = vrot.lane.b32.xlu0 %v955, 40
        %v2974 = vpop.permute.xlu0 %2973
        %v2980 = vsel %vm1099, %v2963, 0
        %v2983 = vsel %vm1099, %v2964, 0
        %v2986 = vsel %vm1099, %v2965, 0
        %v2989 = vsel %vm1099, %v2966, 0
        %2991 = vmatpush.bf16.msra.mxu0 0
        %2992 = vmatpush.bf16.msra.mxu0 0
        %2993 = vmatpush.bf16.msra.mxu0 0
        %2994 = vmatpush.bf16.msra.mxu0 0
        %2995 = vmatpush.bf16.msra.mxu0 %v2974
        %2996 = vmatpush.bf16.msra.mxu0 %v2972
        %2997 = vmatpush.bf16.msra.mxu0 %v2970
        %2998 = vmatpush.bf16.msra.mxu0 %v2968
        %2999 = vmatmul.bf16.gmra.mxu0 %v2980
        %v3000 = vpop.f32.mrf.mxu0
        %v3001 = vadd.f32 0.0, %v3000
        %v3002 = vpop.f32.mrf.mxu0
        %v3003 = vadd.f32 0.0, %v3002
        %3004 = vmatmul.bf16.gmra.mxu0 %v2983
        %v3005 = vpop.f32.mrf.mxu0
        %v3006 = vadd.f32 0.0, %v3005
        %v3007 = vpop.f32.mrf.mxu0
        %v3008 = vadd.f32 0.0, %v3007
        %3009 = vmatmul.bf16.gmra.mxu0 %v2986
        %v3010 = vpop.f32.mrf.mxu0
        %v3011 = vadd.f32 0.0, %v3010
        %v3012 = vpop.f32.mrf.mxu0
        %v3013 = vadd.f32 0.0, %v3012
        %3014 = vmatmul.bf16.gmra.mxu0 %v2989
        %v3015 = vpop.f32.mrf.mxu0
        %v3016 = vadd.f32 0.0, %v3015
        %v3017 = vpop.f32.mrf.mxu0
        %v3018 = vadd.f32 0.0, %v3017
        %3019 = vdwg.mxu0
        %v3028 = vunpack.c.l.b16 %v2939
        %v3029 = vunpack.c.l.b16 %v2940
        %v3030 = vunpack.c.l.b16 %v2941
        %v3031 = vunpack.c.l.b16 %v2942
        %v3032 = vunpack.c.l.b16 %v2943
        %v3033 = vunpack.c.l.b16 %v2944
        %v3034 = vunpack.c.l.b16 %v2945
        %v3035 = vunpack.c.l.b16 %v2946
        %v3036 = vpack.c.b16 %v3029, %v3028
        %v3037 = vpack.c.b16 %v3031, %v3030
        %v3038 = vpack.c.b16 %v3033, %v3032
        %v3039 = vpack.c.b16 %v3035, %v3034
        %3040 = vrot.lane.b32.xlu0 %v1034, 40
        %v3041 = vpop.permute.xlu0 %3040
        %3042 = vrot.lane.b32.xlu0 %v1035, 40
        %v3043 = vpop.permute.xlu0 %3042
        %3044 = vrot.lane.b32.xlu0 %v1036, 40
        %v3045 = vpop.permute.xlu0 %3044
        %3046 = vrot.lane.b32.xlu0 %v1037, 40
        %v3047 = vpop.permute.xlu0 %3046
        %v3053 = vsel %vm1099, %v3036, 0
        %v3056 = vsel %vm1099, %v3037, 0
        %v3059 = vsel %vm1099, %v3038, 0
        %v3062 = vsel %vm1099, %v3039, 0
        %3064 = vmatpush.bf16.msra.mxu0 0
        %3065 = vmatpush.bf16.msra.mxu0 0
        %3066 = vmatpush.bf16.msra.mxu0 0
        %3067 = vmatpush.bf16.msra.mxu0 0
        %3068 = vmatpush.bf16.msra.mxu0 %v3047
        %3069 = vmatpush.bf16.msra.mxu0 %v3045
        %3070 = vmatpush.bf16.msra.mxu0 %v3043
        %3071 = vmatpush.bf16.msra.mxu0 %v3041
        %3072 = vmatmul.bf16.gmra.mxu0 %v3053
        %v3073 = vpop.f32.mrf.mxu0
        %v3074 = vadd.f32 0.0, %v3073
        %v3075 = vpop.f32.mrf.mxu0
        %v3076 = vadd.f32 0.0, %v3075
        %3077 = vmatmul.bf16.gmra.mxu0 %v3056
        %v3078 = vpop.f32.mrf.mxu0
        %v3079 = vadd.f32 0.0, %v3078
        %v3080 = vpop.f32.mrf.mxu0
        %v3081 = vadd.f32 0.0, %v3080
        %3082 = vmatmul.bf16.gmra.mxu0 %v3059
        %v3083 = vpop.f32.mrf.mxu0
        %v3084 = vadd.f32 0.0, %v3083
        %v3085 = vpop.f32.mrf.mxu0
        %v3086 = vadd.f32 0.0, %v3085
        %3087 = vmatmul.bf16.gmra.mxu0 %v3062
        %v3088 = vpop.f32.mrf.mxu0
        %v3089 = vadd.f32 0.0, %v3088
        %v3090 = vpop.f32.mrf.mxu0
        %v3091 = vadd.f32 0.0, %v3090
        %3092 = vdwg.mxu0
        %v3093 = vpack.c.bf16 %v3001, %v3001
        %v3094 = vpack.c.bf16 %v3003, %v3003
        %v3095 = vpack.c.bf16 %v3006, %v3006
        %v3096 = vpack.c.bf16 %v3008, %v3008
        %v3097 = vpack.c.bf16 %v3011, %v3011
        %v3098 = vpack.c.bf16 %v3013, %v3013
        %v3099 = vpack.c.bf16 %v3016, %v3016
        %v3100 = vpack.c.bf16 %v3018, %v3018
        %v3101 = vpack.c.bf16 %v3074, %v3074
        %v3102 = vpack.c.bf16 %v3076, %v3076
        %v3103 = vpack.c.bf16 %v3079, %v3079
        %v3104 = vpack.c.bf16 %v3081, %v3081
        %v3105 = vpack.c.bf16 %v3084, %v3084
        %v3106 = vpack.c.bf16 %v3086, %v3086
        %v3107 = vpack.c.bf16 %v3089, %v3089
        %v3108 = vpack.c.bf16 %v3091, %v3091
        %3125 = vrot.lane.b32.xlu0 %v3093, 24
        %v3126 = vpop.permute.xlu0 %3125
        %3127 = vrot.lane.b32.xlu0 %v3094, 24
        %v3128 = vpop.permute.xlu0 %3127
        %3129 = vrot.lane.b32.xlu0 %v3095, 24
        %v3130 = vpop.permute.xlu0 %3129
        %3131 = vrot.lane.b32.xlu0 %v3096, 24
        %v3132 = vpop.permute.xlu0 %3131
        %3133 = vrot.lane.b32.xlu0 %v3097, 24
        %v3134 = vpop.permute.xlu0 %3133
        %3135 = vrot.lane.b32.xlu0 %v3098, 24
        %v3136 = vpop.permute.xlu0 %3135
        %3137 = vrot.lane.b32.xlu0 %v3099, 24
        %v3138 = vpop.permute.xlu0 %3137
        %3139 = vrot.lane.b32.xlu0 %v3100, 24
        %v3140 = vpop.permute.xlu0 %3139
        %3141 = vrot.lane.b32.xlu0 %v3101, 24
        %v3142 = vpop.permute.xlu0 %3141
        %3143 = vrot.lane.b32.xlu0 %v3102, 24
        %v3144 = vpop.permute.xlu0 %3143
        %3145 = vrot.lane.b32.xlu0 %v3103, 24
        %v3146 = vpop.permute.xlu0 %3145
        %3147 = vrot.lane.b32.xlu0 %v3104, 24
        %v3148 = vpop.permute.xlu0 %3147
        %3149 = vrot.lane.b32.xlu0 %v3105, 24
        %v3150 = vpop.permute.xlu0 %3149
        %3151 = vrot.lane.b32.xlu0 %v3106, 24
        %v3152 = vpop.permute.xlu0 %3151
        %3153 = vrot.lane.b32.xlu0 %v3107, 24
        %v3154 = vpop.permute.xlu0 %3153
        %3155 = vrot.lane.b32.xlu0 %v3108, 24
        %v3156 = vpop.permute.xlu0 %3155
        %vm3173 = vcmask 257216
        %3174 = vst.msk [vmem:[#allocation2] sm:$0xf] %vm3173, %v3126
        %3175 = vst.msk [vmem:[#allocation2 + $0x4] sm:$0xf] %vm3173, %v3128
        %3176 = vst.msk [vmem:[#allocation2 + $0x8] sm:$0xf] %vm3173, %v3130
        %3177 = vst.msk [vmem:[#allocation2 + $0xc] sm:$0xf] %vm3173, %v3132
        %3178 = vst.msk [vmem:[#allocation2 + $0x10] sm:$0xf] %vm3173, %v3134
        %3179 = vst.msk [vmem:[#allocation2 + $0x14] sm:$0xf] %vm3173, %v3136
        %3180 = vst.msk [vmem:[#allocation2 + $0x18] sm:$0xf] %vm3173, %v3138
        %3181 = vst.msk [vmem:[#allocation2 + $0x1c] sm:$0xf] %vm3173, %v3140
        %3182 = vst.msk [vmem:[#allocation2 + $0x20] sm:$0xf] %vm3173, %v3142
        %3183 = vst.msk [vmem:[#allocation2 + $0x24] sm:$0xf] %vm3173, %v3144
        %3184 = vst.msk [vmem:[#allocation2 + $0x28] sm:$0xf] %vm3173, %v3146
        %3185 = vst.msk [vmem:[#allocation2 + $0x2c] sm:$0xf] %vm3173, %v3148
        %3186 = vst.msk [vmem:[#allocation2 + $0x30] sm:$0xf] %vm3173, %v3150
        %3187 = vst.msk [vmem:[#allocation2 + $0x34] sm:$0xf] %vm3173, %v3152
        %3188 = vst.msk [vmem:[#allocation2 + $0x38] sm:$0xf] %vm3173, %v3154
        %3189 = vst.msk [vmem:[#allocation2 + $0x3c] sm:$0xf] %vm3173, %v3156
        %v3190 = vld [vmem:[#allocation2] sm:$0xf]
        %v3191 = vld [vmem:[#allocation2 + $0x4] sm:$0xf]
        %v3192 = vld [vmem:[#allocation2 + $0x8] sm:$0xf]
        %v3193 = vld [vmem:[#allocation2 + $0xc] sm:$0xf]
        %v3194 = vld [vmem:[#allocation2 + $0x10] sm:$0xf]
        %v3195 = vld [vmem:[#allocation2 + $0x14] sm:$0xf]
        %v3196 = vld [vmem:[#allocation2 + $0x18] sm:$0xf]
        %v3197 = vld [vmem:[#allocation2 + $0x1c] sm:$0xf]
        %v3198 = vld [vmem:[#allocation2 + $0x20] sm:$0xf]
        %v3199 = vld [vmem:[#allocation2 + $0x24] sm:$0xf]
        %v3200 = vld [vmem:[#allocation2 + $0x28] sm:$0xf]
        %v3201 = vld [vmem:[#allocation2 + $0x2c] sm:$0xf]
        %v3202 = vld [vmem:[#allocation2 + $0x30] sm:$0xf]
        %v3203 = vld [vmem:[#allocation2 + $0x34] sm:$0xf]
        %v3204 = vld [vmem:[#allocation2 + $0x38] sm:$0xf]
        %v3205 = vld [vmem:[#allocation2 + $0x3c] sm:$0xf]
        %v3206 = vld [vmem:[%s5] sm:$0xf]
        %v3207 = vld [vmem:[%s5 + $0x4] sm:$0xf]
        %v3208 = vld [vmem:[%s5 + $0x8] sm:$0xf]
        %v3209 = vld [vmem:[%s5 + $0xc] sm:$0xf]
        %v3210 = vld [vmem:[%s6] sm:$0x1]
        %v3212 = vperm.slane %v3210, 0
        %v3230 = vunpack.c.l.b16 %v3190
        %v3231 = vunpack.c.l.b16 %v3191
        %v3232 = vunpack.c.l.b16 %v3192
        %v3233 = vunpack.c.l.b16 %v3193
        %v3234 = vunpack.c.l.b16 %v3194
        %v3235 = vunpack.c.l.b16 %v3195
        %v3236 = vunpack.c.l.b16 %v3196
        %v3237 = vunpack.c.l.b16 %v3197
        %v3238 = vunpack.c.l.b16 %v3198
        %v3239 = vunpack.c.l.b16 %v3199
        %v3240 = vunpack.c.l.b16 %v3200
        %v3241 = vunpack.c.l.b16 %v3201
        %v3242 = vunpack.c.l.b16 %v3202
        %v3243 = vunpack.c.l.b16 %v3203
        %v3244 = vunpack.c.l.b16 %v3204
        %v3245 = vunpack.c.l.b16 %v3205
        %v3246 = vpack.c.b16 %v3231, %v3230
        %v3247 = vpack.c.b16 %v3233, %v3232
        %v3248 = vpack.c.b16 %v3235, %v3234
        %v3249 = vpack.c.b16 %v3237, %v3236
        %v3250 = vpack.c.b16 %v3239, %v3238
        %v3251 = vpack.c.b16 %v3241, %v3240
        %v3252 = vpack.c.b16 %v3243, %v3242
        %v3253 = vpack.c.b16 %v3245, %v3244
        %v3258 = vunpack.c.l.b16 %v3206
        %v3259 = vunpack.c.l.b16 %v3207
        %v3260 = vunpack.c.l.b16 %v3208
        %v3261 = vunpack.c.l.b16 %v3209
        %v3262 = vpack.c.b16 %v3259, %v3258
        %v3263 = vpack.c.b16 %v3261, %v3260
        %v3267 = vsel %vm419, %v3246, 0
        %v3270 = vsel %vm419, %v3247, 0
        %v3273 = vsel %vm419, %v3248, 0
        %v3276 = vsel %vm419, %v3249, 0
        %v3279 = vsel %vm419, %v3250, 0
        %v3282 = vsel %vm419, %v3251, 0
        %v3285 = vsel %vm419, %v3252, 0
        %v3288 = vsel %vm419, %v3253, 0
        %3290 = vmatpush.bf16.msra.mxu0 0
        %3291 = vmatpush.bf16.msra.mxu0 0
        %3292 = vmatpush.bf16.msra.mxu0 0
        %3293 = vmatpush.bf16.msra.mxu0 0
        %3294 = vmatpush.bf16.msra.mxu0 0
        %3295 = vmatpush.bf16.msra.mxu0 0
        %3296 = vmatpush.bf16.msra.mxu0 %v3263
        %3297 = vmatpush.bf16.msra.mxu0 %v3262
        %3298 = vmatmul.bf16.gmra.mxu0 %v3267
        %v3299 = vpop.f32.mrf.mxu0
        %v3300 = vadd.f32 %v3212, %v3299
        %v3301 = vpop.f32.mrf.mxu0
        %v3302 = vadd.f32 %v3212, %v3301
        %3303 = vmatmul.bf16.gmra.mxu0 %v3270
        %v3304 = vpop.f32.mrf.mxu0
        %v3305 = vadd.f32 %v3212, %v3304
        %v3306 = vpop.f32.mrf.mxu0
        %v3307 = vadd.f32 %v3212, %v3306
        %3308 = vmatmul.bf16.gmra.mxu0 %v3273
        %v3309 = vpop.f32.mrf.mxu0
        %v3310 = vadd.f32 %v3212, %v3309
        %v3311 = vpop.f32.mrf.mxu0
        %v3312 = vadd.f32 %v3212, %v3311
        %3313 = vmatmul.bf16.gmra.mxu0 %v3276
        %v3314 = vpop.f32.mrf.mxu0
        %v3315 = vadd.f32 %v3212, %v3314
        %v3316 = vpop.f32.mrf.mxu0
        %v3317 = vadd.f32 %v3212, %v3316
        %3318 = vmatmul.bf16.gmra.mxu0 %v3279
        %v3319 = vpop.f32.mrf.mxu0
        %v3320 = vadd.f32 %v3212, %v3319
        %v3321 = vpop.f32.mrf.mxu0
        %v3322 = vadd.f32 %v3212, %v3321
        %3323 = vmatmul.bf16.gmra.mxu0 %v3282
        %v3324 = vpop.f32.mrf.mxu0
        %v3325 = vadd.f32 %v3212, %v3324
        %v3326 = vpop.f32.mrf.mxu0
        %v3327 = vadd.f32 %v3212, %v3326
        %3328 = vmatmul.bf16.gmra.mxu0 %v3285
        %v3329 = vpop.f32.mrf.mxu0
        %v3330 = vadd.f32 %v3212, %v3329
        %v3331 = vpop.f32.mrf.mxu0
        %v3332 = vadd.f32 %v3212, %v3331
        %3333 = vmatmul.bf16.gmra.mxu0 %v3288
        %v3334 = vpop.f32.mrf.mxu0
        %v3335 = vadd.f32 %v3212, %v3334
        %v3336 = vpop.f32.mrf.mxu0
        %v3337 = vadd.f32 %v3212, %v3336
        %3338 = vdwg.mxu0
        %v3339 = vld [vmem:[%s372] sm:$0xff]
        %v3340 = vld [vmem:[%s372 + $0x8] sm:$0xff]
        %v3341 = vld [vmem:[%s372 + $0x10] sm:$0xff]
        %v3342 = vld [vmem:[%s372 + $0x18] sm:$0xff]
        %v3343 = vld [vmem:[%s372 + $0x20] sm:$0xff]
        %v3344 = vld [vmem:[%s372 + $0x28] sm:$0xff]
        %v3345 = vld [vmem:[%s372 + $0x30] sm:$0xff]
        %v3346 = vld [vmem:[%s372 + $0x38] sm:$0xff]
        %v3347 = vld [vmem:[%s372 + $0x40] sm:$0xff]
        %v3348 = vld [vmem:[%s372 + $0x48] sm:$0xff]
        %v3349 = vld [vmem:[%s372 + $0x50] sm:$0xff]
        %v3350 = vld [vmem:[%s372 + $0x58] sm:$0xff]
        %v3351 = vld [vmem:[%s372 + $0x60] sm:$0xff]
        %v3352 = vld [vmem:[%s372 + $0x68] sm:$0xff]
        %v3353 = vld [vmem:[%s372 + $0x70] sm:$0xff]
        %v3354 = vld [vmem:[%s372 + $0x78] sm:$0xff]
        %v3355 = vadd.f32 %v3339, %v3300
        %v3356 = vadd.f32 %v3340, %v3302
        %v3357 = vadd.f32 %v3341, %v3305
        %v3358 = vadd.f32 %v3342, %v3307
        %v3359 = vadd.f32 %v3343, %v3310
        %v3360 = vadd.f32 %v3344, %v3312
        %v3361 = vadd.f32 %v3345, %v3315
        %v3362 = vadd.f32 %v3346, %v3317
        %v3363 = vadd.f32 %v3347, %v3320
        %v3364 = vadd.f32 %v3348, %v3322
        %v3365 = vadd.f32 %v3349, %v3325
        %v3366 = vadd.f32 %v3350, %v3327
        %v3367 = vadd.f32 %v3351, %v3330
        %v3368 = vadd.f32 %v3352, %v3332
        %v3369 = vadd.f32 %v3353, %v3335
        %v3370 = vadd.f32 %v3354, %v3337
        %3371 = vst.msk [vmem:[%s399] sm:$0xff] %vm419, %v3355
        %3372 = vst.msk [vmem:[%s399 + $0x8] sm:$0xff] %vm419, %v3356
        %3373 = vst.msk [vmem:[%s399 + $0x10] sm:$0xff] %vm419, %v3357
        %3374 = vst.msk [vmem:[%s399 + $0x18] sm:$0xff] %vm419, %v3358
        %3375 = vst.msk [vmem:[%s399 + $0x20] sm:$0xff] %vm419, %v3359
        %3376 = vst.msk [vmem:[%s399 + $0x28] sm:$0xff] %vm419, %v3360
        %3377 = vst.msk [vmem:[%s399 + $0x30] sm:$0xff] %vm419, %v3361
        %3378 = vst.msk [vmem:[%s399 + $0x38] sm:$0xff] %vm419, %v3362
        %3379 = vst.msk [vmem:[%s399 + $0x40] sm:$0xff] %vm419, %v3363
        %3380 = vst.msk [vmem:[%s399 + $0x48] sm:$0xff] %vm419, %v3364
        %3381 = vst.msk [vmem:[%s399 + $0x50] sm:$0xff] %vm419, %v3365
        %3382 = vst.msk [vmem:[%s399 + $0x58] sm:$0xff] %vm419, %v3366
        %3383 = vst.msk [vmem:[%s399 + $0x60] sm:$0xff] %vm419, %v3367
        %3384 = vst.msk [vmem:[%s399 + $0x68] sm:$0xff] %vm419, %v3368
        %3385 = vst.msk [vmem:[%s399 + $0x70] sm:$0xff] %vm419, %v3369
        %3386 = vst.msk [vmem:[%s399 + $0x78] sm:$0xff] %vm419, %v3370
        %s3387 = sand.u32 %s205, 1
        %s3388 = sand.u32 %s205, 1
        %s3389 = smul.addr %s3388, 128
        %s3390 = scalar_lea.vmem [#allocation4], %s3389
        // Predicated region
        $region87: #{_lambda_.1} parent=81 // pred_check
          %p3391 = pneg %p215
        $region88: #{_lambda_.1} parent=81 // pred_check_branch
          %3393 = sbr.rel (%p3391) target = $region90
        $region89: #{_lambda_.1} parent=81 // pred_region
          %s3394 = smul.u32 16, %s24
          %s3395 = smul.addr %s3394, 2
          %s3396 = sadd.s32 %s25, %s3395
          %s3397 = smul.addr %s23, 32
          %s3398 = sadd.s32 %s3396, %s3397
          %s3399 = smul.addr %s3398, 8
          %s3400 = scalar_lea.vmem %s7, %s3399
          // Predicated region
          $region91: #{_lambda_.1} parent=89 // pred_check
            _
          $region92: #{_lambda_.1} parent=89 // pred_check_branch
            %3402 = sbr.rel (0) target = $region94
          $region93: #{_lambda_.1} parent=89 // pred_region
            // Predicated region
            $region95: #{_lambda_.1} parent=93 // pred_check
              _
            $region96: #{_lambda_.1} parent=93 // pred_check_branch
              %3404 = sbr.rel (0) target = $region98
            $region97: #{_lambda_.1} parent=93 // pred_region
              // Predicated region
              $region110: #{_lambda_.1} parent=97 // pred_check
                _
              $region111: #{_lambda_.1} parent=97 // pred_check_branch
                %3450 = sbr.rel (0) target = $region113
              $region112: #{_lambda_.1} parent=97 // pred_region
                loop: start=0, step=1, limit=1
                $region114: #{_lambda_.1} parent=112 // loop_pre_header
                  _
                $region115: #{_lambda_.1} parent=112 // loop_header
                  %s3452 = sphi 0, %s3456
                  %p3453 = scmp.ge.s32.totalorder %s3452, 1
                  %s3457 = sphi %s3390, %s3390
                  %s3458 = sphi %s3400, %s3400
                $region116: #{_lambda_.1} parent=112 // loop_header_branch
                  %3455 = sbr.rel (%p3453) target = $region120
                $region117: #{_lambda_.1} parent=112 // loop_body
                  %v3459 = vld [vmem:[%s3457] sm:$0xff]
                  %3460 = vst [vmem:[%s3458] sm:$0xff] %v3459
                  %v3461 = vld [vmem:[%s3457 + $0x8] sm:$0xff]
                  %3462 = vst [vmem:[%s3458 + $0x10] sm:$0xff] %v3461
                  %v3463 = vld [vmem:[%s3457 + $0x10] sm:$0xff]
                  %3464 = vst [vmem:[%s3458 + $0x20] sm:$0xff] %v3463
                  %v3465 = vld [vmem:[%s3457 + $0x18] sm:$0xff]
                  %3466 = vst [vmem:[%s3458 + $0x30] sm:$0xff] %v3465
                  %v3467 = vld [vmem:[%s3457 + $0x20] sm:$0xff]
                  %3468 = vst [vmem:[%s3458 + $0x40] sm:$0xff] %v3467
                  %v3469 = vld [vmem:[%s3457 + $0x28] sm:$0xff]
                  %3470 = vst [vmem:[%s3458 + $0x50] sm:$0xff] %v3469
                  %v3471 = vld [vmem:[%s3457 + $0x30] sm:$0xff]
                  %3472 = vst [vmem:[%s3458 + $0x60] sm:$0xff] %v3471
                  %v3473 = vld [vmem:[%s3457 + $0x38] sm:$0xff]
                  %3474 = vst [vmem:[%s3458 + $0x70] sm:$0xff] %v3473
                  %v3475 = vld [vmem:[%s3457 + $0x40] sm:$0xff]
                  %3476 = vst [vmem:[%s3458 + $0x80] sm:$0xff] %v3475
                  %v3477 = vld [vmem:[%s3457 + $0x48] sm:$0xff]
                  %3478 = vst [vmem:[%s3458 + $0x90] sm:$0xff] %v3477
                  %v3479 = vld [vmem:[%s3457 + $0x50] sm:$0xff]
                  %3480 = vst [vmem:[%s3458 + $0xa0] sm:$0xff] %v3479
                  %v3481 = vld [vmem:[%s3457 + $0x58] sm:$0xff]
                  %3482 = vst [vmem:[%s3458 + $0xb0] sm:$0xff] %v3481
                  %v3483 = vld [vmem:[%s3457 + $0x60] sm:$0xff]
                  %3484 = vst [vmem:[%s3458 + $0xc0] sm:$0xff] %v3483
                  %v3485 = vld [vmem:[%s3457 + $0x68] sm:$0xff]
                  %3486 = vst [vmem:[%s3458 + $0xd0] sm:$0xff] %v3485
                  %v3487 = vld [vmem:[%s3457 + $0x70] sm:$0xff]
                  %3488 = vst [vmem:[%s3458 + $0xe0] sm:$0xff] %v3487
                  %v3489 = vld [vmem:[%s3457 + $0x78] sm:$0xff]
                  %3490 = vst [vmem:[%s3458 + $0xf0] sm:$0xff] %v3489
                $region118: #{_lambda_.1} parent=112 // loop_footer
                  %s3456 = sadd.s32 1, %s3452
                $region119: #{_lambda_.1} parent=112 // loop_footer_branch
                  %3451 = sbr.rel target = $region115
                $region120: #{_lambda_.1} parent=112 // loop_exit
                  _
              $region113: #{_lambda_.1} parent=97 // pred_fallthru
                _
              // Predicated region
              $region121: #{_lambda_.1} parent=97 // pred_check
                _
              $region122: #{_lambda_.1} parent=97 // pred_check_branch
                %3492 = sbr.rel target = $region124
              $region123: #{_lambda_.1} parent=97 // pred_region
                _
              $region124: #{_lambda_.1} parent=97 // pred_fallthru
                _
            $region98: #{_lambda_.1} parent=93 // pred_fallthru
              _
            // Predicated region
            $region99: #{_lambda_.1} parent=93 // pred_check
              _
            $region100: #{_lambda_.1} parent=93 // pred_check_branch
              %3406 = sbr.rel target = $region102
            $region101: #{_lambda_.1} parent=93 // pred_region
              %s3408 = ssub.s32 256, 1
              loop: start=0, step=1, limit=1
              $region103: #{_lambda_.1} parent=101 // loop_pre_header
                _
              $region104: #{_lambda_.1} parent=101 // loop_header
                %s3410 = sphi 0, %s3414
                %p3411 = scmp.ge.s32.totalorder %s3410, 1
                %s3415 = sphi %s3390, %s3390
                %s3416 = sphi %s3400, %s3400
              $region105: #{_lambda_.1} parent=101 // loop_header_branch
                %3413 = sbr.rel (%p3411) target = $region109
              $region106: #{_lambda_.1} parent=101 // loop_body
                %v3417 = vld [vmem:[%s3415] sm:%s3408]
                %3418 = vst [vmem:[%s3416] sm:%s3408] %v3417
                %v3419 = vld [vmem:[%s3415 + $0x8] sm:%s3408]
                %3420 = vst [vmem:[%s3416 + $0x10] sm:%s3408] %v3419
                %v3421 = vld [vmem:[%s3415 + $0x10] sm:%s3408]
                %3422 = vst [vmem:[%s3416 + $0x20] sm:%s3408] %v3421
                %v3423 = vld [vmem:[%s3415 + $0x18] sm:%s3408]
                %3424 = vst [vmem:[%s3416 + $0x30] sm:%s3408] %v3423
                %v3425 = vld [vmem:[%s3415 + $0x20] sm:%s3408]
                %3426 = vst [vmem:[%s3416 + $0x40] sm:%s3408] %v3425
                %v3427 = vld [vmem:[%s3415 + $0x28] sm:%s3408]
                %3428 = vst [vmem:[%s3416 + $0x50] sm:%s3408] %v3427
                %v3429 = vld [vmem:[%s3415 + $0x30] sm:%s3408]
                %3430 = vst [vmem:[%s3416 + $0x60] sm:%s3408] %v3429
                %v3431 = vld [vmem:[%s3415 + $0x38] sm:%s3408]
                %3432 = vst [vmem:[%s3416 + $0x70] sm:%s3408] %v3431
                %v3433 = vld [vmem:[%s3415 + $0x40] sm:%s3408]
                %3434 = vst [vmem:[%s3416 + $0x80] sm:%s3408] %v3433
                %v3435 = vld [vmem:[%s3415 + $0x48] sm:%s3408]
                %3436 = vst [vmem:[%s3416 + $0x90] sm:%s3408] %v3435
                %v3437 = vld [vmem:[%s3415 + $0x50] sm:%s3408]
                %3438 = vst [vmem:[%s3416 + $0xa0] sm:%s3408] %v3437
                %v3439 = vld [vmem:[%s3415 + $0x58] sm:%s3408]
                %3440 = vst [vmem:[%s3416 + $0xb0] sm:%s3408] %v3439
                %v3441 = vld [vmem:[%s3415 + $0x60] sm:%s3408]
                %3442 = vst [vmem:[%s3416 + $0xc0] sm:%s3408] %v3441
                %v3443 = vld [vmem:[%s3415 + $0x68] sm:%s3408]
                %3444 = vst [vmem:[%s3416 + $0xd0] sm:%s3408] %v3443
                %v3445 = vld [vmem:[%s3415 + $0x70] sm:%s3408]
                %3446 = vst [vmem:[%s3416 + $0xe0] sm:%s3408] %v3445
                %v3447 = vld [vmem:[%s3415 + $0x78] sm:%s3408]
                %3448 = vst [vmem:[%s3416 + $0xf0] sm:%s3408] %v3447
              $region107: #{_lambda_.1} parent=101 // loop_footer
                %s3414 = sadd.s32 1, %s3410
              $region108: #{_lambda_.1} parent=101 // loop_footer_branch
                %3409 = sbr.rel target = $region104
              $region109: #{_lambda_.1} parent=101 // loop_exit
                _
            $region102: #{_lambda_.1} parent=93 // pred_fallthru
              _
          $region94: #{_lambda_.1} parent=89 // pred_fallthru
            _
          %3493 = vnop
        $region90: #{_lambda_.1} parent=81 // pred_fallthru
          _
      $region82: #{_lambda_.1} parent=5 // pred_fallthru
        _
      %p3494 = scmp.le.s32.totalorder 2, %s13
      // Predicated region
      $region125: #{_lambda_.1} parent=5 // pred_check
        %p3495 = pneg %p3494
      $region126: #{_lambda_.1} parent=5 // pred_check_branch
        %3497 = sbr.rel (%p3495) target = $region128
      $region127: #{_lambda_.1} parent=5 // pred_region
        %s3498 = ssub.s32 %s13, 2
        // Predicated region
        $region129: #{_lambda_.1} parent=127 // pred_check
          %p3499 = pneg %p221
        $region130: #{_lambda_.1} parent=127 // pred_check_branch
          %3501 = sbr.rel (%p3499) target = $region132
        $region131: #{_lambda_.1} parent=127 // pred_region
          %s3502 = sand.u32 %s206, 1
          %s3503 = sand.u32 %s206, 1
          %s3504 = smul.addr %s3503, 128
          %s3505 = scalar_lea.vmem [#allocation4], %s3504
        $region132: #{_lambda_.1} parent=127 // pred_fallthru
          _
      $region128: #{_lambda_.1} parent=5 // pred_fallthru
        _
    $region6: #{_lambda_.1} parent=1 // loop_footer
      %s17 = sadd.s32 1, %s13
    $region7: #{_lambda_.1} parent=1 // loop_footer_branch
      %12 = sbr.rel target = $region3
    $region8: #{_lambda_.1} parent=1 // loop_exit
      _

</llo_original>
